<compile_context>
chip_gen: v7x
topology: tpu7x:2x2x1
jax: 0.10.0
libtpu: 0.0.40
codegen_flags: <defaults>
</compile_context>

<pallas_src>
import functools

import jax
import jax.numpy as jnp
import numpy as np
from jax.experimental import pallas as pl
from jax.experimental.pallas import tpu as pltpu

K = 5                       # conv kernel size (both conv layers)
_MM_DTYPE = jnp.bfloat16    # MXU-native matmul input dtype (f32 accumulation)
_PAD = 128                  # lane-tile padding of each width-pool-phase block

# LeNet geometry (input 1x32x32)
_H1, _W1 = 32, 32           # conv1 input
_HC1 = _H1 - K + 1          # 28  conv1 output rows
_WP1 = (_W1 - K + 1) // 2   # 14  conv1 pooled cols
_C1 = 6
_HALF1 = _C1 * _WP1         # 84  = channels * pooled width (lane block, layer 1)
_HP1 = _HC1 // 2            # 14  conv1 pooled rows
_HC2 = _HP1 - K + 1         # 10  conv2 output rows
_WP2 = (_WP1 - K + 1) // 2  # 5   conv2 pooled cols
_C2 = 16
_HALF2 = _C2 * _WP2         # 80  (lane block, layer 2)
_HP2 = _HC2 // 2            # 5   conv2 pooled rows


# ----------------------------------------------------------------------------
# The single fused Pallas kernel (TB batch elements per grid step)
# ----------------------------------------------------------------------------
def _fused_lenet_kernel(has_pre, tb, x_ref, g1_ref, b1_ref, s1_ref, g2_ref,
                        b2_ref, fw1_ref, fb1_ref, fw2_ref, fb2_ref, fw3_ref,
                        fb3_ref, *rest):
    """SimpleConv forward for a TB-example batch tile (grid axis 0 = batch/TB).

    Each conv layer is ONE matmul per example:  LHS stacks the K=5 shifted row
    windows along the contraction dim; the RHS is a banded (width-Toeplitz)
    weight matrix whose output columns are width-pool-phase separated into two
    128-lane blocks, so the 2x2 maxpool becomes contiguous-slice maxima in
    VMEM (width pool = max of the two column halves, height pool = max of
    adjacent rows + even-row selection).  Bias+ReLU after the max is exact
    because the bias is constant per channel over the window and ReLU is
    monotone.  All fc layers run once per tile on (TB, .) matrices.
    """
    if has_pre:
        pre_ref, o_ref = rest
    else:
        (o_ref,) = rest
    f32 = jnp.float32

    g1 = g1_ref[...]     # (160, 256) bf16   conv1, taps stacked along rows
    g2 = g2_ref[...]     # (420, 256) bf16   conv2, taps stacked along rows
    s1 = s1_ref[...]     # (14, 27)   bf16   even-row (height-pool) selector
    b1 = b1_ref[...]     # (1, 84)    f32
    b2 = b2_ref[...]     # (1, 80)    f32

    feat_rows = []
    for b in range(tb):
        # x arrives bf16 (halved DMA); widen once for the window-stacking
        # shuffles, then cast the stacked LHS once for the MXU.
        xb = x_ref[b].astype(f32)                                      # (32, 32)

        # ---- conv1 (+relu) + 2x2 maxpool --------------------------------
        lhs1 = jnp.concatenate([xb[kh:kh + _HC1, :] for kh in range(K)],
                               axis=1).astype(_MM_DTYPE)               # (28, 160)
        acc1 = jnp.dot(lhs1, g1, preferred_element_type=f32)           # (28, 256)
        wp1 = jnp.maximum(acc1[:, 0:_HALF1],
                          acc1[:, _PAD:_PAD + _HALF1])                 # (28, 84)
        adj1 = jnp.maximum(wp1[0:_HC1 - 1, :], wp1[1:_HC1, :])         # (27, 84)
        q1 = jnp.maximum(adj1 + b1, 0.0).astype(_MM_DTYPE)             # (27, 84)
        # Even-row selection on the already-bf16 relu'd values -> exact pick.
        p1 = jnp.dot(s1, q1, preferred_element_type=f32)               # (14, 84)

        # ---- conv2 (+relu) + 2x2 maxpool --------------------------------
        lhs2 = jnp.concatenate([p1[kh:kh + _HC2, :] for kh in range(K)],
                               axis=1).astype(_MM_DTYPE)               # (10, 420)
        acc2 = jnp.dot(lhs2, g2, preferred_element_type=f32)           # (10, 256)
        wp2 = jnp.maximum(acc2[:, 0:_HALF2],
                          acc2[:, _PAD:_PAD + _HALF2])                 # (10, 80)
        adj2 = jnp.maximum(wp2[0:_HC2 - 1, :], wp2[1:_HC2, :])         # (9, 80)
        # Pooled rows are the even rows of adj2; flatten to the fc1 (t, c, w)
        # column order by lane-concatenating the 5 pooled rows.
        p2_rows = [jnp.maximum(adj2[2 * t:2 * t + 1, :] + b2, 0.0)
                   for t in range(_HP2)]                               # 5 x (1,80)
        feat_rows.append(jnp.concatenate(p2_rows, axis=1))             # (1, 400)

    feats = jnp.concatenate(feat_rows, axis=0).astype(_MM_DTYPE)       # (TB, 400)

    # ---- fc1/fc2/fc3 (+ optional pre_softmax), once per batch tile ------
    h = jnp.dot(feats, fw1_ref[...], preferred_element_type=f32)
    h = jnp.maximum(h + fb1_ref[...], 0.0)                             # (TB, 120)
    h = jnp.dot(h.astype(_MM_DTYPE), fw2_ref[...], preferred_element_type=f32)
    h = jnp.maximum(h + fb2_ref[...], 0.0)                             # (TB, 84)
    out = jnp.dot(h.astype(_MM_DTYPE), fw3_ref[...], preferred_element_type=f32)
    out = out + fb3_ref[...]                                           # (TB, 128)
    if has_pre:
        out = jnp.dot(out.astype(_MM_DTYPE), pre_ref[...],
                      preferred_element_type=f32)                      # (TB, 128)
    o_ref[...] = out.astype(o_ref.dtype)                               # dense store


# ----------------------------------------------------------------------------
# One-time host-side parameter re-layout (outside the hot path)
# ----------------------------------------------------------------------------
def _width_toeplitz(w, win):
    """Banded per-tap-row weight matrices for a 'valid' conv along the width.

    w: (Cout, Cin, K, K).  Returns G of shape (K, Cin*win, 2*pad) with
      G[kh, c*win + p, dj*pad + o*wp + jp] = w[o, c, kh, p - (2*jp + dj)]
    for 0 <= p - (2*jp + dj) < K, zeros elsewhere.  wp = (win-K+1)//2 and
    pad = 128-aligned size of Cout*wp, so the two width-pool phases land in
    separate, lane-tile-aligned column blocks.
    """
    cout, cin, k, _ = w.shape
    wp = (win - k + 1) // 2
    half = cout * wp
    pad = -(-half // 128) * 128

    o = np.arange(cout).reshape(cout, 1, 1, 1, 1)
    c = np.arange(cin).reshape(1, cin, 1, 1, 1)
    dj = np.arange(2).reshape(1, 1, 2, 1, 1)
    jp = np.arange(wp).reshape(1, 1, 1, wp, 1)
    kw = np.arange(k).reshape(1, 1, 1, 1, k)
    shape5 = (cout, cin, 2, wp, k)
    rows = np.broadcast_to(c * win + 2 * jp + dj + kw, shape5)
    cols = np.broadcast_to(dj * pad + o * wp + jp, shape5)
    khs = np.broadcast_to(np.arange(k).reshape(k, 1, 1, 1, 1, 1), (k,) + shape5)
    rows = np.broadcast_to(rows[None], (k,) + shape5)
    cols = np.broadcast_to(cols[None], (k,) + shape5)

    vals = jnp.transpose(w, (2, 0, 1, 3))                    # (k, cout, cin, k)
    vals = jnp.broadcast_to(vals[:, :, :, None, None, :], (k,) + shape5)

    g = jnp.zeros((k, cin * win, 2 * pad), jnp.float32)
    g = g.at[khs, rows, cols].set(vals)
    return g, wp, half, pad


def _lane_pad(n):
    return -(-n // _PAD) * _PAD


def prepare_params(params, has_pre_softmax_ly=False):
    """Rearranges PyTorch-layout parameters into kernel-ready operands (once)."""
    g1, wp1, half1, pad1 = _width_toeplitz(params["conv1_w"], _W1)  # (5, 32, 256)
    g2, wp2, half2, pad2 = _width_toeplitz(params["conv2_w"], wp1)  # (5, 84, 256)
    assert pad1 == _PAD and pad2 == _PAD and half1 == _HALF1 and half2 == _HALF2

    # even-row selection matrix for layer-1 height pooling: (14, 27)
    s1 = np.zeros((_HP1, _HC1 - 1), np.float32)
    s1[np.arange(_HP1), 2 * np.arange(_HP1)] = 1.0

    # fc1 columns permuted from torch (c, h, w) order to kernel (h, c, w) order
    fw1 = params["fc1_w"].reshape(120, _C2, _HP2, _WP2)
    fw1 = fw1.transpose(2, 1, 3, 0).reshape(_C2 * _HP2 * _WP2, 120)  # (400, 120)

    # fc3 (and pre_softmax) padded to a 128-lane dense output slab.
    n_classes = params["fc3_w"].shape[0]
    npad = _lane_pad(n_classes)
    fw3 = jnp.zeros((84, npad), jnp.float32).at[:, :n_classes].set(
        params["fc3_w"].T)
    fb3 = jnp.zeros((1, npad), jnp.float32).at[0, :n_classes].set(
        params["fc3_b"])

    prep = {
        # conv taps stacked along the contraction dim -> one matmul per layer.
        "g1": g1.reshape(K * 1 * _W1, 2 * _PAD).astype(_MM_DTYPE),     # (160, 256)
        "b1": jnp.repeat(params["conv1_b"], wp1).reshape(1, half1).astype(jnp.float32),
        "s1": jnp.asarray(s1, _MM_DTYPE),
        "g2": g2.reshape(K * _C1 * wp1, 2 * _PAD).astype(_MM_DTYPE),   # (420, 256)
        "b2": jnp.repeat(params["conv2_b"], wp2).reshape(1, half2).astype(jnp.float32),
        "fw1": fw1.astype(_MM_DTYPE),
        "fb1": params["fc1_b"].reshape(1, -1).astype(jnp.float32),
        "fw2": params["fc2_w"].T.astype(_MM_DTYPE),
        "fb2": params["fc2_b"].reshape(1, -1).astype(jnp.float32),
        "fw3": fw3.astype(_MM_DTYPE),
        "fb3": fb3,
    }
    if has_pre_softmax_ly:
        pre = jnp.zeros((npad, npad), jnp.float32).at[
            :n_classes, :n_classes].set(params["pre_softmax_w"].T)
        prep["pre"] = pre.astype(_MM_DTYPE)
    return prep


# ----------------------------------------------------------------------------
# pallas_call wrapper (one fused kernel, grid = batch/TB, "parallel")
# ----------------------------------------------------------------------------
def simple_conv_forward(prep, x, *, n_classes, has_pre_softmax_ly=False, tb=8):
    b = x.shape[0]
    assert x.shape[1:] == (1, _H1, _W1), "LeNet geometry needs (B, 1, 32, 32)"
    npad = _lane_pad(n_classes)
    assert prep["fb3"].shape[-1] == npad

    # Halve the per-step input DMA: ship x as bf16 (it is cast to bf16 before
    # every matmul anyway).  Pad the batch to a multiple of the tile size.
    b_pad = -(-b // tb) * tb
    x3 = x.reshape(b, _H1, _W1).astype(jnp.bfloat16)
    if b_pad != b:
        x3 = jnp.pad(x3, ((0, b_pad - b), (0, 0), (0, 0)))

    operands = [x3, prep["g1"], prep["b1"], prep["s1"], prep["g2"], prep["b2"],
                prep["fw1"], prep["fb1"], prep["fw2"], prep["fb2"],
                prep["fw3"], prep["fb3"]]
    if has_pre_softmax_ly:
        operands.append(prep["pre"])

    def _const_spec(arr):
        return pl.BlockSpec(arr.shape, lambda i, _n=arr.ndim: (0,) * _n)

    in_specs = [pl.BlockSpec((tb, _H1, _W1), lambda i: (i, 0, 0))]
    in_specs += [_const_spec(a) for a in operands[1:]]

    # Advisory cost estimate so XLA schedules the custom call sensibly.
    per_ex_flops = 2 * (_HC1 * (K * _W1) * (2 * _PAD)            # conv1
                        + _HP1 * (_HC1 - 1) * _HALF1             # row select
                        + _HC2 * (K * _HALF1) * (2 * _PAD)       # conv2
                        + 400 * 120 + 120 * 84 + 84 * npad       # fc1/2/3
                        + (npad * npad if has_pre_softmax_ly else 0))
    bytes_accessed = int(x3.size) * x3.dtype.itemsize + b_pad * npad * 4
    bytes_accessed += sum(int(np.prod(a.shape)) * a.dtype.itemsize
                          for a in operands[1:])

    out = pl.pallas_call(
        functools.partial(_fused_lenet_kernel, has_pre_softmax_ly, tb),
        out_shape=jax.ShapeDtypeStruct((b_pad, npad), jnp.float32),
        grid=(b_pad // tb,),
        in_specs=in_specs,
        out_specs=pl.BlockSpec((tb, npad), lambda i: (i, 0)),
        compiler_params=pltpu.CompilerParams(
            dimension_semantics=("parallel",)),
        cost_estimate=pl.CostEstimate(flops=int(per_ex_flops * b_pad),
                                      transcendentals=0,
                                      bytes_accessed=int(bytes_accessed)),
    )(*operands)
    return out[:b, :n_classes]


# ----------------------------------------------------------------------------
# Deterministic parameter init (PyTorch default-style uniform bounds)
# ----------------------------------------------------------------------------
def _uniform(key, shape, fan_in):
    bound = 1.0 / float(np.sqrt(fan_in))
    return jax.random.uniform(key, shape, jnp.float32, minval=-bound, maxval=bound)


def init_params(key, n_classes, has_pre_softmax_ly=False):
    ks = jax.random.split(key, 11)
    p = {
        "conv1_w": _uniform(ks[0], (6, 1, K, K), 1 * K * K),
        "conv1_b": _uniform(ks[1], (6,), 1 * K * K),
        "conv2_w": _uniform(ks[2], (16, 6, K, K), 6 * K * K),
        "conv2_b": _uniform(ks[3], (16,), 6 * K * K),
        "fc1_w": _uniform(ks[4], (120, 400), 400),
        "fc1_b": _uniform(ks[5], (120,), 400),
        "fc2_w": _uniform(ks[6], (84, 120), 120),
        "fc2_b": _uniform(ks[7], (84,), 120),
        "fc3_w": _uniform(ks[8], (n_classes, 84), 84),
        "fc3_b": _uniform(ks[9], (n_classes,), 84),
    }
    if has_pre_softmax_ly:
        p["pre_softmax_w"] = _uniform(ks[10], (n_classes, n_classes), n_classes)
    return p


# ----------------------------------------------------------------------------
# Pure-JAX reference (f32, highest precision) for correctness check
# ----------------------------------------------------------------------------
def reference_forward(params, x, has_pre_softmax_ly=False):
    hi = jax.lax.Precision.HIGHEST

    def conv_relu_pool_ref(h, w, b):
        y = jax.lax.conv_general_dilated(
            h, w, window_strides=(1, 1), padding="VALID",
            dimension_numbers=("NCHW", "OIHW", "NCHW"), precision=hi)
        y = jax.nn.relu(y + b.reshape(1, -1, 1, 1))
        return jax.lax.reduce_window(
            y, -jnp.inf, jax.lax.max, (1, 1, 2, 2), (1, 1, 2, 2), "VALID")

    h = conv_relu_pool_ref(x, params["conv1_w"], params["conv1_b"])
    h = conv_relu_pool_ref(h, params["conv2_w"], params["conv2_b"])
    flat = h.reshape(h.shape[0], -1)
    h = jax.nn.relu(jnp.dot(flat, params["fc1_w"].T, precision=hi) + params["fc1_b"])
    h = jax.nn.relu(jnp.dot(h, params["fc2_w"].T, precision=hi) + params["fc2_b"])
    out = jnp.dot(h, params["fc3_w"].T, precision=hi) + params["fc3_b"]
    if has_pre_softmax_ly:
        out = jnp.dot(out, params["pre_softmax_w"].T, precision=hi)
    return out


if __name__ == "__main__":
    key = jax.random.PRNGKey(0)
    pkey, xkey = jax.random.split(key)
    n_classes = 10
    batch = 16          # 2 "parallel" grid steps at TB=8 (keeps both v7x TCs busy)
    tb = 8

    # LeNet geometry requires 32x32 single-channel input (NCHW).
    x = jax.random.normal(xkey, (batch, 1, 32, 32), jnp.float32)
    params = init_params(pkey, n_classes=n_classes, has_pre_softmax_ly=True)

    # One-time parameter re-layout (outside the per-step hot path).
    prep = prepare_params(params, has_pre_softmax_ly=True)

    fwd = jax.jit(functools.partial(simple_conv_forward, n_classes=n_classes,
                                    has_pre_softmax_ly=False, tb=tb))
    out = jax.block_until_ready(fwd(prep, x))
    assert out.shape == (batch, n_classes) and out.dtype == jnp.float32

    fwd_pre = jax.jit(functools.partial(simple_conv_forward, n_classes=n_classes,
                                        has_pre_softmax_ly=True, tb=tb))
    out_pre = jax.block_until_ready(fwd_pre(prep, x))
    assert out_pre.shape == (batch, n_classes)

    # Correctness vs. a pure-JAX f32 reference.  The kernel feeds the MXU with
    # bf16 operands (f32 accumulation), so the tolerance is the usual
    # bf16-matmul 2e-2 rather than 2e-3.
    ref = reference_forward(params, x, has_pre_softmax_ly=False)
    ref_pre = reference_forward(params, x, has_pre_softmax_ly=True)
    np.testing.assert_allclose(np.asarray(out), np.asarray(ref), rtol=2e-2, atol=2e-2)
    np.testing.assert_allclose(np.asarray(out_pre), np.asarray(ref_pre), rtol=2e-2, atol=2e-2)

    print("KERNEL_OK")
</pallas_src>

<mosaic_0001>
module attributes {stable_mosaic.version = 11 : i64} {
  func.func @_fused_lenet_kernel(%arg0: i32, %arg1: memref<8x32x32xbf16, #tpu.memory_space<vmem>>, %arg2: memref<160x256xbf16, #tpu.memory_space<vmem>>, %arg3: memref<1x84xf32, #tpu.memory_space<vmem>>, %arg4: memref<14x27xbf16, #tpu.memory_space<vmem>>, %arg5: memref<420x256xbf16, #tpu.memory_space<vmem>>, %arg6: memref<1x80xf32, #tpu.memory_space<vmem>>, %arg7: memref<400x120xbf16, #tpu.memory_space<vmem>>, %arg8: memref<1x120xf32, #tpu.memory_space<vmem>>, %arg9: memref<120x84xbf16, #tpu.memory_space<vmem>>, %arg10: memref<1x84xf32, #tpu.memory_space<vmem>>, %arg11: memref<84x128xbf16, #tpu.memory_space<vmem>>, %arg12: memref<1x128xf32, #tpu.memory_space<vmem>>, %arg13: memref<8x128xf32, #tpu.memory_space<vmem>>) attributes {dimension_semantics = [#tpu.dimension_semantics<parallel>], iteration_bounds = array<i64: 2>, scalar_prefetch = 0 : i64, scratch_operands = 0 : i64, tpu.core_type = #tpu.core_type<tc>, window_params = [{transform_indices = @transform_0, window_bounds = array<i64: 8, 32, 32>}, {pipeline_mode = #tpu.pipeline_mode<synchronous>, transform_indices = @transform_1, window_bounds = array<i64: 160, 256>}, {pipeline_mode = #tpu.pipeline_mode<synchronous>, transform_indices = @transform_2, window_bounds = array<i64: 1, 84>}, {pipeline_mode = #tpu.pipeline_mode<synchronous>, transform_indices = @transform_3, window_bounds = array<i64: 14, 27>}, {pipeline_mode = #tpu.pipeline_mode<synchronous>, transform_indices = @transform_4, window_bounds = array<i64: 420, 256>}, {pipeline_mode = #tpu.pipeline_mode<synchronous>, transform_indices = @transform_5, window_bounds = array<i64: 1, 80>}, {pipeline_mode = #tpu.pipeline_mode<synchronous>, transform_indices = @transform_6, window_bounds = array<i64: 400, 120>}, {pipeline_mode = #tpu.pipeline_mode<synchronous>, transform_indices = @transform_7, window_bounds = array<i64: 1, 120>}, {pipeline_mode = #tpu.pipeline_mode<synchronous>, transform_indices = @transform_8, window_bounds = array<i64: 120, 84>}, {pipeline_mode = #tpu.pipeline_mode<synchronous>, transform_indices = @transform_9, window_bounds = array<i64: 1, 84>}, {pipeline_mode = #tpu.pipeline_mode<synchronous>, transform_indices = @transform_10, window_bounds = array<i64: 84, 128>}, {pipeline_mode = #tpu.pipeline_mode<synchronous>, transform_indices = @transform_11, window_bounds = array<i64: 1, 128>}, {transform_indices = @transform_12, window_bounds = array<i64: 8, 128>}]} {
    %c0 = arith.constant 0 : index
    %c0_0 = arith.constant 0 : index
    %0 = vector.load %arg2[%c0, %c0_0] : memref<160x256xbf16, #tpu.memory_space<vmem>>, vector<160x256xbf16>
    %c0_1 = arith.constant 0 : index
    %c0_2 = arith.constant 0 : index
    %1 = vector.load %arg5[%c0_1, %c0_2] : memref<420x256xbf16, #tpu.memory_space<vmem>>, vector<420x256xbf16>
    %c0_3 = arith.constant 0 : index
    %c0_4 = arith.constant 0 : index
    %2 = vector.load %arg4[%c0_3, %c0_4] : memref<14x27xbf16, #tpu.memory_space<vmem>>, vector<14x27xbf16>
    %c0_5 = arith.constant 0 : index
    %c0_6 = arith.constant 0 : index
    %3 = vector.load %arg3[%c0_5, %c0_6] : memref<1x84xf32, #tpu.memory_space<vmem>>, vector<1x84xf32>
    %c0_7 = arith.constant 0 : index
    %c0_8 = arith.constant 0 : index
    %4 = vector.load %arg6[%c0_7, %c0_8] : memref<1x80xf32, #tpu.memory_space<vmem>>, vector<1x80xf32>
    %c0_9 = arith.constant 0 : index
    %c0_10 = arith.constant 0 : index
    %c0_11 = arith.constant 0 : index
    %5 = vector.load %arg1[%c0_9, %c0_10, %c0_11] : memref<8x32x32xbf16, #tpu.memory_space<vmem>>, vector<1x32x32xbf16>
    %6 = vector.shape_cast %5 : vector<1x32x32xbf16> to vector<32x32xbf16>
    %7 = arith.extf %6 : vector<32x32xbf16> to vector<32x32xf32>
    %8 = vector.extract_strided_slice %7 {offsets = [0, 0], sizes = [28, 32], strides = [1, 1]} : vector<32x32xf32> to vector<28x32xf32>
    %9 = vector.extract_strided_slice %7 {offsets = [1, 0], sizes = [28, 32], strides = [1, 1]} : vector<32x32xf32> to vector<28x32xf32>
    %10 = vector.extract_strided_slice %7 {offsets = [2, 0], sizes = [28, 32], strides = [1, 1]} : vector<32x32xf32> to vector<28x32xf32>
    %11 = vector.extract_strided_slice %7 {offsets = [3, 0], sizes = [28, 32], strides = [1, 1]} : vector<32x32xf32> to vector<28x32xf32>
    %12 = vector.extract_strided_slice %7 {offsets = [4, 0], sizes = [28, 32], strides = [1, 1]} : vector<32x32xf32> to vector<28x32xf32>
    %13 = tpu.concatenate %8, %9, %10, %11, %12 in 1 : vector<28x32xf32>, vector<28x32xf32>, vector<28x32xf32>, vector<28x32xf32>, vector<28x32xf32> -> vector<28x160xf32>
    %14 = arith.truncf %13 : vector<28x160xf32> to vector<28x160xbf16>
    %cst = arith.constant dense<0.000000e+00> : vector<28x256xf32>
    %15 = tpu.matmul %14, %0, %cst {dimension_numbers = #tpu.dot_dimension_numbers<[1], [0], [0], [1], [0, 0, 1, 1], [], []>} : vector<28x160xbf16>, vector<160x256xbf16>, vector<28x256xf32> -> vector<28x256xf32>
    %16 = vector.extract_strided_slice %15 {offsets = [0, 0], sizes = [28, 84], strides = [1, 1]} : vector<28x256xf32> to vector<28x84xf32>
    %17 = vector.extract_strided_slice %15 {offsets = [0, 128], sizes = [28, 84], strides = [1, 1]} : vector<28x256xf32> to vector<28x84xf32>
    %18 = arith.maximumf %16, %17 : vector<28x84xf32>
    %19 = vector.extract_strided_slice %18 {offsets = [0, 0], sizes = [27, 84], strides = [1, 1]} : vector<28x84xf32> to vector<27x84xf32>
    %20 = vector.extract_strided_slice %18 {offsets = [1, 0], sizes = [27, 84], strides = [1, 1]} : vector<28x84xf32> to vector<27x84xf32>
    %21 = arith.maximumf %19, %20 : vector<27x84xf32>
    %22 = vector.broadcast %3 : vector<1x84xf32> to vector<27x84xf32>
    %23 = arith.addf %21, %22 : vector<27x84xf32>
    %cst_12 = arith.constant 0.000000e+00 : f32
    %24 = vector.broadcast %cst_12 : f32 to vector<27x84xf32>
    %25 = arith.maximumf %23, %24 : vector<27x84xf32>
    %26 = arith.truncf %25 : vector<27x84xf32> to vector<27x84xbf16>
    %cst_13 = arith.constant dense<0.000000e+00> : vector<14x84xf32>
    %27 = tpu.matmul %2, %26, %cst_13 {dimension_numbers = #tpu.dot_dimension_numbers<[1], [0], [0], [1], [0, 0, 1, 1], [], []>} : vector<14x27xbf16>, vector<27x84xbf16>, vector<14x84xf32> -> vector<14x84xf32>
    %28 = vector.extract_strided_slice %27 {offsets = [0, 0], sizes = [10, 84], strides = [1, 1]} : vector<14x84xf32> to vector<10x84xf32>
    %29 = vector.extract_strided_slice %27 {offsets = [1, 0], sizes = [10, 84], strides = [1, 1]} : vector<14x84xf32> to vector<10x84xf32>
    %30 = vector.extract_strided_slice %27 {offsets = [2, 0], sizes = [10, 84], strides = [1, 1]} : vector<14x84xf32> to vector<10x84xf32>
    %31 = vector.extract_strided_slice %27 {offsets = [3, 0], sizes = [10, 84], strides = [1, 1]} : vector<14x84xf32> to vector<10x84xf32>
    %32 = vector.extract_strided_slice %27 {offsets = [4, 0], sizes = [10, 84], strides = [1, 1]} : vector<14x84xf32> to vector<10x84xf32>
    %33 = tpu.concatenate %28, %29, %30, %31, %32 in 1 : vector<10x84xf32>, vector<10x84xf32>, vector<10x84xf32>, vector<10x84xf32>, vector<10x84xf32> -> vector<10x420xf32>
    %34 = arith.truncf %33 : vector<10x420xf32> to vector<10x420xbf16>
    %cst_14 = arith.constant dense<0.000000e+00> : vector<10x256xf32>
    %35 = tpu.matmul %34, %1, %cst_14 {dimension_numbers = #tpu.dot_dimension_numbers<[1], [0], [0], [1], [0, 0, 1, 1], [], []>} : vector<10x420xbf16>, vector<420x256xbf16>, vector<10x256xf32> -> vector<10x256xf32>
    %36 = vector.extract_strided_slice %35 {offsets = [0, 0], sizes = [10, 80], strides = [1, 1]} : vector<10x256xf32> to vector<10x80xf32>
    %37 = vector.extract_strided_slice %35 {offsets = [0, 128], sizes = [10, 80], strides = [1, 1]} : vector<10x256xf32> to vector<10x80xf32>
    %38 = arith.maximumf %36, %37 : vector<10x80xf32>
    %39 = vector.extract_strided_slice %38 {offsets = [0, 0], sizes = [9, 80], strides = [1, 1]} : vector<10x80xf32> to vector<9x80xf32>
    %40 = vector.extract_strided_slice %38 {offsets = [1, 0], sizes = [9, 80], strides = [1, 1]} : vector<10x80xf32> to vector<9x80xf32>
    %41 = arith.maximumf %39, %40 : vector<9x80xf32>
    %42 = vector.extract_strided_slice %41 {offsets = [0, 0], sizes = [1, 80], strides = [1, 1]} : vector<9x80xf32> to vector<1x80xf32>
    %43 = arith.addf %42, %4 : vector<1x80xf32>
    %cst_15 = arith.constant 0.000000e+00 : f32
    %44 = vector.broadcast %cst_15 : f32 to vector<1x80xf32>
    %45 = arith.maximumf %43, %44 : vector<1x80xf32>
    %46 = vector.extract_strided_slice %41 {offsets = [2, 0], sizes = [1, 80], strides = [1, 1]} : vector<9x80xf32> to vector<1x80xf32>
    %47 = arith.addf %46, %4 : vector<1x80xf32>
    %cst_16 = arith.constant 0.000000e+00 : f32
    %48 = vector.broadcast %cst_16 : f32 to vector<1x80xf32>
    %49 = arith.maximumf %47, %48 : vector<1x80xf32>
    %50 = vector.extract_strided_slice %41 {offsets = [4, 0], sizes = [1, 80], strides = [1, 1]} : vector<9x80xf32> to vector<1x80xf32>
    %51 = arith.addf %50, %4 : vector<1x80xf32>
    %cst_17 = arith.constant 0.000000e+00 : f32
    %52 = vector.broadcast %cst_17 : f32 to vector<1x80xf32>
    %53 = arith.maximumf %51, %52 : vector<1x80xf32>
    %54 = vector.extract_strided_slice %41 {offsets = [6, 0], sizes = [1, 80], strides = [1, 1]} : vector<9x80xf32> to vector<1x80xf32>
    %55 = arith.addf %54, %4 : vector<1x80xf32>
    %cst_18 = arith.constant 0.000000e+00 : f32
    %56 = vector.broadcast %cst_18 : f32 to vector<1x80xf32>
    %57 = arith.maximumf %55, %56 : vector<1x80xf32>
    %58 = vector.extract_strided_slice %41 {offsets = [8, 0], sizes = [1, 80], strides = [1, 1]} : vector<9x80xf32> to vector<1x80xf32>
    %59 = arith.addf %58, %4 : vector<1x80xf32>
    %cst_19 = arith.constant 0.000000e+00 : f32
    %60 = vector.broadcast %cst_19 : f32 to vector<1x80xf32>
    %61 = arith.maximumf %59, %60 : vector<1x80xf32>
    %62 = tpu.concatenate %45, %49, %53, %57, %61 in 1 : vector<1x80xf32>, vector<1x80xf32>, vector<1x80xf32>, vector<1x80xf32>, vector<1x80xf32> -> vector<1x400xf32>
    %c1 = arith.constant 1 : index
    %c0_20 = arith.constant 0 : index
    %c0_21 = arith.constant 0 : index
    %63 = vector.load %arg1[%c1, %c0_20, %c0_21] : memref<8x32x32xbf16, #tpu.memory_space<vmem>>, vector<1x32x32xbf16>
    %64 = vector.shape_cast %63 : vector<1x32x32xbf16> to vector<32x32xbf16>
    %65 = arith.extf %64 : vector<32x32xbf16> to vector<32x32xf32>
    %66 = vector.extract_strided_slice %65 {offsets = [0, 0], sizes = [28, 32], strides = [1, 1]} : vector<32x32xf32> to vector<28x32xf32>
    %67 = vector.extract_strided_slice %65 {offsets = [1, 0], sizes = [28, 32], strides = [1, 1]} : vector<32x32xf32> to vector<28x32xf32>
    %68 = vector.extract_strided_slice %65 {offsets = [2, 0], sizes = [28, 32], strides = [1, 1]} : vector<32x32xf32> to vector<28x32xf32>
    %69 = vector.extract_strided_slice %65 {offsets = [3, 0], sizes = [28, 32], strides = [1, 1]} : vector<32x32xf32> to vector<28x32xf32>
    %70 = vector.extract_strided_slice %65 {offsets = [4, 0], sizes = [28, 32], strides = [1, 1]} : vector<32x32xf32> to vector<28x32xf32>
    %71 = tpu.concatenate %66, %67, %68, %69, %70 in 1 : vector<28x32xf32>, vector<28x32xf32>, vector<28x32xf32>, vector<28x32xf32>, vector<28x32xf32> -> vector<28x160xf32>
    %72 = arith.truncf %71 : vector<28x160xf32> to vector<28x160xbf16>
    %cst_22 = arith.constant dense<0.000000e+00> : vector<28x256xf32>
    %73 = tpu.matmul %72, %0, %cst_22 {dimension_numbers = #tpu.dot_dimension_numbers<[1], [0], [0], [1], [0, 0, 1, 1], [], []>} : vector<28x160xbf16>, vector<160x256xbf16>, vector<28x256xf32> -> vector<28x256xf32>
    %74 = vector.extract_strided_slice %73 {offsets = [0, 0], sizes = [28, 84], strides = [1, 1]} : vector<28x256xf32> to vector<28x84xf32>
    %75 = vector.extract_strided_slice %73 {offsets = [0, 128], sizes = [28, 84], strides = [1, 1]} : vector<28x256xf32> to vector<28x84xf32>
    %76 = arith.maximumf %74, %75 : vector<28x84xf32>
    %77 = vector.extract_strided_slice %76 {offsets = [0, 0], sizes = [27, 84], strides = [1, 1]} : vector<28x84xf32> to vector<27x84xf32>
    %78 = vector.extract_strided_slice %76 {offsets = [1, 0], sizes = [27, 84], strides = [1, 1]} : vector<28x84xf32> to vector<27x84xf32>
    %79 = arith.maximumf %77, %78 : vector<27x84xf32>
    %80 = vector.broadcast %3 : vector<1x84xf32> to vector<27x84xf32>
    %81 = arith.addf %79, %80 : vector<27x84xf32>
    %cst_23 = arith.constant 0.000000e+00 : f32
    %82 = vector.broadcast %cst_23 : f32 to vector<27x84xf32>
    %83 = arith.maximumf %81, %82 : vector<27x84xf32>
    %84 = arith.truncf %83 : vector<27x84xf32> to vector<27x84xbf16>
    %cst_24 = arith.constant dense<0.000000e+00> : vector<14x84xf32>
    %85 = tpu.matmul %2, %84, %cst_24 {dimension_numbers = #tpu.dot_dimension_numbers<[1], [0], [0], [1], [0, 0, 1, 1], [], []>} : vector<14x27xbf16>, vector<27x84xbf16>, vector<14x84xf32> -> vector<14x84xf32>
    %86 = vector.extract_strided_slice %85 {offsets = [0, 0], sizes = [10, 84], strides = [1, 1]} : vector<14x84xf32> to vector<10x84xf32>
    %87 = vector.extract_strided_slice %85 {offsets = [1, 0], sizes = [10, 84], strides = [1, 1]} : vector<14x84xf32> to vector<10x84xf32>
    %88 = vector.extract_strided_slice %85 {offsets = [2, 0], sizes = [10, 84], strides = [1, 1]} : vector<14x84xf32> to vector<10x84xf32>
    %89 = vector.extract_strided_slice %85 {offsets = [3, 0], sizes = [10, 84], strides = [1, 1]} : vector<14x84xf32> to vector<10x84xf32>
    %90 = vector.extract_strided_slice %85 {offsets = [4, 0], sizes = [10, 84], strides = [1, 1]} : vector<14x84xf32> to vector<10x84xf32>
    %91 = tpu.concatenate %86, %87, %88, %89, %90 in 1 : vector<10x84xf32>, vector<10x84xf32>, vector<10x84xf32>, vector<10x84xf32>, vector<10x84xf32> -> vector<10x420xf32>
    %92 = arith.truncf %91 : vector<10x420xf32> to vector<10x420xbf16>
    %cst_25 = arith.constant dense<0.000000e+00> : vector<10x256xf32>
    %93 = tpu.matmul %92, %1, %cst_25 {dimension_numbers = #tpu.dot_dimension_numbers<[1], [0], [0], [1], [0, 0, 1, 1], [], []>} : vector<10x420xbf16>, vector<420x256xbf16>, vector<10x256xf32> -> vector<10x256xf32>
    %94 = vector.extract_strided_slice %93 {offsets = [0, 0], sizes = [10, 80], strides = [1, 1]} : vector<10x256xf32> to vector<10x80xf32>
    %95 = vector.extract_strided_slice %93 {offsets = [0, 128], sizes = [10, 80], strides = [1, 1]} : vector<10x256xf32> to vector<10x80xf32>
    %96 = arith.maximumf %94, %95 : vector<10x80xf32>
    %97 = vector.extract_strided_slice %96 {offsets = [0, 0], sizes = [9, 80], strides = [1, 1]} : vector<10x80xf32> to vector<9x80xf32>
    %98 = vector.extract_strided_slice %96 {offsets = [1, 0], sizes = [9, 80], strides = [1, 1]} : vector<10x80xf32> to vector<9x80xf32>
    %99 = arith.maximumf %97, %98 : vector<9x80xf32>
    %100 = vector.extract_strided_slice %99 {offsets = [0, 0], sizes = [1, 80], strides = [1, 1]} : vector<9x80xf32> to vector<1x80xf32>
    %101 = arith.addf %100, %4 : vector<1x80xf32>
    %cst_26 = arith.constant 0.000000e+00 : f32
    %102 = vector.broadcast %cst_26 : f32 to vector<1x80xf32>
    %103 = arith.maximumf %101, %102 : vector<1x80xf32>
    %104 = vector.extract_strided_slice %99 {offsets = [2, 0], sizes = [1, 80], strides = [1, 1]} : vector<9x80xf32> to vector<1x80xf32>
    %105 = arith.addf %104, %4 : vector<1x80xf32>
    %cst_27 = arith.constant 0.000000e+00 : f32
    %106 = vector.broadcast %cst_27 : f32 to vector<1x80xf32>
    %107 = arith.maximumf %105, %106 : vector<1x80xf32>
    %108 = vector.extract_strided_slice %99 {offsets = [4, 0], sizes = [1, 80], strides = [1, 1]} : vector<9x80xf32> to vector<1x80xf32>
    %109 = arith.addf %108, %4 : vector<1x80xf32>
    %cst_28 = arith.constant 0.000000e+00 : f32
    %110 = vector.broadcast %cst_28 : f32 to vector<1x80xf32>
    %111 = arith.maximumf %109, %110 : vector<1x80xf32>
    %112 = vector.extract_strided_slice %99 {offsets = [6, 0], sizes = [1, 80], strides = [1, 1]} : vector<9x80xf32> to vector<1x80xf32>
    %113 = arith.addf %112, %4 : vector<1x80xf32>
    %cst_29 = arith.constant 0.000000e+00 : f32
    %114 = vector.broadcast %cst_29 : f32 to vector<1x80xf32>
    %115 = arith.maximumf %113, %114 : vector<1x80xf32>
    %116 = vector.extract_strided_slice %99 {offsets = [8, 0], sizes = [1, 80], strides = [1, 1]} : vector<9x80xf32> to vector<1x80xf32>
    %117 = arith.addf %116, %4 : vector<1x80xf32>
    %cst_30 = arith.constant 0.000000e+00 : f32
    %118 = vector.broadcast %cst_30 : f32 to vector<1x80xf32>
    %119 = arith.maximumf %117, %118 : vector<1x80xf32>
    %120 = tpu.concatenate %103, %107, %111, %115, %119 in 1 : vector<1x80xf32>, vector<1x80xf32>, vector<1x80xf32>, vector<1x80xf32>, vector<1x80xf32> -> vector<1x400xf32>
    %c2 = arith.constant 2 : index
    %c0_31 = arith.constant 0 : index
    %c0_32 = arith.constant 0 : index
    %121 = vector.load %arg1[%c2, %c0_31, %c0_32] : memref<8x32x32xbf16, #tpu.memory_space<vmem>>, vector<1x32x32xbf16>
    %122 = vector.shape_cast %121 : vector<1x32x32xbf16> to vector<32x32xbf16>
    %123 = arith.extf %122 : vector<32x32xbf16> to vector<32x32xf32>
    %124 = vector.extract_strided_slice %123 {offsets = [0, 0], sizes = [28, 32], strides = [1, 1]} : vector<32x32xf32> to vector<28x32xf32>
    %125 = vector.extract_strided_slice %123 {offsets = [1, 0], sizes = [28, 32], strides = [1, 1]} : vector<32x32xf32> to vector<28x32xf32>
    %126 = vector.extract_strided_slice %123 {offsets = [2, 0], sizes = [28, 32], strides = [1, 1]} : vector<32x32xf32> to vector<28x32xf32>
    %127 = vector.extract_strided_slice %123 {offsets = [3, 0], sizes = [28, 32], strides = [1, 1]} : vector<32x32xf32> to vector<28x32xf32>
    %128 = vector.extract_strided_slice %123 {offsets = [4, 0], sizes = [28, 32], strides = [1, 1]} : vector<32x32xf32> to vector<28x32xf32>
    %129 = tpu.concatenate %124, %125, %126, %127, %128 in 1 : vector<28x32xf32>, vector<28x32xf32>, vector<28x32xf32>, vector<28x32xf32>, vector<28x32xf32> -> vector<28x160xf32>
    %130 = arith.truncf %129 : vector<28x160xf32> to vector<28x160xbf16>
    %cst_33 = arith.constant dense<0.000000e+00> : vector<28x256xf32>
    %131 = tpu.matmul %130, %0, %cst_33 {dimension_numbers = #tpu.dot_dimension_numbers<[1], [0], [0], [1], [0, 0, 1, 1], [], []>} : vector<28x160xbf16>, vector<160x256xbf16>, vector<28x256xf32> -> vector<28x256xf32>
    %132 = vector.extract_strided_slice %131 {offsets = [0, 0], sizes = [28, 84], strides = [1, 1]} : vector<28x256xf32> to vector<28x84xf32>
    %133 = vector.extract_strided_slice %131 {offsets = [0, 128], sizes = [28, 84], strides = [1, 1]} : vector<28x256xf32> to vector<28x84xf32>
    %134 = arith.maximumf %132, %133 : vector<28x84xf32>
    %135 = vector.extract_strided_slice %134 {offsets = [0, 0], sizes = [27, 84], strides = [1, 1]} : vector<28x84xf32> to vector<27x84xf32>
    %136 = vector.extract_strided_slice %134 {offsets = [1, 0], sizes = [27, 84], strides = [1, 1]} : vector<28x84xf32> to vector<27x84xf32>
    %137 = arith.maximumf %135, %136 : vector<27x84xf32>
    %138 = vector.broadcast %3 : vector<1x84xf32> to vector<27x84xf32>
    %139 = arith.addf %137, %138 : vector<27x84xf32>
    %cst_34 = arith.constant 0.000000e+00 : f32
    %140 = vector.broadcast %cst_34 : f32 to vector<27x84xf32>
    %141 = arith.maximumf %139, %140 : vector<27x84xf32>
    %142 = arith.truncf %141 : vector<27x84xf32> to vector<27x84xbf16>
    %cst_35 = arith.constant dense<0.000000e+00> : vector<14x84xf32>
    %143 = tpu.matmul %2, %142, %cst_35 {dimension_numbers = #tpu.dot_dimension_numbers<[1], [0], [0], [1], [0, 0, 1, 1], [], []>} : vector<14x27xbf16>, vector<27x84xbf16>, vector<14x84xf32> -> vector<14x84xf32>
    %144 = vector.extract_strided_slice %143 {offsets = [0, 0], sizes = [10, 84], strides = [1, 1]} : vector<14x84xf32> to vector<10x84xf32>
    %145 = vector.extract_strided_slice %143 {offsets = [1, 0], sizes = [10, 84], strides = [1, 1]} : vector<14x84xf32> to vector<10x84xf32>
    %146 = vector.extract_strided_slice %143 {offsets = [2, 0], sizes = [10, 84], strides = [1, 1]} : vector<14x84xf32> to vector<10x84xf32>
    %147 = vector.extract_strided_slice %143 {offsets = [3, 0], sizes = [10, 84], strides = [1, 1]} : vector<14x84xf32> to vector<10x84xf32>
    %148 = vector.extract_strided_slice %143 {offsets = [4, 0], sizes = [10, 84], strides = [1, 1]} : vector<14x84xf32> to vector<10x84xf32>
    %149 = tpu.concatenate %144, %145, %146, %147, %148 in 1 : vector<10x84xf32>, vector<10x84xf32>, vector<10x84xf32>, vector<10x84xf32>, vector<10x84xf32> -> vector<10x420xf32>
    %150 = arith.truncf %149 : vector<10x420xf32> to vector<10x420xbf16>
    %cst_36 = arith.constant dense<0.000000e+00> : vector<10x256xf32>
    %151 = tpu.matmul %150, %1, %cst_36 {dimension_numbers = #tpu.dot_dimension_numbers<[1], [0], [0], [1], [0, 0, 1, 1], [], []>} : vector<10x420xbf16>, vector<420x256xbf16>, vector<10x256xf32> -> vector<10x256xf32>
    %152 = vector.extract_strided_slice %151 {offsets = [0, 0], sizes = [10, 80], strides = [1, 1]} : vector<10x256xf32> to vector<10x80xf32>
    %153 = vector.extract_strided_slice %151 {offsets = [0, 128], sizes = [10, 80], strides = [1, 1]} : vector<10x256xf32> to vector<10x80xf32>
    %154 = arith.maximumf %152, %153 : vector<10x80xf32>
    %155 = vector.extract_strided_slice %154 {offsets = [0, 0], sizes = [9, 80], strides = [1, 1]} : vector<10x80xf32> to vector<9x80xf32>
    %156 = vector.extract_strided_slice %154 {offsets = [1, 0], sizes = [9, 80], strides = [1, 1]} : vector<10x80xf32> to vector<9x80xf32>
    %157 = arith.maximumf %155, %156 : vector<9x80xf32>
    %158 = vector.extract_strided_slice %157 {offsets = [0, 0], sizes = [1, 80], strides = [1, 1]} : vector<9x80xf32> to vector<1x80xf32>
    %159 = arith.addf %158, %4 : vector<1x80xf32>
    %cst_37 = arith.constant 0.000000e+00 : f32
    %160 = vector.broadcast %cst_37 : f32 to vector<1x80xf32>
    %161 = arith.maximumf %159, %160 : vector<1x80xf32>
    %162 = vector.extract_strided_slice %157 {offsets = [2, 0], sizes = [1, 80], strides = [1, 1]} : vector<9x80xf32> to vector<1x80xf32>
    %163 = arith.addf %162, %4 : vector<1x80xf32>
    %cst_38 = arith.constant 0.000000e+00 : f32
    %164 = vector.broadcast %cst_38 : f32 to vector<1x80xf32>
    %165 = arith.maximumf %163, %164 : vector<1x80xf32>
    %166 = vector.extract_strided_slice %157 {offsets = [4, 0], sizes = [1, 80], strides = [1, 1]} : vector<9x80xf32> to vector<1x80xf32>
    %167 = arith.addf %166, %4 : vector<1x80xf32>
    %cst_39 = arith.constant 0.000000e+00 : f32
    %168 = vector.broadcast %cst_39 : f32 to vector<1x80xf32>
    %169 = arith.maximumf %167, %168 : vector<1x80xf32>
    %170 = vector.extract_strided_slice %157 {offsets = [6, 0], sizes = [1, 80], strides = [1, 1]} : vector<9x80xf32> to vector<1x80xf32>
    %171 = arith.addf %170, %4 : vector<1x80xf32>
    %cst_40 = arith.constant 0.000000e+00 : f32
    %172 = vector.broadcast %cst_40 : f32 to vector<1x80xf32>
    %173 = arith.maximumf %171, %172 : vector<1x80xf32>
    %174 = vector.extract_strided_slice %157 {offsets = [8, 0], sizes = [1, 80], strides = [1, 1]} : vector<9x80xf32> to vector<1x80xf32>
    %175 = arith.addf %174, %4 : vector<1x80xf32>
    %cst_41 = arith.constant 0.000000e+00 : f32
    %176 = vector.broadcast %cst_41 : f32 to vector<1x80xf32>
    %177 = arith.maximumf %175, %176 : vector<1x80xf32>
    %178 = tpu.concatenate %161, %165, %169, %173, %177 in 1 : vector<1x80xf32>, vector<1x80xf32>, vector<1x80xf32>, vector<1x80xf32>, vector<1x80xf32> -> vector<1x400xf32>
    %c3 = arith.constant 3 : index
    %c0_42 = arith.constant 0 : index
    %c0_43 = arith.constant 0 : index
    %179 = vector.load %arg1[%c3, %c0_42, %c0_43] : memref<8x32x32xbf16, #tpu.memory_space<vmem>>, vector<1x32x32xbf16>
    %180 = vector.shape_cast %179 : vector<1x32x32xbf16> to vector<32x32xbf16>
    %181 = arith.extf %180 : vector<32x32xbf16> to vector<32x32xf32>
    %182 = vector.extract_strided_slice %181 {offsets = [0, 0], sizes = [28, 32], strides = [1, 1]} : vector<32x32xf32> to vector<28x32xf32>
    %183 = vector.extract_strided_slice %181 {offsets = [1, 0], sizes = [28, 32], strides = [1, 1]} : vector<32x32xf32> to vector<28x32xf32>
    %184 = vector.extract_strided_slice %181 {offsets = [2, 0], sizes = [28, 32], strides = [1, 1]} : vector<32x32xf32> to vector<28x32xf32>
    %185 = vector.extract_strided_slice %181 {offsets = [3, 0], sizes = [28, 32], strides = [1, 1]} : vector<32x32xf32> to vector<28x32xf32>
    %186 = vector.extract_strided_slice %181 {offsets = [4, 0], sizes = [28, 32], strides = [1, 1]} : vector<32x32xf32> to vector<28x32xf32>
    %187 = tpu.concatenate %182, %183, %184, %185, %186 in 1 : vector<28x32xf32>, vector<28x32xf32>, vector<28x32xf32>, vector<28x32xf32>, vector<28x32xf32> -> vector<28x160xf32>
    %188 = arith.truncf %187 : vector<28x160xf32> to vector<28x160xbf16>
    %cst_44 = arith.constant dense<0.000000e+00> : vector<28x256xf32>
    %189 = tpu.matmul %188, %0, %cst_44 {dimension_numbers = #tpu.dot_dimension_numbers<[1], [0], [0], [1], [0, 0, 1, 1], [], []>} : vector<28x160xbf16>, vector<160x256xbf16>, vector<28x256xf32> -> vector<28x256xf32>
    %190 = vector.extract_strided_slice %189 {offsets = [0, 0], sizes = [28, 84], strides = [1, 1]} : vector<28x256xf32> to vector<28x84xf32>
    %191 = vector.extract_strided_slice %189 {offsets = [0, 128], sizes = [28, 84], strides = [1, 1]} : vector<28x256xf32> to vector<28x84xf32>
    %192 = arith.maximumf %190, %191 : vector<28x84xf32>
    %193 = vector.extract_strided_slice %192 {offsets = [0, 0], sizes = [27, 84], strides = [1, 1]} : vector<28x84xf32> to vector<27x84xf32>
    %194 = vector.extract_strided_slice %192 {offsets = [1, 0], sizes = [27, 84], strides = [1, 1]} : vector<28x84xf32> to vector<27x84xf32>
    %195 = arith.maximumf %193, %194 : vector<27x84xf32>
    %196 = vector.broadcast %3 : vector<1x84xf32> to vector<27x84xf32>
    %197 = arith.addf %195, %196 : vector<27x84xf32>
    %cst_45 = arith.constant 0.000000e+00 : f32
    %198 = vector.broadcast %cst_45 : f32 to vector<27x84xf32>
    %199 = arith.maximumf %197, %198 : vector<27x84xf32>
    %200 = arith.truncf %199 : vector<27x84xf32> to vector<27x84xbf16>
    %cst_46 = arith.constant dense<0.000000e+00> : vector<14x84xf32>
    %201 = tpu.matmul %2, %200, %cst_46 {dimension_numbers = #tpu.dot_dimension_numbers<[1], [0], [0], [1], [0, 0, 1, 1], [], []>} : vector<14x27xbf16>, vector<27x84xbf16>, vector<14x84xf32> -> vector<14x84xf32>
    %202 = vector.extract_strided_slice %201 {offsets = [0, 0], sizes = [10, 84], strides = [1, 1]} : vector<14x84xf32> to vector<10x84xf32>
    %203 = vector.extract_strided_slice %201 {offsets = [1, 0], sizes = [10, 84], strides = [1, 1]} : vector<14x84xf32> to vector<10x84xf32>
    %204 = vector.extract_strided_slice %201 {offsets = [2, 0], sizes = [10, 84], strides = [1, 1]} : vector<14x84xf32> to vector<10x84xf32>
    %205 = vector.extract_strided_slice %201 {offsets = [3, 0], sizes = [10, 84], strides = [1, 1]} : vector<14x84xf32> to vector<10x84xf32>
    %206 = vector.extract_strided_slice %201 {offsets = [4, 0], sizes = [10, 84], strides = [1, 1]} : vector<14x84xf32> to vector<10x84xf32>
    %207 = tpu.concatenate %202, %203, %204, %205, %206 in 1 : vector<10x84xf32>, vector<10x84xf32>, vector<10x84xf32>, vector<10x84xf32>, vector<10x84xf32> -> vector<10x420xf32>
    %208 = arith.truncf %207 : vector<10x420xf32> to vector<10x420xbf16>
    %cst_47 = arith.constant dense<0.000000e+00> : vector<10x256xf32>
    %209 = tpu.matmul %208, %1, %cst_47 {dimension_numbers = #tpu.dot_dimension_numbers<[1], [0], [0], [1], [0, 0, 1, 1], [], []>} : vector<10x420xbf16>, vector<420x256xbf16>, vector<10x256xf32> -> vector<10x256xf32>
    %210 = vector.extract_strided_slice %209 {offsets = [0, 0], sizes = [10, 80], strides = [1, 1]} : vector<10x256xf32> to vector<10x80xf32>
    %211 = vector.extract_strided_slice %209 {offsets = [0, 128], sizes = [10, 80], strides = [1, 1]} : vector<10x256xf32> to vector<10x80xf32>
    %212 = arith.maximumf %210, %211 : vector<10x80xf32>
    %213 = vector.extract_strided_slice %212 {offsets = [0, 0], sizes = [9, 80], strides = [1, 1]} : vector<10x80xf32> to vector<9x80xf32>
    %214 = vector.extract_strided_slice %212 {offsets = [1, 0], sizes = [9, 80], strides = [1, 1]} : vector<10x80xf32> to vector<9x80xf32>
    %215 = arith.maximumf %213, %214 : vector<9x80xf32>
    %216 = vector.extract_strided_slice %215 {offsets = [0, 0], sizes = [1, 80], strides = [1, 1]} : vector<9x80xf32> to vector<1x80xf32>
    %217 = arith.addf %216, %4 : vector<1x80xf32>
    %cst_48 = arith.constant 0.000000e+00 : f32
    %218 = vector.broadcast %cst_48 : f32 to vector<1x80xf32>
    %219 = arith.maximumf %217, %218 : vector<1x80xf32>
    %220 = vector.extract_strided_slice %215 {offsets = [2, 0], sizes = [1, 80], strides = [1, 1]} : vector<9x80xf32> to vector<1x80xf32>
    %221 = arith.addf %220, %4 : vector<1x80xf32>
    %cst_49 = arith.constant 0.000000e+00 : f32
    %222 = vector.broadcast %cst_49 : f32 to vector<1x80xf32>
    %223 = arith.maximumf %221, %222 : vector<1x80xf32>
    %224 = vector.extract_strided_slice %215 {offsets = [4, 0], sizes = [1, 80], strides = [1, 1]} : vector<9x80xf32> to vector<1x80xf32>
    %225 = arith.addf %224, %4 : vector<1x80xf32>
    %cst_50 = arith.constant 0.000000e+00 : f32
    %226 = vector.broadcast %cst_50 : f32 to vector<1x80xf32>
    %227 = arith.maximumf %225, %226 : vector<1x80xf32>
    %228 = vector.extract_strided_slice %215 {offsets = [6, 0], sizes = [1, 80], strides = [1, 1]} : vector<9x80xf32> to vector<1x80xf32>
    %229 = arith.addf %228, %4 : vector<1x80xf32>
    %cst_51 = arith.constant 0.000000e+00 : f32
    %230 = vector.broadcast %cst_51 : f32 to vector<1x80xf32>
    %231 = arith.maximumf %229, %230 : vector<1x80xf32>
    %232 = vector.extract_strided_slice %215 {offsets = [8, 0], sizes = [1, 80], strides = [1, 1]} : vector<9x80xf32> to vector<1x80xf32>
    %233 = arith.addf %232, %4 : vector<1x80xf32>
    %cst_52 = arith.constant 0.000000e+00 : f32
    %234 = vector.broadcast %cst_52 : f32 to vector<1x80xf32>
    %235 = arith.maximumf %233, %234 : vector<1x80xf32>
    %236 = tpu.concatenate %219, %223, %227, %231, %235 in 1 : vector<1x80xf32>, vector<1x80xf32>, vector<1x80xf32>, vector<1x80xf32>, vector<1x80xf32> -> vector<1x400xf32>
    %c4 = arith.constant 4 : index
    %c0_53 = arith.constant 0 : index
    %c0_54 = arith.constant 0 : index
    %237 = vector.load %arg1[%c4, %c0_53, %c0_54] : memref<8x32x32xbf16, #tpu.memory_space<vmem>>, vector<1x32x32xbf16>
    %238 = vector.shape_cast %237 : vector<1x32x32xbf16> to vector<32x32xbf16>
    %239 = arith.extf %238 : vector<32x32xbf16> to vector<32x32xf32>
    %240 = vector.extract_strided_slice %239 {offsets = [0, 0], sizes = [28, 32], strides = [1, 1]} : vector<32x32xf32> to vector<28x32xf32>
    %241 = vector.extract_strided_slice %239 {offsets = [1, 0], sizes = [28, 32], strides = [1, 1]} : vector<32x32xf32> to vector<28x32xf32>
    %242 = vector.extract_strided_slice %239 {offsets = [2, 0], sizes = [28, 32], strides = [1, 1]} : vector<32x32xf32> to vector<28x32xf32>
    %243 = vector.extract_strided_slice %239 {offsets = [3, 0], sizes = [28, 32], strides = [1, 1]} : vector<32x32xf32> to vector<28x32xf32>
    %244 = vector.extract_strided_slice %239 {offsets = [4, 0], sizes = [28, 32], strides = [1, 1]} : vector<32x32xf32> to vector<28x32xf32>
    %245 = tpu.concatenate %240, %241, %242, %243, %244 in 1 : vector<28x32xf32>, vector<28x32xf32>, vector<28x32xf32>, vector<28x32xf32>, vector<28x32xf32> -> vector<28x160xf32>
    %246 = arith.truncf %245 : vector<28x160xf32> to vector<28x160xbf16>
    %cst_55 = arith.constant dense<0.000000e+00> : vector<28x256xf32>
    %247 = tpu.matmul %246, %0, %cst_55 {dimension_numbers = #tpu.dot_dimension_numbers<[1], [0], [0], [1], [0, 0, 1, 1], [], []>} : vector<28x160xbf16>, vector<160x256xbf16>, vector<28x256xf32> -> vector<28x256xf32>
    %248 = vector.extract_strided_slice %247 {offsets = [0, 0], sizes = [28, 84], strides = [1, 1]} : vector<28x256xf32> to vector<28x84xf32>
    %249 = vector.extract_strided_slice %247 {offsets = [0, 128], sizes = [28, 84], strides = [1, 1]} : vector<28x256xf32> to vector<28x84xf32>
    %250 = arith.maximumf %248, %249 : vector<28x84xf32>
    %251 = vector.extract_strided_slice %250 {offsets = [0, 0], sizes = [27, 84], strides = [1, 1]} : vector<28x84xf32> to vector<27x84xf32>
    %252 = vector.extract_strided_slice %250 {offsets = [1, 0], sizes = [27, 84], strides = [1, 1]} : vector<28x84xf32> to vector<27x84xf32>
    %253 = arith.maximumf %251, %252 : vector<27x84xf32>
    %254 = vector.broadcast %3 : vector<1x84xf32> to vector<27x84xf32>
    %255 = arith.addf %253, %254 : vector<27x84xf32>
    %cst_56 = arith.constant 0.000000e+00 : f32
    %256 = vector.broadcast %cst_56 : f32 to vector<27x84xf32>
    %257 = arith.maximumf %255, %256 : vector<27x84xf32>
    %258 = arith.truncf %257 : vector<27x84xf32> to vector<27x84xbf16>
    %cst_57 = arith.constant dense<0.000000e+00> : vector<14x84xf32>
    %259 = tpu.matmul %2, %258, %cst_57 {dimension_numbers = #tpu.dot_dimension_numbers<[1], [0], [0], [1], [0, 0, 1, 1], [], []>} : vector<14x27xbf16>, vector<27x84xbf16>, vector<14x84xf32> -> vector<14x84xf32>
    %260 = vector.extract_strided_slice %259 {offsets = [0, 0], sizes = [10, 84], strides = [1, 1]} : vector<14x84xf32> to vector<10x84xf32>
    %261 = vector.extract_strided_slice %259 {offsets = [1, 0], sizes = [10, 84], strides = [1, 1]} : vector<14x84xf32> to vector<10x84xf32>
    %262 = vector.extract_strided_slice %259 {offsets = [2, 0], sizes = [10, 84], strides = [1, 1]} : vector<14x84xf32> to vector<10x84xf32>
    %263 = vector.extract_strided_slice %259 {offsets = [3, 0], sizes = [10, 84], strides = [1, 1]} : vector<14x84xf32> to vector<10x84xf32>
    %264 = vector.extract_strided_slice %259 {offsets = [4, 0], sizes = [10, 84], strides = [1, 1]} : vector<14x84xf32> to vector<10x84xf32>
    %265 = tpu.concatenate %260, %261, %262, %263, %264 in 1 : vector<10x84xf32>, vector<10x84xf32>, vector<10x84xf32>, vector<10x84xf32>, vector<10x84xf32> -> vector<10x420xf32>
    %266 = arith.truncf %265 : vector<10x420xf32> to vector<10x420xbf16>
    %cst_58 = arith.constant dense<0.000000e+00> : vector<10x256xf32>
    %267 = tpu.matmul %266, %1, %cst_58 {dimension_numbers = #tpu.dot_dimension_numbers<[1], [0], [0], [1], [0, 0, 1, 1], [], []>} : vector<10x420xbf16>, vector<420x256xbf16>, vector<10x256xf32> -> vector<10x256xf32>
    %268 = vector.extract_strided_slice %267 {offsets = [0, 0], sizes = [10, 80], strides = [1, 1]} : vector<10x256xf32> to vector<10x80xf32>
    %269 = vector.extract_strided_slice %267 {offsets = [0, 128], sizes = [10, 80], strides = [1, 1]} : vector<10x256xf32> to vector<10x80xf32>
    %270 = arith.maximumf %268, %269 : vector<10x80xf32>
    %271 = vector.extract_strided_slice %270 {offsets = [0, 0], sizes = [9, 80], strides = [1, 1]} : vector<10x80xf32> to vector<9x80xf32>
    %272 = vector.extract_strided_slice %270 {offsets = [1, 0], sizes = [9, 80], strides = [1, 1]} : vector<10x80xf32> to vector<9x80xf32>
    %273 = arith.maximumf %271, %272 : vector<9x80xf32>
    %274 = vector.extract_strided_slice %273 {offsets = [0, 0], sizes = [1, 80], strides = [1, 1]} : vector<9x80xf32> to vector<1x80xf32>
    %275 = arith.addf %274, %4 : vector<1x80xf32>
    %cst_59 = arith.constant 0.000000e+00 : f32
    %276 = vector.broadcast %cst_59 : f32 to vector<1x80xf32>
    %277 = arith.maximumf %275, %276 : vector<1x80xf32>
    %278 = vector.extract_strided_slice %273 {offsets = [2, 0], sizes = [1, 80], strides = [1, 1]} : vector<9x80xf32> to vector<1x80xf32>
    %279 = arith.addf %278, %4 : vector<1x80xf32>
    %cst_60 = arith.constant 0.000000e+00 : f32
    %280 = vector.broadcast %cst_60 : f32 to vector<1x80xf32>
    %281 = arith.maximumf %279, %280 : vector<1x80xf32>
    %282 = vector.extract_strided_slice %273 {offsets = [4, 0], sizes = [1, 80], strides = [1, 1]} : vector<9x80xf32> to vector<1x80xf32>
    %283 = arith.addf %282, %4 : vector<1x80xf32>
    %cst_61 = arith.constant 0.000000e+00 : f32
    %284 = vector.broadcast %cst_61 : f32 to vector<1x80xf32>
    %285 = arith.maximumf %283, %284 : vector<1x80xf32>
    %286 = vector.extract_strided_slice %273 {offsets = [6, 0], sizes = [1, 80], strides = [1, 1]} : vector<9x80xf32> to vector<1x80xf32>
    %287 = arith.addf %286, %4 : vector<1x80xf32>
    %cst_62 = arith.constant 0.000000e+00 : f32
    %288 = vector.broadcast %cst_62 : f32 to vector<1x80xf32>
    %289 = arith.maximumf %287, %288 : vector<1x80xf32>
    %290 = vector.extract_strided_slice %273 {offsets = [8, 0], sizes = [1, 80], strides = [1, 1]} : vector<9x80xf32> to vector<1x80xf32>
    %291 = arith.addf %290, %4 : vector<1x80xf32>
    %cst_63 = arith.constant 0.000000e+00 : f32
    %292 = vector.broadcast %cst_63 : f32 to vector<1x80xf32>
    %293 = arith.maximumf %291, %292 : vector<1x80xf32>
    %294 = tpu.concatenate %277, %281, %285, %289, %293 in 1 : vector<1x80xf32>, vector<1x80xf32>, vector<1x80xf32>, vector<1x80xf32>, vector<1x80xf32> -> vector<1x400xf32>
    %c5 = arith.constant 5 : index
    %c0_64 = arith.constant 0 : index
    %c0_65 = arith.constant 0 : index
    %295 = vector.load %arg1[%c5, %c0_64, %c0_65] : memref<8x32x32xbf16, #tpu.memory_space<vmem>>, vector<1x32x32xbf16>
    %296 = vector.shape_cast %295 : vector<1x32x32xbf16> to vector<32x32xbf16>
    %297 = arith.extf %296 : vector<32x32xbf16> to vector<32x32xf32>
    %298 = vector.extract_strided_slice %297 {offsets = [0, 0], sizes = [28, 32], strides = [1, 1]} : vector<32x32xf32> to vector<28x32xf32>
    %299 = vector.extract_strided_slice %297 {offsets = [1, 0], sizes = [28, 32], strides = [1, 1]} : vector<32x32xf32> to vector<28x32xf32>
    %300 = vector.extract_strided_slice %297 {offsets = [2, 0], sizes = [28, 32], strides = [1, 1]} : vector<32x32xf32> to vector<28x32xf32>
    %301 = vector.extract_strided_slice %297 {offsets = [3, 0], sizes = [28, 32], strides = [1, 1]} : vector<32x32xf32> to vector<28x32xf32>
    %302 = vector.extract_strided_slice %297 {offsets = [4, 0], sizes = [28, 32], strides = [1, 1]} : vector<32x32xf32> to vector<28x32xf32>
    %303 = tpu.concatenate %298, %299, %300, %301, %302 in 1 : vector<28x32xf32>, vector<28x32xf32>, vector<28x32xf32>, vector<28x32xf32>, vector<28x32xf32> -> vector<28x160xf32>
    %304 = arith.truncf %303 : vector<28x160xf32> to vector<28x160xbf16>
    %cst_66 = arith.constant dense<0.000000e+00> : vector<28x256xf32>
    %305 = tpu.matmul %304, %0, %cst_66 {dimension_numbers = #tpu.dot_dimension_numbers<[1], [0], [0], [1], [0, 0, 1, 1], [], []>} : vector<28x160xbf16>, vector<160x256xbf16>, vector<28x256xf32> -> vector<28x256xf32>
    %306 = vector.extract_strided_slice %305 {offsets = [0, 0], sizes = [28, 84], strides = [1, 1]} : vector<28x256xf32> to vector<28x84xf32>
    %307 = vector.extract_strided_slice %305 {offsets = [0, 128], sizes = [28, 84], strides = [1, 1]} : vector<28x256xf32> to vector<28x84xf32>
    %308 = arith.maximumf %306, %307 : vector<28x84xf32>
    %309 = vector.extract_strided_slice %308 {offsets = [0, 0], sizes = [27, 84], strides = [1, 1]} : vector<28x84xf32> to vector<27x84xf32>
    %310 = vector.extract_strided_slice %308 {offsets = [1, 0], sizes = [27, 84], strides = [1, 1]} : vector<28x84xf32> to vector<27x84xf32>
    %311 = arith.maximumf %309, %310 : vector<27x84xf32>
    %312 = vector.broadcast %3 : vector<1x84xf32> to vector<27x84xf32>
    %313 = arith.addf %311, %312 : vector<27x84xf32>
    %cst_67 = arith.constant 0.000000e+00 : f32
    %314 = vector.broadcast %cst_67 : f32 to vector<27x84xf32>
    %315 = arith.maximumf %313, %314 : vector<27x84xf32>
    %316 = arith.truncf %315 : vector<27x84xf32> to vector<27x84xbf16>
    %cst_68 = arith.constant dense<0.000000e+00> : vector<14x84xf32>
    %317 = tpu.matmul %2, %316, %cst_68 {dimension_numbers = #tpu.dot_dimension_numbers<[1], [0], [0], [1], [0, 0, 1, 1], [], []>} : vector<14x27xbf16>, vector<27x84xbf16>, vector<14x84xf32> -> vector<14x84xf32>
    %318 = vector.extract_strided_slice %317 {offsets = [0, 0], sizes = [10, 84], strides = [1, 1]} : vector<14x84xf32> to vector<10x84xf32>
    %319 = vector.extract_strided_slice %317 {offsets = [1, 0], sizes = [10, 84], strides = [1, 1]} : vector<14x84xf32> to vector<10x84xf32>
    %320 = vector.extract_strided_slice %317 {offsets = [2, 0], sizes = [10, 84], strides = [1, 1]} : vector<14x84xf32> to vector<10x84xf32>
    %321 = vector.extract_strided_slice %317 {offsets = [3, 0], sizes = [10, 84], strides = [1, 1]} : vector<14x84xf32> to vector<10x84xf32>
    %322 = vector.extract_strided_slice %317 {offsets = [4, 0], sizes = [10, 84], strides = [1, 1]} : vector<14x84xf32> to vector<10x84xf32>
    %323 = tpu.concatenate %318, %319, %320, %321, %322 in 1 : vector<10x84xf32>, vector<10x84xf32>, vector<10x84xf32>, vector<10x84xf32>, vector<10x84xf32> -> vector<10x420xf32>
    %324 = arith.truncf %323 : vector<10x420xf32> to vector<10x420xbf16>
    %cst_69 = arith.constant dense<0.000000e+00> : vector<10x256xf32>
    %325 = tpu.matmul %324, %1, %cst_69 {dimension_numbers = #tpu.dot_dimension_numbers<[1], [0], [0], [1], [0, 0, 1, 1], [], []>} : vector<10x420xbf16>, vector<420x256xbf16>, vector<10x256xf32> -> vector<10x256xf32>
    %326 = vector.extract_strided_slice %325 {offsets = [0, 0], sizes = [10, 80], strides = [1, 1]} : vector<10x256xf32> to vector<10x80xf32>
    %327 = vector.extract_strided_slice %325 {offsets = [0, 128], sizes = [10, 80], strides = [1, 1]} : vector<10x256xf32> to vector<10x80xf32>
    %328 = arith.maximumf %326, %327 : vector<10x80xf32>
    %329 = vector.extract_strided_slice %328 {offsets = [0, 0], sizes = [9, 80], strides = [1, 1]} : vector<10x80xf32> to vector<9x80xf32>
    %330 = vector.extract_strided_slice %328 {offsets = [1, 0], sizes = [9, 80], strides = [1, 1]} : vector<10x80xf32> to vector<9x80xf32>
    %331 = arith.maximumf %329, %330 : vector<9x80xf32>
    %332 = vector.extract_strided_slice %331 {offsets = [0, 0], sizes = [1, 80], strides = [1, 1]} : vector<9x80xf32> to vector<1x80xf32>
    %333 = arith.addf %332, %4 : vector<1x80xf32>
    %cst_70 = arith.constant 0.000000e+00 : f32
    %334 = vector.broadcast %cst_70 : f32 to vector<1x80xf32>
    %335 = arith.maximumf %333, %334 : vector<1x80xf32>
    %336 = vector.extract_strided_slice %331 {offsets = [2, 0], sizes = [1, 80], strides = [1, 1]} : vector<9x80xf32> to vector<1x80xf32>
    %337 = arith.addf %336, %4 : vector<1x80xf32>
    %cst_71 = arith.constant 0.000000e+00 : f32
    %338 = vector.broadcast %cst_71 : f32 to vector<1x80xf32>
    %339 = arith.maximumf %337, %338 : vector<1x80xf32>
    %340 = vector.extract_strided_slice %331 {offsets = [4, 0], sizes = [1, 80], strides = [1, 1]} : vector<9x80xf32> to vector<1x80xf32>
    %341 = arith.addf %340, %4 : vector<1x80xf32>
    %cst_72 = arith.constant 0.000000e+00 : f32
    %342 = vector.broadcast %cst_72 : f32 to vector<1x80xf32>
    %343 = arith.maximumf %341, %342 : vector<1x80xf32>
    %344 = vector.extract_strided_slice %331 {offsets = [6, 0], sizes = [1, 80], strides = [1, 1]} : vector<9x80xf32> to vector<1x80xf32>
    %345 = arith.addf %344, %4 : vector<1x80xf32>
    %cst_73 = arith.constant 0.000000e+00 : f32
    %346 = vector.broadcast %cst_73 : f32 to vector<1x80xf32>
    %347 = arith.maximumf %345, %346 : vector<1x80xf32>
    %348 = vector.extract_strided_slice %331 {offsets = [8, 0], sizes = [1, 80], strides = [1, 1]} : vector<9x80xf32> to vector<1x80xf32>
    %349 = arith.addf %348, %4 : vector<1x80xf32>
    %cst_74 = arith.constant 0.000000e+00 : f32
    %350 = vector.broadcast %cst_74 : f32 to vector<1x80xf32>
    %351 = arith.maximumf %349, %350 : vector<1x80xf32>
    %352 = tpu.concatenate %335, %339, %343, %347, %351 in 1 : vector<1x80xf32>, vector<1x80xf32>, vector<1x80xf32>, vector<1x80xf32>, vector<1x80xf32> -> vector<1x400xf32>
    %c6 = arith.constant 6 : index
    %c0_75 = arith.constant 0 : index
    %c0_76 = arith.constant 0 : index
    %353 = vector.load %arg1[%c6, %c0_75, %c0_76] : memref<8x32x32xbf16, #tpu.memory_space<vmem>>, vector<1x32x32xbf16>
    %354 = vector.shape_cast %353 : vector<1x32x32xbf16> to vector<32x32xbf16>
    %355 = arith.extf %354 : vector<32x32xbf16> to vector<32x32xf32>
    %356 = vector.extract_strided_slice %355 {offsets = [0, 0], sizes = [28, 32], strides = [1, 1]} : vector<32x32xf32> to vector<28x32xf32>
    %357 = vector.extract_strided_slice %355 {offsets = [1, 0], sizes = [28, 32], strides = [1, 1]} : vector<32x32xf32> to vector<28x32xf32>
    %358 = vector.extract_strided_slice %355 {offsets = [2, 0], sizes = [28, 32], strides = [1, 1]} : vector<32x32xf32> to vector<28x32xf32>
    %359 = vector.extract_strided_slice %355 {offsets = [3, 0], sizes = [28, 32], strides = [1, 1]} : vector<32x32xf32> to vector<28x32xf32>
    %360 = vector.extract_strided_slice %355 {offsets = [4, 0], sizes = [28, 32], strides = [1, 1]} : vector<32x32xf32> to vector<28x32xf32>
    %361 = tpu.concatenate %356, %357, %358, %359, %360 in 1 : vector<28x32xf32>, vector<28x32xf32>, vector<28x32xf32>, vector<28x32xf32>, vector<28x32xf32> -> vector<28x160xf32>
    %362 = arith.truncf %361 : vector<28x160xf32> to vector<28x160xbf16>
    %cst_77 = arith.constant dense<0.000000e+00> : vector<28x256xf32>
    %363 = tpu.matmul %362, %0, %cst_77 {dimension_numbers = #tpu.dot_dimension_numbers<[1], [0], [0], [1], [0, 0, 1, 1], [], []>} : vector<28x160xbf16>, vector<160x256xbf16>, vector<28x256xf32> -> vector<28x256xf32>
    %364 = vector.extract_strided_slice %363 {offsets = [0, 0], sizes = [28, 84], strides = [1, 1]} : vector<28x256xf32> to vector<28x84xf32>
    %365 = vector.extract_strided_slice %363 {offsets = [0, 128], sizes = [28, 84], strides = [1, 1]} : vector<28x256xf32> to vector<28x84xf32>
    %366 = arith.maximumf %364, %365 : vector<28x84xf32>
    %367 = vector.extract_strided_slice %366 {offsets = [0, 0], sizes = [27, 84], strides = [1, 1]} : vector<28x84xf32> to vector<27x84xf32>
    %368 = vector.extract_strided_slice %366 {offsets = [1, 0], sizes = [27, 84], strides = [1, 1]} : vector<28x84xf32> to vector<27x84xf32>
    %369 = arith.maximumf %367, %368 : vector<27x84xf32>
    %370 = vector.broadcast %3 : vector<1x84xf32> to vector<27x84xf32>
    %371 = arith.addf %369, %370 : vector<27x84xf32>
    %cst_78 = arith.constant 0.000000e+00 : f32
    %372 = vector.broadcast %cst_78 : f32 to vector<27x84xf32>
    %373 = arith.maximumf %371, %372 : vector<27x84xf32>
    %374 = arith.truncf %373 : vector<27x84xf32> to vector<27x84xbf16>
    %cst_79 = arith.constant dense<0.000000e+00> : vector<14x84xf32>
    %375 = tpu.matmul %2, %374, %cst_79 {dimension_numbers = #tpu.dot_dimension_numbers<[1], [0], [0], [1], [0, 0, 1, 1], [], []>} : vector<14x27xbf16>, vector<27x84xbf16>, vector<14x84xf32> -> vector<14x84xf32>
    %376 = vector.extract_strided_slice %375 {offsets = [0, 0], sizes = [10, 84], strides = [1, 1]} : vector<14x84xf32> to vector<10x84xf32>
    %377 = vector.extract_strided_slice %375 {offsets = [1, 0], sizes = [10, 84], strides = [1, 1]} : vector<14x84xf32> to vector<10x84xf32>
    %378 = vector.extract_strided_slice %375 {offsets = [2, 0], sizes = [10, 84], strides = [1, 1]} : vector<14x84xf32> to vector<10x84xf32>
    %379 = vector.extract_strided_slice %375 {offsets = [3, 0], sizes = [10, 84], strides = [1, 1]} : vector<14x84xf32> to vector<10x84xf32>
    %380 = vector.extract_strided_slice %375 {offsets = [4, 0], sizes = [10, 84], strides = [1, 1]} : vector<14x84xf32> to vector<10x84xf32>
    %381 = tpu.concatenate %376, %377, %378, %379, %380 in 1 : vector<10x84xf32>, vector<10x84xf32>, vector<10x84xf32>, vector<10x84xf32>, vector<10x84xf32> -> vector<10x420xf32>
    %382 = arith.truncf %381 : vector<10x420xf32> to vector<10x420xbf16>
    %cst_80 = arith.constant dense<0.000000e+00> : vector<10x256xf32>
    %383 = tpu.matmul %382, %1, %cst_80 {dimension_numbers = #tpu.dot_dimension_numbers<[1], [0], [0], [1], [0, 0, 1, 1], [], []>} : vector<10x420xbf16>, vector<420x256xbf16>, vector<10x256xf32> -> vector<10x256xf32>
    %384 = vector.extract_strided_slice %383 {offsets = [0, 0], sizes = [10, 80], strides = [1, 1]} : vector<10x256xf32> to vector<10x80xf32>
    %385 = vector.extract_strided_slice %383 {offsets = [0, 128], sizes = [10, 80], strides = [1, 1]} : vector<10x256xf32> to vector<10x80xf32>
    %386 = arith.maximumf %384, %385 : vector<10x80xf32>
    %387 = vector.extract_strided_slice %386 {offsets = [0, 0], sizes = [9, 80], strides = [1, 1]} : vector<10x80xf32> to vector<9x80xf32>
    %388 = vector.extract_strided_slice %386 {offsets = [1, 0], sizes = [9, 80], strides = [1, 1]} : vector<10x80xf32> to vector<9x80xf32>
    %389 = arith.maximumf %387, %388 : vector<9x80xf32>
    %390 = vector.extract_strided_slice %389 {offsets = [0, 0], sizes = [1, 80], strides = [1, 1]} : vector<9x80xf32> to vector<1x80xf32>
    %391 = arith.addf %390, %4 : vector<1x80xf32>
    %cst_81 = arith.constant 0.000000e+00 : f32
    %392 = vector.broadcast %cst_81 : f32 to vector<1x80xf32>
    %393 = arith.maximumf %391, %392 : vector<1x80xf32>
    %394 = vector.extract_strided_slice %389 {offsets = [2, 0], sizes = [1, 80], strides = [1, 1]} : vector<9x80xf32> to vector<1x80xf32>
    %395 = arith.addf %394, %4 : vector<1x80xf32>
    %cst_82 = arith.constant 0.000000e+00 : f32
    %396 = vector.broadcast %cst_82 : f32 to vector<1x80xf32>
    %397 = arith.maximumf %395, %396 : vector<1x80xf32>
    %398 = vector.extract_strided_slice %389 {offsets = [4, 0], sizes = [1, 80], strides = [1, 1]} : vector<9x80xf32> to vector<1x80xf32>
    %399 = arith.addf %398, %4 : vector<1x80xf32>
    %cst_83 = arith.constant 0.000000e+00 : f32
    %400 = vector.broadcast %cst_83 : f32 to vector<1x80xf32>
    %401 = arith.maximumf %399, %400 : vector<1x80xf32>
    %402 = vector.extract_strided_slice %389 {offsets = [6, 0], sizes = [1, 80], strides = [1, 1]} : vector<9x80xf32> to vector<1x80xf32>
    %403 = arith.addf %402, %4 : vector<1x80xf32>
    %cst_84 = arith.constant 0.000000e+00 : f32
    %404 = vector.broadcast %cst_84 : f32 to vector<1x80xf32>
    %405 = arith.maximumf %403, %404 : vector<1x80xf32>
    %406 = vector.extract_strided_slice %389 {offsets = [8, 0], sizes = [1, 80], strides = [1, 1]} : vector<9x80xf32> to vector<1x80xf32>
    %407 = arith.addf %406, %4 : vector<1x80xf32>
    %cst_85 = arith.constant 0.000000e+00 : f32
    %408 = vector.broadcast %cst_85 : f32 to vector<1x80xf32>
    %409 = arith.maximumf %407, %408 : vector<1x80xf32>
    %410 = tpu.concatenate %393, %397, %401, %405, %409 in 1 : vector<1x80xf32>, vector<1x80xf32>, vector<1x80xf32>, vector<1x80xf32>, vector<1x80xf32> -> vector<1x400xf32>
    %c7 = arith.constant 7 : index
    %c0_86 = arith.constant 0 : index
    %c0_87 = arith.constant 0 : index
    %411 = vector.load %arg1[%c7, %c0_86, %c0_87] : memref<8x32x32xbf16, #tpu.memory_space<vmem>>, vector<1x32x32xbf16>
    %412 = vector.shape_cast %411 : vector<1x32x32xbf16> to vector<32x32xbf16>
    %413 = arith.extf %412 : vector<32x32xbf16> to vector<32x32xf32>
    %414 = vector.extract_strided_slice %413 {offsets = [0, 0], sizes = [28, 32], strides = [1, 1]} : vector<32x32xf32> to vector<28x32xf32>
    %415 = vector.extract_strided_slice %413 {offsets = [1, 0], sizes = [28, 32], strides = [1, 1]} : vector<32x32xf32> to vector<28x32xf32>
    %416 = vector.extract_strided_slice %413 {offsets = [2, 0], sizes = [28, 32], strides = [1, 1]} : vector<32x32xf32> to vector<28x32xf32>
    %417 = vector.extract_strided_slice %413 {offsets = [3, 0], sizes = [28, 32], strides = [1, 1]} : vector<32x32xf32> to vector<28x32xf32>
    %418 = vector.extract_strided_slice %413 {offsets = [4, 0], sizes = [28, 32], strides = [1, 1]} : vector<32x32xf32> to vector<28x32xf32>
    %419 = tpu.concatenate %414, %415, %416, %417, %418 in 1 : vector<28x32xf32>, vector<28x32xf32>, vector<28x32xf32>, vector<28x32xf32>, vector<28x32xf32> -> vector<28x160xf32>
    %420 = arith.truncf %419 : vector<28x160xf32> to vector<28x160xbf16>
    %cst_88 = arith.constant dense<0.000000e+00> : vector<28x256xf32>
    %421 = tpu.matmul %420, %0, %cst_88 {dimension_numbers = #tpu.dot_dimension_numbers<[1], [0], [0], [1], [0, 0, 1, 1], [], []>} : vector<28x160xbf16>, vector<160x256xbf16>, vector<28x256xf32> -> vector<28x256xf32>
    %422 = vector.extract_strided_slice %421 {offsets = [0, 0], sizes = [28, 84], strides = [1, 1]} : vector<28x256xf32> to vector<28x84xf32>
    %423 = vector.extract_strided_slice %421 {offsets = [0, 128], sizes = [28, 84], strides = [1, 1]} : vector<28x256xf32> to vector<28x84xf32>
    %424 = arith.maximumf %422, %423 : vector<28x84xf32>
    %425 = vector.extract_strided_slice %424 {offsets = [0, 0], sizes = [27, 84], strides = [1, 1]} : vector<28x84xf32> to vector<27x84xf32>
    %426 = vector.extract_strided_slice %424 {offsets = [1, 0], sizes = [27, 84], strides = [1, 1]} : vector<28x84xf32> to vector<27x84xf32>
    %427 = arith.maximumf %425, %426 : vector<27x84xf32>
    %428 = vector.broadcast %3 : vector<1x84xf32> to vector<27x84xf32>
    %429 = arith.addf %427, %428 : vector<27x84xf32>
    %cst_89 = arith.constant 0.000000e+00 : f32
    %430 = vector.broadcast %cst_89 : f32 to vector<27x84xf32>
    %431 = arith.maximumf %429, %430 : vector<27x84xf32>
    %432 = arith.truncf %431 : vector<27x84xf32> to vector<27x84xbf16>
    %cst_90 = arith.constant dense<0.000000e+00> : vector<14x84xf32>
    %433 = tpu.matmul %2, %432, %cst_90 {dimension_numbers = #tpu.dot_dimension_numbers<[1], [0], [0], [1], [0, 0, 1, 1], [], []>} : vector<14x27xbf16>, vector<27x84xbf16>, vector<14x84xf32> -> vector<14x84xf32>
    %434 = vector.extract_strided_slice %433 {offsets = [0, 0], sizes = [10, 84], strides = [1, 1]} : vector<14x84xf32> to vector<10x84xf32>
    %435 = vector.extract_strided_slice %433 {offsets = [1, 0], sizes = [10, 84], strides = [1, 1]} : vector<14x84xf32> to vector<10x84xf32>
    %436 = vector.extract_strided_slice %433 {offsets = [2, 0], sizes = [10, 84], strides = [1, 1]} : vector<14x84xf32> to vector<10x84xf32>
    %437 = vector.extract_strided_slice %433 {offsets = [3, 0], sizes = [10, 84], strides = [1, 1]} : vector<14x84xf32> to vector<10x84xf32>
    %438 = vector.extract_strided_slice %433 {offsets = [4, 0], sizes = [10, 84], strides = [1, 1]} : vector<14x84xf32> to vector<10x84xf32>
    %439 = tpu.concatenate %434, %435, %436, %437, %438 in 1 : vector<10x84xf32>, vector<10x84xf32>, vector<10x84xf32>, vector<10x84xf32>, vector<10x84xf32> -> vector<10x420xf32>
    %440 = arith.truncf %439 : vector<10x420xf32> to vector<10x420xbf16>
    %cst_91 = arith.constant dense<0.000000e+00> : vector<10x256xf32>
    %441 = tpu.matmul %440, %1, %cst_91 {dimension_numbers = #tpu.dot_dimension_numbers<[1], [0], [0], [1], [0, 0, 1, 1], [], []>} : vector<10x420xbf16>, vector<420x256xbf16>, vector<10x256xf32> -> vector<10x256xf32>
    %442 = vector.extract_strided_slice %441 {offsets = [0, 0], sizes = [10, 80], strides = [1, 1]} : vector<10x256xf32> to vector<10x80xf32>
    %443 = vector.extract_strided_slice %441 {offsets = [0, 128], sizes = [10, 80], strides = [1, 1]} : vector<10x256xf32> to vector<10x80xf32>
    %444 = arith.maximumf %442, %443 : vector<10x80xf32>
    %445 = vector.extract_strided_slice %444 {offsets = [0, 0], sizes = [9, 80], strides = [1, 1]} : vector<10x80xf32> to vector<9x80xf32>
    %446 = vector.extract_strided_slice %444 {offsets = [1, 0], sizes = [9, 80], strides = [1, 1]} : vector<10x80xf32> to vector<9x80xf32>
    %447 = arith.maximumf %445, %446 : vector<9x80xf32>
    %448 = vector.extract_strided_slice %447 {offsets = [0, 0], sizes = [1, 80], strides = [1, 1]} : vector<9x80xf32> to vector<1x80xf32>
    %449 = arith.addf %448, %4 : vector<1x80xf32>
    %cst_92 = arith.constant 0.000000e+00 : f32
    %450 = vector.broadcast %cst_92 : f32 to vector<1x80xf32>
    %451 = arith.maximumf %449, %450 : vector<1x80xf32>
    %452 = vector.extract_strided_slice %447 {offsets = [2, 0], sizes = [1, 80], strides = [1, 1]} : vector<9x80xf32> to vector<1x80xf32>
    %453 = arith.addf %452, %4 : vector<1x80xf32>
    %cst_93 = arith.constant 0.000000e+00 : f32
    %454 = vector.broadcast %cst_93 : f32 to vector<1x80xf32>
    %455 = arith.maximumf %453, %454 : vector<1x80xf32>
    %456 = vector.extract_strided_slice %447 {offsets = [4, 0], sizes = [1, 80], strides = [1, 1]} : vector<9x80xf32> to vector<1x80xf32>
    %457 = arith.addf %456, %4 : vector<1x80xf32>
    %cst_94 = arith.constant 0.000000e+00 : f32
    %458 = vector.broadcast %cst_94 : f32 to vector<1x80xf32>
    %459 = arith.maximumf %457, %458 : vector<1x80xf32>
    %460 = vector.extract_strided_slice %447 {offsets = [6, 0], sizes = [1, 80], strides = [1, 1]} : vector<9x80xf32> to vector<1x80xf32>
    %461 = arith.addf %460, %4 : vector<1x80xf32>
    %cst_95 = arith.constant 0.000000e+00 : f32
    %462 = vector.broadcast %cst_95 : f32 to vector<1x80xf32>
    %463 = arith.maximumf %461, %462 : vector<1x80xf32>
    %464 = vector.extract_strided_slice %447 {offsets = [8, 0], sizes = [1, 80], strides = [1, 1]} : vector<9x80xf32> to vector<1x80xf32>
    %465 = arith.addf %464, %4 : vector<1x80xf32>
    %cst_96 = arith.constant 0.000000e+00 : f32
    %466 = vector.broadcast %cst_96 : f32 to vector<1x80xf32>
    %467 = arith.maximumf %465, %466 : vector<1x80xf32>
    %468 = tpu.concatenate %451, %455, %459, %463, %467 in 1 : vector<1x80xf32>, vector<1x80xf32>, vector<1x80xf32>, vector<1x80xf32>, vector<1x80xf32> -> vector<1x400xf32>
    %469 = tpu.concatenate %62, %120, %178, %236, %294, %352, %410, %468 in 0 : vector<1x400xf32>, vector<1x400xf32>, vector<1x400xf32>, vector<1x400xf32>, vector<1x400xf32>, vector<1x400xf32>, vector<1x400xf32>, vector<1x400xf32> -> vector<8x400xf32>
    %470 = arith.truncf %469 : vector<8x400xf32> to vector<8x400xbf16>
    %c0_97 = arith.constant 0 : index
    %c0_98 = arith.constant 0 : index
    %471 = vector.load %arg7[%c0_97, %c0_98] : memref<400x120xbf16, #tpu.memory_space<vmem>>, vector<400x120xbf16>
    %cst_99 = arith.constant dense<0.000000e+00> : vector<8x120xf32>
    %472 = tpu.matmul %470, %471, %cst_99 {dimension_numbers = #tpu.dot_dimension_numbers<[1], [0], [0], [1], [0, 0, 1, 1], [], []>} : vector<8x400xbf16>, vector<400x120xbf16>, vector<8x120xf32> -> vector<8x120xf32>
    %c0_100 = arith.constant 0 : index
    %c0_101 = arith.constant 0 : index
    %473 = vector.load %arg8[%c0_100, %c0_101] : memref<1x120xf32, #tpu.memory_space<vmem>>, vector<1x120xf32>
    %474 = vector.broadcast %473 : vector<1x120xf32> to vector<8x120xf32>
    %475 = arith.addf %472, %474 : vector<8x120xf32>
    %cst_102 = arith.constant 0.000000e+00 : f32
    %476 = vector.broadcast %cst_102 : f32 to vector<8x120xf32>
    %477 = arith.maximumf %475, %476 : vector<8x120xf32>
    %478 = arith.truncf %477 : vector<8x120xf32> to vector<8x120xbf16>
    %c0_103 = arith.constant 0 : index
    %c0_104 = arith.constant 0 : index
    %479 = vector.load %arg9[%c0_103, %c0_104] : memref<120x84xbf16, #tpu.memory_space<vmem>>, vector<120x84xbf16>
    %cst_105 = arith.constant dense<0.000000e+00> : vector<8x84xf32>
    %480 = tpu.matmul %478, %479, %cst_105 {dimension_numbers = #tpu.dot_dimension_numbers<[1], [0], [0], [1], [0, 0, 1, 1], [], []>} : vector<8x120xbf16>, vector<120x84xbf16>, vector<8x84xf32> -> vector<8x84xf32>
    %c0_106 = arith.constant 0 : index
    %c0_107 = arith.constant 0 : index
    %481 = vector.load %arg10[%c0_106, %c0_107] : memref<1x84xf32, #tpu.memory_space<vmem>>, vector<1x84xf32>
    %482 = vector.broadcast %481 : vector<1x84xf32> to vector<8x84xf32>
    %483 = arith.addf %480, %482 : vector<8x84xf32>
    %cst_108 = arith.constant 0.000000e+00 : f32
    %484 = vector.broadcast %cst_108 : f32 to vector<8x84xf32>
    %485 = arith.maximumf %483, %484 : vector<8x84xf32>
    %486 = arith.truncf %485 : vector<8x84xf32> to vector<8x84xbf16>
    %c0_109 = arith.constant 0 : index
    %c0_110 = arith.constant 0 : index
    %487 = vector.load %arg11[%c0_109, %c0_110] : memref<84x128xbf16, #tpu.memory_space<vmem>>, vector<84x128xbf16>
    %cst_111 = arith.constant dense<0.000000e+00> : vector<8x128xf32>
    %488 = tpu.matmul %486, %487, %cst_111 {dimension_numbers = #tpu.dot_dimension_numbers<[1], [0], [0], [1], [0, 0, 1, 1], [], []>} : vector<8x84xbf16>, vector<84x128xbf16>, vector<8x128xf32> -> vector<8x128xf32>
    %c0_112 = arith.constant 0 : index
    %c0_113 = arith.constant 0 : index
    %489 = vector.load %arg12[%c0_112, %c0_113] : memref<1x128xf32, #tpu.memory_space<vmem>>, vector<1x128xf32>
    %490 = vector.broadcast %489 : vector<1x128xf32> to vector<8x128xf32>
    %491 = arith.addf %488, %490 : vector<8x128xf32>
    %c0_114 = arith.constant 0 : index
    %c0_115 = arith.constant 0 : index
    %492 = vector.load %arg13[%c0_114, %c0_115] : memref<8x128xf32, #tpu.memory_space<vmem>>, vector<8x128xf32>
    tpu.vector_store %arg13[%c0_114, %c0_115], %491 {strides = array<i32>} : memref<8x128xf32, #tpu.memory_space<vmem>>, vector<8x128xf32>,
    return
  }
  func.func @transform_0(%arg0: i32) -> (i32, i32, i32) {
    %c0_i32 = arith.constant 0 : i32
    %c0_i32_0 = arith.constant 0 : i32
    %c0_i32_1 = arith.constant 0 : i32
    return %arg0, %c0_i32, %c0_i32_0 : i32, i32, i32
  }
  func.func @transform_1(%arg0: i32) -> (i32, i32) {
    %c0_i32 = arith.constant 0 : i32
    %c0_i32_0 = arith.constant 0 : i32
    %c0_i32_1 = arith.constant 0 : i32
    return %c0_i32, %c0_i32_0 : i32, i32
  }
  func.func @transform_2(%arg0: i32) -> (i32, i32) {
    %c0_i32 = arith.constant 0 : i32
    %c0_i32_0 = arith.constant 0 : i32
    %c0_i32_1 = arith.constant 0 : i32
    return %c0_i32, %c0_i32_0 : i32, i32
  }
  func.func @transform_3(%arg0: i32) -> (i32, i32) {
    %c0_i32 = arith.constant 0 : i32
    %c0_i32_0 = arith.constant 0 : i32
    %c0_i32_1 = arith.constant 0 : i32
    return %c0_i32, %c0_i32_0 : i32, i32
  }
  func.func @transform_4(%arg0: i32) -> (i32, i32) {
    %c0_i32 = arith.constant 0 : i32
    %c0_i32_0 = arith.constant 0 : i32
    %c0_i32_1 = arith.constant 0 : i32
    return %c0_i32, %c0_i32_0 : i32, i32
  }
  func.func @transform_5(%arg0: i32) -> (i32, i32) {
    %c0_i32 = arith.constant 0 : i32
    %c0_i32_0 = arith.constant 0 : i32
    %c0_i32_1 = arith.constant 0 : i32
    return %c0_i32, %c0_i32_0 : i32, i32
  }
  func.func @transform_6(%arg0: i32) -> (i32, i32) {
    %c0_i32 = arith.constant 0 : i32
    %c0_i32_0 = arith.constant 0 : i32
    %c0_i32_1 = arith.constant 0 : i32
    return %c0_i32, %c0_i32_0 : i32, i32
  }
  func.func @transform_7(%arg0: i32) -> (i32, i32) {
    %c0_i32 = arith.constant 0 : i32
    %c0_i32_0 = arith.constant 0 : i32
    %c0_i32_1 = arith.constant 0 : i32
    return %c0_i32, %c0_i32_0 : i32, i32
  }
  func.func @transform_8(%arg0: i32) -> (i32, i32) {
    %c0_i32 = arith.constant 0 : i32
    %c0_i32_0 = arith.constant 0 : i32
    %c0_i32_1 = arith.constant 0 : i32
    return %c0_i32, %c0_i32_0 : i32, i32
  }
  func.func @transform_9(%arg0: i32) -> (i32, i32) {
    %c0_i32 = arith.constant 0 : i32
    %c0_i32_0 = arith.constant 0 : i32
    %c0_i32_1 = arith.constant 0 : i32
    return %c0_i32, %c0_i32_0 : i32, i32
  }
  func.func @transform_10(%arg0: i32) -> (i32, i32) {
    %c0_i32 = arith.constant 0 : i32
    %c0_i32_0 = arith.constant 0 : i32
    %c0_i32_1 = arith.constant 0 : i32
    return %c0_i32, %c0_i32_0 : i32, i32
  }
  func.func @transform_11(%arg0: i32) -> (i32, i32) {
    %c0_i32 = arith.constant 0 : i32
    %c0_i32_0 = arith.constant 0 : i32
    %c0_i32_1 = arith.constant 0 : i32
    return %c0_i32, %c0_i32_0 : i32, i32
  }
  func.func @transform_12(%arg0: i32) -> (i32, i32) {
    %c0_i32 = arith.constant 0 : i32
    %c0_i32_0 = arith.constant 0 : i32
    return %arg0, %c0_i32 : i32, i32
  }
}

</mosaic_0001>

<llo_original>
// kernel: simple_conv_forward.1
$region0: #{simple_conv_forward.1}
  #allocation0 [shape = 'u32[]', space=smem, size = 0x4, offset = 0x4, fixed_abs, tag = 'smem constant byte address 0x4 - core index']
  #allocation1 [shape = 'u32[144,128]{1,0:T(1,128)}', space=vmem, size = 0x12000, scoped, tag = 'internal scratch']
  %s0 = inlined_call_operand.vmem [shape: bf16[16,32,32], index: 0, kind: input, shape index: {}]
  %s1 = inlined_call_operand.vmem [shape: bf16[160,256], index: 1, kind: input, shape index: {}]
  %s2 = inlined_call_operand.vmem [shape: f32[1,84], index: 2, kind: input, shape index: {}]
  %s3 = inlined_call_operand.vmem [shape: bf16[14,27], index: 3, kind: input, shape index: {}]
  %s4 = inlined_call_operand.vmem [shape: bf16[420,256], index: 4, kind: input, shape index: {}]
  %s5 = inlined_call_operand.vmem [shape: f32[1,80], index: 5, kind: input, shape index: {}]
  %s6 = inlined_call_operand.vmem [shape: bf16[400,120], index: 6, kind: input, shape index: {}]
  %s7 = inlined_call_operand.vmem [shape: f32[1,120], index: 7, kind: input, shape index: {}]
  %s8 = inlined_call_operand.vmem [shape: bf16[120,84], index: 8, kind: input, shape index: {}]
  %s9 = inlined_call_operand.vmem [shape: f32[1,84], index: 9, kind: input, shape index: {}]
  %s10 = inlined_call_operand.vmem [shape: bf16[84,128], index: 10, kind: input, shape index: {}]
  %s11 = inlined_call_operand.vmem [shape: f32[1,128], index: 11, kind: input, shape index: {}]
  %s12 = inlined_call_operand.hbm [shape: f32[16,128], index: 12, kind: output, shape index: {}]
  %s13 = sld [smem:[#allocation0]]
  $region81: #{simple_conv_forward.1} parent=0
    _
  %s15 = ssub.s32 1, %s13
  %s16 = scalar_select 0, %s15, %s13
  $region1: #{simple_conv_forward.1} parent=0
    #allocation2 [shape = 'u8[8192]{0}', space=vmem, size = 0x2000, scoped, tag = 'output window, operand 0']
    #allocation3 [shape = 's32[2]{0}', space=sflag, size = 0x8, scoped, tag = 'scoped memory for simple_conv_forward.1']
    %17 = vsyncpa [#allocation3], 0
    %s18 = scalar_lea.sflag [#allocation3], 1
    %19 = vsyncpa %s18, 0
    loop: start=0, step=1, limit=4
    $region2: #{simple_conv_forward.1} parent=1 // loop_pre_header
      _
    $region3: #{simple_conv_forward.1} parent=1 // loop_header
      %s21 = sphi 0, %s25
      %p22 = scmp.ge.s32.totalorder %s21, 4
      %s31 = sphi 0, %s33
      %s34 = sphi 0, %s31
      %s35 = sphi 0, %s34
      %s51 = sphi 0, %s35
      %s55 = sphi 0, %s55
      %s57 = sphi 0, %s55
      %s58 = sphi 0, %s57
      %s72 = sphi 0, %s58
      %s76 = sphi 0, %s76
      %s78 = sphi 0, %s76
      %s79 = sphi 0, %s78
      %s93 = sphi 0, %s79
      %s97 = sphi 0, %s97
      %s99 = sphi 0, %s97
      %s100 = sphi 0, %s99
      %s114 = sphi 0, %s100
      %s118 = sphi 0, %s118
      %s120 = sphi 0, %s118
      %s121 = sphi 0, %s120
      %s135 = sphi 0, %s121
      %s139 = sphi 0, %s139
      %s141 = sphi 0, %s139
      %s142 = sphi 0, %s141
      %s156 = sphi 0, %s142
      %s160 = sphi 0, %s160
      %s162 = sphi 0, %s160
      %s163 = sphi 0, %s162
      %s177 = sphi 0, %s163
      %s181 = sphi 0, %s181
      %s183 = sphi 0, %s181
      %s184 = sphi 0, %s183
      %s198 = sphi 0, %s184
      %s202 = sphi 0, %s202
      %s204 = sphi 0, %s202
      %s205 = sphi 0, %s204
      %s219 = sphi 0, %s205
      %s223 = sphi 0, %s223
      %s225 = sphi 0, %s223
      %s226 = sphi 0, %s225
      %s240 = sphi 0, %s226
      %s244 = sphi 0, %s244
      %s246 = sphi 0, %s244
      %s247 = sphi 0, %s246
      %s261 = sphi 0, %s247
      %s265 = sphi 0, %s265
      %s267 = sphi 0, %s265
      %s268 = sphi 0, %s267
      %s282 = sphi 0, %s268
      %s288 = sphi 0, %s290
      %s291 = sphi 0, %s288
      %s292 = sphi 0, %s291
      %s308 = sphi 0, %s292
    $region4: #{simple_conv_forward.1} parent=1 // loop_header_branch
      %24 = sbr.rel (%p22) target = $region8
    $region5: #{simple_conv_forward.1} parent=1 // loop_body
      %s26 = ssub.s32 %s21, 1
      %s27 = ssub.s32 %s21, 2
      %s28 = sadd.s32 %s21, 1
      %s29 = ssub.s32 %s21, %s28
      %p30 = scmp.eq.s32.totalorder %s29, 0
      %s32 = sadd.s32 %s31, 1
      %s33 = scalar_select %p30, %s31, %s32
      %p36 = pneg %p30
      %p37 = scmp.eq.s32.totalorder %s21, 1
      %p38 = por %p36, %p37
      %p39 = scmp.ne.s32.totalorder %s31, %s34
      %p40 = scmp.eq.s32.totalorder %s21, 0
      %p41 = por %p39, %p40
      %p42 = scmp.ne.s32.totalorder %s31, %s34
      %p43 = scmp.eq.s32.totalorder %s26, 1
      %p44 = por %p42, %p43
      %p45 = scmp.ne.s32.totalorder %s34, %s35
      %p46 = scmp.eq.s32.totalorder %s26, 0
      %p47 = por %p45, %p46
      %p48 = scmp.ne.s32.totalorder %s34, %s35
      %p49 = scmp.eq.s32.totalorder %s27, 1
      %p50 = por %p48, %p49
      %p52 = scmp.ne.s32.totalorder %s35, %s51
      %p53 = scmp.eq.s32.totalorder %s27, 0
      %p54 = por %p52, %p53
      %s56 = sadd.s32 %s55, 1
      %p59 = scmp.eq.s32.totalorder %s21, 1
      %p60 = scmp.ne.s32.totalorder %s55, %s57
      %p61 = scmp.eq.s32.totalorder %s21, 0
      %p62 = por %p60, %p61
      %p63 = scmp.ne.s32.totalorder %s55, %s57
      %p64 = scmp.eq.s32.totalorder %s26, 1
      %p65 = por %p63, %p64
      %p66 = scmp.ne.s32.totalorder %s57, %s58
      %p67 = scmp.eq.s32.totalorder %s26, 0
      %p68 = por %p66, %p67
      %p69 = scmp.ne.s32.totalorder %s57, %s58
      %p70 = scmp.eq.s32.totalorder %s27, 1
      %p71 = por %p69, %p70
      %p73 = scmp.ne.s32.totalorder %s58, %s72
      %p74 = scmp.eq.s32.totalorder %s27, 0
      %p75 = por %p73, %p74
      %s77 = sadd.s32 %s76, 1
      %p80 = scmp.eq.s32.totalorder %s21, 1
      %p81 = scmp.ne.s32.totalorder %s76, %s78
      %p82 = scmp.eq.s32.totalorder %s21, 0
      %p83 = por %p81, %p82
      %p84 = scmp.ne.s32.totalorder %s76, %s78
      %p85 = scmp.eq.s32.totalorder %s26, 1
      %p86 = por %p84, %p85
      %p87 = scmp.ne.s32.totalorder %s78, %s79
      %p88 = scmp.eq.s32.totalorder %s26, 0
      %p89 = por %p87, %p88
      %p90 = scmp.ne.s32.totalorder %s78, %s79
      %p91 = scmp.eq.s32.totalorder %s27, 1
      %p92 = por %p90, %p91
      %p94 = scmp.ne.s32.totalorder %s79, %s93
      %p95 = scmp.eq.s32.totalorder %s27, 0
      %p96 = por %p94, %p95
      %s98 = sadd.s32 %s97, 1
      %p101 = scmp.eq.s32.totalorder %s21, 1
      %p102 = scmp.ne.s32.totalorder %s97, %s99
      %p103 = scmp.eq.s32.totalorder %s21, 0
      %p104 = por %p102, %p103
      %p105 = scmp.ne.s32.totalorder %s97, %s99
      %p106 = scmp.eq.s32.totalorder %s26, 1
      %p107 = por %p105, %p106
      %p108 = scmp.ne.s32.totalorder %s99, %s100
      %p109 = scmp.eq.s32.totalorder %s26, 0
      %p110 = por %p108, %p109
      %p111 = scmp.ne.s32.totalorder %s99, %s100
      %p112 = scmp.eq.s32.totalorder %s27, 1
      %p113 = por %p111, %p112
      %p115 = scmp.ne.s32.totalorder %s100, %s114
      %p116 = scmp.eq.s32.totalorder %s27, 0
      %p117 = por %p115, %p116
      %s119 = sadd.s32 %s118, 1
      %p122 = scmp.eq.s32.totalorder %s21, 1
      %p123 = scmp.ne.s32.totalorder %s118, %s120
      %p124 = scmp.eq.s32.totalorder %s21, 0
      %p125 = por %p123, %p124
      %p126 = scmp.ne.s32.totalorder %s118, %s120
      %p127 = scmp.eq.s32.totalorder %s26, 1
      %p128 = por %p126, %p127
      %p129 = scmp.ne.s32.totalorder %s120, %s121
      %p130 = scmp.eq.s32.totalorder %s26, 0
      %p131 = por %p129, %p130
      %p132 = scmp.ne.s32.totalorder %s120, %s121
      %p133 = scmp.eq.s32.totalorder %s27, 1
      %p134 = por %p132, %p133
      %p136 = scmp.ne.s32.totalorder %s121, %s135
      %p137 = scmp.eq.s32.totalorder %s27, 0
      %p138 = por %p136, %p137
      %s140 = sadd.s32 %s139, 1
      %p143 = scmp.eq.s32.totalorder %s21, 1
      %p144 = scmp.ne.s32.totalorder %s139, %s141
      %p145 = scmp.eq.s32.totalorder %s21, 0
      %p146 = por %p144, %p145
      %p147 = scmp.ne.s32.totalorder %s139, %s141
      %p148 = scmp.eq.s32.totalorder %s26, 1
      %p149 = por %p147, %p148
      %p150 = scmp.ne.s32.totalorder %s141, %s142
      %p151 = scmp.eq.s32.totalorder %s26, 0
      %p152 = por %p150, %p151
      %p153 = scmp.ne.s32.totalorder %s141, %s142
      %p154 = scmp.eq.s32.totalorder %s27, 1
      %p155 = por %p153, %p154
      %p157 = scmp.ne.s32.totalorder %s142, %s156
      %p158 = scmp.eq.s32.totalorder %s27, 0
      %p159 = por %p157, %p158
      %s161 = sadd.s32 %s160, 1
      %p164 = scmp.eq.s32.totalorder %s21, 1
      %p165 = scmp.ne.s32.totalorder %s160, %s162
      %p166 = scmp.eq.s32.totalorder %s21, 0
      %p167 = por %p165, %p166
      %p168 = scmp.ne.s32.totalorder %s160, %s162
      %p169 = scmp.eq.s32.totalorder %s26, 1
      %p170 = por %p168, %p169
      %p171 = scmp.ne.s32.totalorder %s162, %s163
      %p172 = scmp.eq.s32.totalorder %s26, 0
      %p173 = por %p171, %p172
      %p174 = scmp.ne.s32.totalorder %s162, %s163
      %p175 = scmp.eq.s32.totalorder %s27, 1
      %p176 = por %p174, %p175
      %p178 = scmp.ne.s32.totalorder %s163, %s177
      %p179 = scmp.eq.s32.totalorder %s27, 0
      %p180 = por %p178, %p179
      %s182 = sadd.s32 %s181, 1
      %p185 = scmp.eq.s32.totalorder %s21, 1
      %p186 = scmp.ne.s32.totalorder %s181, %s183
      %p187 = scmp.eq.s32.totalorder %s21, 0
      %p188 = por %p186, %p187
      %p189 = scmp.ne.s32.totalorder %s181, %s183
      %p190 = scmp.eq.s32.totalorder %s26, 1
      %p191 = por %p189, %p190
      %p192 = scmp.ne.s32.totalorder %s183, %s184
      %p193 = scmp.eq.s32.totalorder %s26, 0
      %p194 = por %p192, %p193
      %p195 = scmp.ne.s32.totalorder %s183, %s184
      %p196 = scmp.eq.s32.totalorder %s27, 1
      %p197 = por %p195, %p196
      %p199 = scmp.ne.s32.totalorder %s184, %s198
      %p200 = scmp.eq.s32.totalorder %s27, 0
      %p201 = por %p199, %p200
      %s203 = sadd.s32 %s202, 1
      %p206 = scmp.eq.s32.totalorder %s21, 1
      %p207 = scmp.ne.s32.totalorder %s202, %s204
      %p208 = scmp.eq.s32.totalorder %s21, 0
      %p209 = por %p207, %p208
      %p210 = scmp.ne.s32.totalorder %s202, %s204
      %p211 = scmp.eq.s32.totalorder %s26, 1
      %p212 = por %p210, %p211
      %p213 = scmp.ne.s32.totalorder %s204, %s205
      %p214 = scmp.eq.s32.totalorder %s26, 0
      %p215 = por %p213, %p214
      %p216 = scmp.ne.s32.totalorder %s204, %s205
      %p217 = scmp.eq.s32.totalorder %s27, 1
      %p218 = por %p216, %p217
      %p220 = scmp.ne.s32.totalorder %s205, %s219
      %p221 = scmp.eq.s32.totalorder %s27, 0
      %p222 = por %p220, %p221
      %s224 = sadd.s32 %s223, 1
      %p227 = scmp.eq.s32.totalorder %s21, 1
      %p228 = scmp.ne.s32.totalorder %s223, %s225
      %p229 = scmp.eq.s32.totalorder %s21, 0
      %p230 = por %p228, %p229
      %p231 = scmp.ne.s32.totalorder %s223, %s225
      %p232 = scmp.eq.s32.totalorder %s26, 1
      %p233 = por %p231, %p232
      %p234 = scmp.ne.s32.totalorder %s225, %s226
      %p235 = scmp.eq.s32.totalorder %s26, 0
      %p236 = por %p234, %p235
      %p237 = scmp.ne.s32.totalorder %s225, %s226
      %p238 = scmp.eq.s32.totalorder %s27, 1
      %p239 = por %p237, %p238
      %p241 = scmp.ne.s32.totalorder %s226, %s240
      %p242 = scmp.eq.s32.totalorder %s27, 0
      %p243 = por %p241, %p242
      %s245 = sadd.s32 %s244, 1
      %p248 = scmp.eq.s32.totalorder %s21, 1
      %p249 = scmp.ne.s32.totalorder %s244, %s246
      %p250 = scmp.eq.s32.totalorder %s21, 0
      %p251 = por %p249, %p250
      %p252 = scmp.ne.s32.totalorder %s244, %s246
      %p253 = scmp.eq.s32.totalorder %s26, 1
      %p254 = por %p252, %p253
      %p255 = scmp.ne.s32.totalorder %s246, %s247
      %p256 = scmp.eq.s32.totalorder %s26, 0
      %p257 = por %p255, %p256
      %p258 = scmp.ne.s32.totalorder %s246, %s247
      %p259 = scmp.eq.s32.totalorder %s27, 1
      %p260 = por %p258, %p259
      %p262 = scmp.ne.s32.totalorder %s247, %s261
      %p263 = scmp.eq.s32.totalorder %s27, 0
      %p264 = por %p262, %p263
      %s266 = sadd.s32 %s265, 1
      %p269 = scmp.eq.s32.totalorder %s21, 1
      %p270 = scmp.ne.s32.totalorder %s265, %s267
      %p271 = scmp.eq.s32.totalorder %s21, 0
      %p272 = por %p270, %p271
      %p273 = scmp.ne.s32.totalorder %s265, %s267
      %p274 = scmp.eq.s32.totalorder %s26, 1
      %p275 = por %p273, %p274
      %p276 = scmp.ne.s32.totalorder %s267, %s268
      %p277 = scmp.eq.s32.totalorder %s26, 0
      %p278 = por %p276, %p277
      %p279 = scmp.ne.s32.totalorder %s267, %s268
      %p280 = scmp.eq.s32.totalorder %s27, 1
      %p281 = por %p279, %p280
      %p283 = scmp.ne.s32.totalorder %s268, %s282
      %p284 = scmp.eq.s32.totalorder %s27, 0
      %p285 = por %p283, %p284
      %s286 = ssub.s32 %s21, %s28
      %p287 = scmp.eq.s32.totalorder %s286, 0
      %s289 = sadd.s32 %s288, 1
      %s290 = scalar_select %p287, %s288, %s289
      %p293 = pneg %p287
      %p294 = scmp.eq.s32.totalorder %s21, 1
      %p295 = por %p293, %p294
      %p296 = scmp.ne.s32.totalorder %s288, %s291
      %p297 = scmp.eq.s32.totalorder %s21, 0
      %p298 = por %p296, %p297
      %p299 = scmp.ne.s32.totalorder %s288, %s291
      %p300 = scmp.eq.s32.totalorder %s26, 1
      %p301 = por %p299, %p300
      %p302 = scmp.ne.s32.totalorder %s291, %s292
      %p303 = scmp.eq.s32.totalorder %s26, 0
      %p304 = por %p302, %p303
      %p305 = scmp.ne.s32.totalorder %s291, %s292
      %p306 = scmp.eq.s32.totalorder %s27, 1
      %p307 = por %p305, %p306
      %p309 = scmp.ne.s32.totalorder %s292, %s308
      %p310 = scmp.eq.s32.totalorder %s27, 0
      %p311 = por %p309, %p310
      %p312 = scmp.le.s32.totalorder 1, %s21
      %p313 = scmp.lt.s32.totalorder %s21, 3
      %p314 = pnand %p312, %p313
      %p315 = pneg %p314
      // Predicated region
      $region9: #{simple_conv_forward.1} parent=5 // pred_check
        _
      $region10: #{simple_conv_forward.1} parent=5 // pred_check_branch
        %317 = sbr.rel (%p314) target = $region12
      $region11: #{simple_conv_forward.1} parent=5 // pred_region
        %s318 = ssub.s32 %s21, 1
        // Predicated region
        $region13: #{simple_conv_forward.1} parent=11 // pred_check
          %p319 = pneg %p68
        $region14: #{simple_conv_forward.1} parent=11 // pred_check_branch
          %321 = sbr.rel (%p319) target = $region16
        $region15: #{simple_conv_forward.1} parent=11 // pred_region
          _
        $region16: #{simple_conv_forward.1} parent=11 // pred_fallthru
          _
        // Predicated region
        $region17: #{simple_conv_forward.1} parent=11 // pred_check
          %p322 = pneg %p89
        $region18: #{simple_conv_forward.1} parent=11 // pred_check_branch
          %324 = sbr.rel (%p322) target = $region20
        $region19: #{simple_conv_forward.1} parent=11 // pred_region
          _
        $region20: #{simple_conv_forward.1} parent=11 // pred_fallthru
          _
        // Predicated region
        $region21: #{simple_conv_forward.1} parent=11 // pred_check
          %p325 = pneg %p110
        $region22: #{simple_conv_forward.1} parent=11 // pred_check_branch
          %327 = sbr.rel (%p325) target = $region24
        $region23: #{simple_conv_forward.1} parent=11 // pred_region
          _
        $region24: #{simple_conv_forward.1} parent=11 // pred_fallthru
          _
        // Predicated region
        $region25: #{simple_conv_forward.1} parent=11 // pred_check
          %p328 = pneg %p131
        $region26: #{simple_conv_forward.1} parent=11 // pred_check_branch
          %330 = sbr.rel (%p328) target = $region28
        $region27: #{simple_conv_forward.1} parent=11 // pred_region
          _
        $region28: #{simple_conv_forward.1} parent=11 // pred_fallthru
          _
        // Predicated region
        $region29: #{simple_conv_forward.1} parent=11 // pred_check
          %p331 = pneg %p152
        $region30: #{simple_conv_forward.1} parent=11 // pred_check_branch
          %333 = sbr.rel (%p331) target = $region32
        $region31: #{simple_conv_forward.1} parent=11 // pred_region
          _
        $region32: #{simple_conv_forward.1} parent=11 // pred_fallthru
          _
        // Predicated region
        $region33: #{simple_conv_forward.1} parent=11 // pred_check
          %p334 = pneg %p173
        $region34: #{simple_conv_forward.1} parent=11 // pred_check_branch
          %336 = sbr.rel (%p334) target = $region36
        $region35: #{simple_conv_forward.1} parent=11 // pred_region
          _
        $region36: #{simple_conv_forward.1} parent=11 // pred_fallthru
          _
        // Predicated region
        $region37: #{simple_conv_forward.1} parent=11 // pred_check
          %p337 = pneg %p194
        $region38: #{simple_conv_forward.1} parent=11 // pred_check_branch
          %339 = sbr.rel (%p337) target = $region40
        $region39: #{simple_conv_forward.1} parent=11 // pred_region
          _
        $region40: #{simple_conv_forward.1} parent=11 // pred_fallthru
          _
        // Predicated region
        $region41: #{simple_conv_forward.1} parent=11 // pred_check
          %p340 = pneg %p215
        $region42: #{simple_conv_forward.1} parent=11 // pred_check_branch
          %342 = sbr.rel (%p340) target = $region44
        $region43: #{simple_conv_forward.1} parent=11 // pred_region
          _
        $region44: #{simple_conv_forward.1} parent=11 // pred_fallthru
          _
        // Predicated region
        $region45: #{simple_conv_forward.1} parent=11 // pred_check
          %p343 = pneg %p236
        $region46: #{simple_conv_forward.1} parent=11 // pred_check_branch
          %345 = sbr.rel (%p343) target = $region48
        $region47: #{simple_conv_forward.1} parent=11 // pred_region
          _
        $region48: #{simple_conv_forward.1} parent=11 // pred_fallthru
          _
        // Predicated region
        $region49: #{simple_conv_forward.1} parent=11 // pred_check
          %p346 = pneg %p257
        $region50: #{simple_conv_forward.1} parent=11 // pred_check_branch
          %348 = sbr.rel (%p346) target = $region52
        $region51: #{simple_conv_forward.1} parent=11 // pred_region
          _
        $region52: #{simple_conv_forward.1} parent=11 // pred_fallthru
          _
        // Predicated region
        $region53: #{simple_conv_forward.1} parent=11 // pred_check
          %p349 = pneg %p278
        $region54: #{simple_conv_forward.1} parent=11 // pred_check_branch
          %351 = sbr.rel (%p349) target = $region56
        $region55: #{simple_conv_forward.1} parent=11 // pred_region
          _
        $region56: #{simple_conv_forward.1} parent=11 // pred_fallthru
          _
      $region12: #{simple_conv_forward.1} parent=5 // pred_fallthru
        _
      %p352 = scmp.lt.s32.totalorder %s21, 2
      // Predicated region
      $region57: #{simple_conv_forward.1} parent=5 // pred_check
        %p353 = pneg %p352
      $region58: #{simple_conv_forward.1} parent=5 // pred_check_branch
        %355 = sbr.rel (%p353) target = $region60
      $region59: #{simple_conv_forward.1} parent=5 // pred_region
        // Predicated region
        $region61: #{simple_conv_forward.1} parent=59 // pred_check
          %p356 = pneg %p41
        $region62: #{simple_conv_forward.1} parent=59 // pred_check_branch
          %358 = sbr.rel (%p356) target = $region64
        $region63: #{simple_conv_forward.1} parent=59 // pred_region
          %s359 = smul.u32 8, %s21
          %p360 = scmp.lt.s32.totalorder %s359, 15
          %s361 = scalar_select %p360, %s359, 15
          %s362 = smul.addr %s361, 4
          %s363 = smul.addr %s362, 4
          %s364 = scalar_lea.vmem %s0, %s363
          %s365 = smul.u32 8, %s21
        $region64: #{simple_conv_forward.1} parent=59 // pred_fallthru
          _
      $region60: #{simple_conv_forward.1} parent=5 // pred_fallthru
        _
      %p366 = scmp.le.s32.totalorder 1, %s21
      %p367 = scmp.lt.s32.totalorder %s21, 3
      %p368 = pnand %p366, %p367
      %p369 = pneg %p368
      // Predicated region
      $region65: #{simple_conv_forward.1} parent=5 // pred_check
        _
      $region66: #{simple_conv_forward.1} parent=5 // pred_check_branch
        %371 = sbr.rel (%p368) target = $region68
      $region67: #{simple_conv_forward.1} parent=5 // pred_region
        %s372 = ssub.s32 %s21, 1
        %s373 = smul.u32 8, %s26
        %p374 = scmp.lt.s32.totalorder %s373, 15
        %s375 = scalar_select %p374, %s373, 15
        %s376 = smul.addr %s375, 4
        %s377 = smul.addr %s376, 4
        %s378 = scalar_lea.vmem %s0, %s377
        %p379 = pneg %p47
        %p380 = pneg %p44
        %p381 = pneg %p68
        %p382 = pneg %p65
        %p383 = pneg %p89
        %p384 = pneg %p86
        %p385 = pneg %p110
        %p386 = pneg %p107
        %p387 = pneg %p131
        %p388 = pneg %p128
        %p389 = pneg %p152
        %p390 = pneg %p149
        %p391 = pneg %p173
        %p392 = pneg %p170
        %p393 = pneg %p194
        %p394 = pneg %p191
        %p395 = pneg %p215
        %p396 = pneg %p212
        %p397 = pneg %p236
        %p398 = pneg %p233
        %p399 = pneg %p257
        %p400 = pneg %p254
        %p401 = pneg %p278
        %p402 = pneg %p275
        %p403 = pneg %p304
        %p404 = pneg %p301
        %s405 = sand.u32 %s291, 1
        %s406 = scalar_lea.sflag [#allocation3], %s405
        %s407 = sand.u32 %s291, 1
        %s408 = smul.addr %s407, 8
        %s409 = scalar_lea.vmem [#allocation2], %s408
        %s410 = smul.u32 8, %s26
        %p411 = scmp.lt.s32.totalorder %s410, 15
        %s412 = scalar_select %p411, %s410, 15
        %s413 = smul.addr %s412, 4
        %s414 = smul.addr %s413, 4
        %s415 = scalar_lea.vmem %s0, %s414
        %s416 = smul.u32 8, %s26
        %v418 = vld [vmem:[%s1] sm:$0xff]
        %v419 = vld [vmem:[%s1 + $0x8] sm:$0xff]
        %v420 = vld [vmem:[%s1 + $0x10] sm:$0xff]
        %v421 = vld [vmem:[%s1 + $0x18] sm:$0xff]
        %v422 = vld [vmem:[%s1 + $0x20] sm:$0xff]
        %v423 = vld [vmem:[%s1 + $0x28] sm:$0xff]
        %v424 = vld [vmem:[%s1 + $0x30] sm:$0xff]
        %v425 = vld [vmem:[%s1 + $0x38] sm:$0xff]
        %v426 = vld [vmem:[%s1 + $0x40] sm:$0xff]
        %v427 = vld [vmem:[%s1 + $0x48] sm:$0xff]
        %v428 = vld [vmem:[%s1 + $0x50] sm:$0xff]
        %v429 = vld [vmem:[%s1 + $0x58] sm:$0xff]
        %v430 = vld [vmem:[%s1 + $0x60] sm:$0xff]
        %v431 = vld [vmem:[%s1 + $0x68] sm:$0xff]
        %v432 = vld [vmem:[%s1 + $0x70] sm:$0xff]
        %v433 = vld [vmem:[%s1 + $0x78] sm:$0xff]
        %v434 = vld [vmem:[%s1 + $0x80] sm:$0xff]
        %v435 = vld [vmem:[%s1 + $0x88] sm:$0xff]
        %v436 = vld [vmem:[%s1 + $0x90] sm:$0xff]
        %v437 = vld [vmem:[%s1 + $0x98] sm:$0xff]
        %v438 = vld [vmem:[%s4] sm:$0xff]
        %v439 = vld [vmem:[%s4 + $0x8] sm:$0xff]
        %v440 = vld [vmem:[%s4 + $0x10] sm:$0xff]
        %v441 = vld [vmem:[%s4 + $0x18] sm:$0xff]
        %v442 = vld [vmem:[%s4 + $0x20] sm:$0xff]
        %v443 = vld [vmem:[%s4 + $0x28] sm:$0xff]
        %v444 = vld [vmem:[%s4 + $0x30] sm:$0xff]
        %v445 = vld [vmem:[%s4 + $0x38] sm:$0xff]
        %v446 = vld [vmem:[%s4 + $0x40] sm:$0xff]
        %v447 = vld [vmem:[%s4 + $0x48] sm:$0xff]
        %v448 = vld [vmem:[%s4 + $0x50] sm:$0xff]
        %v449 = vld [vmem:[%s4 + $0x58] sm:$0xff]
        %v450 = vld [vmem:[%s4 + $0x60] sm:$0xff]
        %v451 = vld [vmem:[%s4 + $0x68] sm:$0xff]
        %v452 = vld [vmem:[%s4 + $0x70] sm:$0xff]
        %v453 = vld [vmem:[%s4 + $0x78] sm:$0xff]
        %v454 = vld [vmem:[%s4 + $0x80] sm:$0xff]
        %v455 = vld [vmem:[%s4 + $0x88] sm:$0xff]
        %v456 = vld [vmem:[%s4 + $0x90] sm:$0xff]
        %v457 = vld [vmem:[%s4 + $0x98] sm:$0xff]
        %v458 = vld [vmem:[%s4 + $0xa0] sm:$0xff]
        %v459 = vld [vmem:[%s4 + $0xa8] sm:$0xff]
        %v460 = vld [vmem:[%s4 + $0xb0] sm:$0xff]
        %v461 = vld [vmem:[%s4 + $0xb8] sm:$0xff]
        %v462 = vld [vmem:[%s4 + $0xc0] sm:$0xff]
        %v463 = vld [vmem:[%s4 + $0xc8] sm:$0xff]
        %v464 = vld [vmem:[%s4 + $0xd0] sm:$0xff]
        %v465 = vld [vmem:[%s4 + $0xd8] sm:$0xff]
        %v466 = vld [vmem:[%s4 + $0xe0] sm:$0xff]
        %v467 = vld [vmem:[%s4 + $0xe8] sm:$0xff]
        %v468 = vld [vmem:[%s4 + $0xf0] sm:$0xff]
        %v469 = vld [vmem:[%s4 + $0xf8] sm:$0xff]
        %v470 = vld [vmem:[%s4 + $0x100] sm:$0xff]
        %v471 = vld [vmem:[%s4 + $0x108] sm:$0xff]
        %v472 = vld [vmem:[%s4 + $0x110] sm:$0xff]
        %v473 = vld [vmem:[%s4 + $0x118] sm:$0xff]
        %v474 = vld [vmem:[%s4 + $0x120] sm:$0xff]
        %v475 = vld [vmem:[%s4 + $0x128] sm:$0xff]
        %v476 = vld [vmem:[%s4 + $0x130] sm:$0xff]
        %v477 = vld [vmem:[%s4 + $0x138] sm:$0xff]
        %v478 = vld [vmem:[%s4 + $0x140] sm:$0xff]
        %v479 = vld [vmem:[%s4 + $0x148] sm:$0xff]
        %v480 = vld [vmem:[%s4 + $0x150] sm:$0xff]
        %v481 = vld [vmem:[%s4 + $0x158] sm:$0xff]
        %v482 = vld [vmem:[%s4 + $0x160] sm:$0xff]
        %v483 = vld [vmem:[%s4 + $0x168] sm:$0xff]
        %v484 = vld [vmem:[%s4 + $0x170] sm:$0xff]
        %v485 = vld [vmem:[%s4 + $0x178] sm:$0xff]
        %v486 = vld [vmem:[%s4 + $0x180] sm:$0xff]
        %v487 = vld [vmem:[%s4 + $0x188] sm:$0xff]
        %v488 = vld [vmem:[%s4 + $0x190] sm:$0xff]
        %v489 = vld [vmem:[%s4 + $0x198] sm:$0xff]
        %v490 = vld [vmem:[%s4 + $0x1a0] sm:$0x33]
        %v491 = vld [vmem:[%s3] sm:$0xf]
        %v492 = vld [vmem:[%s3 + $0x4] sm:$0x7]
        %v493 = vld [vmem:[%s2] sm:$0x1]
        %v494 = vld [vmem:[%s5] sm:$0x1]
        %v495 = vld [vmem:[%s415] sm:$0xf]
        %v496 = vld [vmem:[%s415 + $0x4] sm:$0xf]
        %v497 = vld [vmem:[%s415 + $0x8] sm:$0xf]
        %v498 = vld [vmem:[%s415 + $0xc] sm:$0xf]
        %v499 = vunpack.c.l.bf16 %v495
        %v500 = vunpack.c.l.bf16 %v496
        %v501 = vunpack.c.l.bf16 %v497
        %v502 = vunpack.c.l.bf16 %v498
        %vm507 = vcmask 1046528
        %v508 = vrot.slane %v499, 1
        %v509 = vrot.slane %v500, 1
        %v510 = vsel %vm507, %v508, %v509
        %v511 = vrot.slane %v501, 1
        %v512 = vsel %vm507, %v509, %v511
        %v513 = vrot.slane %v502, 1
        %v514 = vsel %vm507, %v511, %v513
        %515 = vrot.lane.b32.xlu0 %v510, 32
        %v516 = vpop.permute.xlu0 %515
        %517 = vrot.lane.b32.xlu0 %v512, 32
        %v518 = vpop.permute.xlu0 %517
        %519 = vrot.lane.b32.xlu0 %v514, 32
        %v520 = vpop.permute.xlu0 %519
        %521 = vrot.lane.b32.xlu0 %v513, 32
        %v522 = vpop.permute.xlu0 %521
        %vm527 = vcmask 1045504
        %v528 = vrot.slane %v499, 2
        %v529 = vrot.slane %v500, 2
        %v530 = vsel %vm527, %v528, %v529
        %v531 = vrot.slane %v501, 2
        %v532 = vsel %vm527, %v529, %v531
        %v533 = vrot.slane %v502, 2
        %v534 = vsel %vm527, %v531, %v533
        %535 = vrot.lane.b32.xlu0 %v530, 64
        %v536 = vpop.permute.xlu0 %535
        %537 = vrot.lane.b32.xlu0 %v532, 64
        %v538 = vpop.permute.xlu0 %537
        %539 = vrot.lane.b32.xlu0 %v534, 64
        %v540 = vpop.permute.xlu0 %539
        %541 = vrot.lane.b32.xlu0 %v533, 64
        %v542 = vpop.permute.xlu0 %541
        %vm547 = vcmask 1044480
        %v548 = vrot.slane %v499, 3
        %v549 = vrot.slane %v500, 3
        %v550 = vsel %vm547, %v548, %v549
        %v551 = vrot.slane %v501, 3
        %v552 = vsel %vm547, %v549, %v551
        %v553 = vrot.slane %v502, 3
        %v554 = vsel %vm547, %v551, %v553
        %555 = vrot.lane.b32.xlu0 %v550, 96
        %v556 = vpop.permute.xlu0 %555
        %557 = vrot.lane.b32.xlu0 %v552, 96
        %v558 = vpop.permute.xlu0 %557
        %559 = vrot.lane.b32.xlu0 %v554, 96
        %v560 = vpop.permute.xlu0 %559
        %561 = vrot.lane.b32.xlu0 %v553, 96
        %v562 = vpop.permute.xlu0 %561
        %vm567 = vcmask 1043456
        %v568 = vrot.slane %v499, 4
        %v569 = vrot.slane %v500, 4
        %v570 = vsel %vm567, %v568, %v569
        %v571 = vrot.slane %v501, 4
        %v572 = vsel %vm567, %v569, %v571
        %v573 = vrot.slane %v502, 4
        %v574 = vsel %vm567, %v571, %v573
        %vm579 = vcmask 261120
        %v580 = vsel %vm579, %v499, %v516
        %v581 = vsel %vm579, %v500, %v518
        %v582 = vsel %vm579, %v501, %v520
        %v583 = vsel %vm579, %v502, %v522
        %vm584 = vcmask 523264
        %v585 = vsel %vm584, %v580, %v536
        %v586 = vsel %vm584, %v581, %v538
        %v587 = vsel %vm584, %v582, %v540
        %v588 = vsel %vm584, %v583, %v542
        %vm589 = vcmask 785408
        %v590 = vsel %vm589, %v585, %v556
        %v591 = vsel %vm589, %v586, %v558
        %v592 = vsel %vm589, %v587, %v560
        %v593 = vsel %vm589, %v588, %v562
        %v594 = vpack.c.bf16 %v591, %v590
        %v595 = vpack.c.bf16 %v572, %v570
        %v596 = vpack.c.bf16 %v593, %v592
        %v597 = vpack.c.bf16 %v573, %v574
        %v618 = vunpack.c.l.b16 %v418
        %v619 = vunpack.c.h.b16 %v418
        %v620 = vunpack.c.l.b16 %v419
        %v621 = vunpack.c.h.b16 %v419
        %v622 = vunpack.c.l.b16 %v420
        %v623 = vunpack.c.h.b16 %v420
        %v624 = vunpack.c.l.b16 %v421
        %v625 = vunpack.c.h.b16 %v421
        %v626 = vunpack.c.l.b16 %v422
        %v627 = vunpack.c.h.b16 %v422
        %v628 = vunpack.c.l.b16 %v423
        %v629 = vunpack.c.h.b16 %v423
        %v630 = vunpack.c.l.b16 %v424
        %v631 = vunpack.c.h.b16 %v424
        %v632 = vunpack.c.l.b16 %v425
        %v633 = vunpack.c.h.b16 %v425
        %v634 = vunpack.c.l.b16 %v426
        %v635 = vunpack.c.h.b16 %v426
        %v636 = vunpack.c.l.b16 %v427
        %v637 = vunpack.c.h.b16 %v427
        %v638 = vunpack.c.l.b16 %v428
        %v639 = vunpack.c.h.b16 %v428
        %v640 = vunpack.c.l.b16 %v429
        %v641 = vunpack.c.h.b16 %v429
        %v642 = vunpack.c.l.b16 %v430
        %v643 = vunpack.c.h.b16 %v430
        %v644 = vunpack.c.l.b16 %v431
        %v645 = vunpack.c.h.b16 %v431
        %v646 = vunpack.c.l.b16 %v432
        %v647 = vunpack.c.h.b16 %v432
        %v648 = vunpack.c.l.b16 %v433
        %v649 = vunpack.c.h.b16 %v433
        %v650 = vunpack.c.l.b16 %v434
        %v651 = vunpack.c.h.b16 %v434
        %v652 = vunpack.c.l.b16 %v435
        %v653 = vunpack.c.h.b16 %v435
        %v654 = vunpack.c.l.b16 %v436
        %v655 = vunpack.c.h.b16 %v436
        %v656 = vunpack.c.l.b16 %v437
        %v657 = vunpack.c.h.b16 %v437
        %v658 = vpack.c.b16 %v620, %v618
        %v659 = vpack.c.b16 %v621, %v619
        %v660 = vpack.c.b16 %v624, %v622
        %v661 = vpack.c.b16 %v625, %v623
        %v662 = vpack.c.b16 %v628, %v626
        %v663 = vpack.c.b16 %v629, %v627
        %v664 = vpack.c.b16 %v632, %v630
        %v665 = vpack.c.b16 %v633, %v631
        %v666 = vpack.c.b16 %v636, %v634
        %v667 = vpack.c.b16 %v637, %v635
        %v668 = vpack.c.b16 %v640, %v638
        %v669 = vpack.c.b16 %v641, %v639
        %v670 = vpack.c.b16 %v644, %v642
        %v671 = vpack.c.b16 %v645, %v643
        %v672 = vpack.c.b16 %v648, %v646
        %v673 = vpack.c.b16 %v649, %v647
        %v674 = vpack.c.b16 %v652, %v650
        %v675 = vpack.c.b16 %v653, %v651
        %v676 = vpack.c.b16 %v656, %v654
        %v677 = vpack.c.b16 %v657, %v655
        %v699 = vsel %vm579, %v595, 0
        %v702 = vsel %vm579, %v597, 0
        %704 = vmatprep.subr.bf16.mxu0 %v659
        %705 = vmatpush1.bf16.msra.mxu0 %v658
        %706 = vmatprep.subr.bf16.mxu0 %v661
        %707 = vmatpush1.bf16.msra.mxu0 %v660
        %708 = vmatprep.subr.bf16.mxu0 %v663
        %709 = vmatpush1.bf16.msra.mxu0 %v662
        %710 = vmatprep.subr.bf16.mxu0 %v665
        %711 = vmatpush1.bf16.msra.mxu0 %v664
        %712 = vmatprep.subr.bf16.mxu0 %v667
        %713 = vmatpush1.bf16.msra.mxu0 %v666
        %714 = vmatprep.subr.bf16.mxu0 %v669
        %715 = vmatpush1.bf16.msra.mxu0 %v668
        %716 = vmatprep.subr.bf16.mxu0 %v671
        %717 = vmatpush1.bf16.msra.mxu0 %v670
        %718 = vmatprep.subr.bf16.mxu0 %v673
        %719 = vmatpush1.bf16.msra.mxu0 %v672
        %720 = vmatprep.subr.bf16.mxu0 %v675
        %721 = vmatpush1.bf16.msra.mxu0 %v674
        %722 = vmatprep.subr.bf16.mxu0 %v677
        %723 = vmatpush1.bf16.msra.mxu0 %v676
        %724 = vmatprep.subr.bf16.mxu0 0
        %725 = vmatpush1.bf16.msra.mxu0 0
        %726 = vmatprep.subr.bf16.mxu0 0
        %727 = vmatpush1.bf16.msra.mxu0 0
        %728 = vmatprep.subr.bf16.mxu0 0
        %729 = vmatpush1.bf16.msra.mxu0 0
        %730 = vmatprep.subr.bf16.mxu0 0
        %731 = vmatpush1.bf16.msra.mxu0 0
        %732 = vmatprep.subr.bf16.mxu0 0
        %733 = vmatpush1.bf16.msra.mxu0 0
        %734 = vmatprep.subr.bf16.mxu0 0
        %735 = vmatpush1.bf16.msra.mxu0 0
        %736 = vmatprep.mubr.bf16.mxu0 %v699
        %737 = vmatmul.mubr.bf16.gmra.mrb[0].mxu0 %v594
        %v738 = vpop.f32.mrb[0].mxu0
        %v739 = vadd.f32 0.0, %v738
        %v740 = vpop.f32.mrb[0].mxu0
        %v741 = vadd.f32 0.0, %v740
        %v742 = vpop.f32.mrb[0].mxu0
        %v743 = vadd.f32 0.0, %v742
        %v744 = vpop.f32.mrb[0].mxu0
        %v745 = vadd.f32 0.0, %v744
        %746 = vmatprep.mubr.bf16.mxu0 %v702
        %747 = vmatmul.mubr.bf16.gmra.mrb[0].mxu0 %v596
        %v748 = vpop.f32.mrb[0].mxu0
        %v749 = vadd.f32 0.0, %v748
        %v750 = vpop.f32.mrb[0].mxu0
        %v751 = vadd.f32 0.0, %v750
        %v752 = vpop.f32.mrb[0].mxu0
        %v753 = vadd.f32 0.0, %v752
        %v754 = vpop.f32.mrb[0].mxu0
        %v755 = vadd.f32 0.0, %v754
        %756 = vdwg.mxu0
        %v757 = vmax.f32 %v739, %v741
        %v758 = vmax.f32 %v743, %v745
        %v759 = vmax.f32 %v749, %v751
        %v760 = vmax.f32 %v753, %v755
        %v765 = vrot.slane %v757, 1
        %v766 = vrot.slane %v758, 1
        %v767 = vsel %vm507, %v765, %v766
        %v768 = vrot.slane %v759, 1
        %v769 = vsel %vm507, %v766, %v768
        %v770 = vrot.slane %v760, 1
        %v771 = vsel %vm507, %v768, %v770
        %v776 = vmax.f32 %v757, %v767
        %v777 = vmax.f32 %v758, %v769
        %v778 = vmax.f32 %v759, %v771
        %v779 = vmax.f32 %v760, %v770
        %v781 = vlaneseq
        %v782 = vshrl.u32 %v781, 7
        %v783 = vsub.s32 0, %v782
        %v784 = vrot.slane %v493, %v783
        %v786 = vadd.f32 %v776, %v784
        %v787 = vadd.f32 %v777, %v784
        %v788 = vadd.f32 %v778, %v784
        %v789 = vadd.f32 %v779, %v784
        %v790 = vmax.f32 %v786, 0.0
        %v791 = vmax.f32 %v787, 0.0
        %v792 = vmax.f32 %v788, 0.0
        %v793 = vmax.f32 %v789, 0.0
        %v794 = vpack.c.bf16 %v791, %v790
        %v795 = vpack.c.bf16 %v793, %v792
        %v798 = vunpack.c.l.b16 %v491
        %v799 = vunpack.c.l.b16 %v492
        %v800 = vpack.c.b16 %v799, %v798
        %vm801 = vcmask 220160
        %v803 = vsel %vm801, %v800, 0
        %v805 = vsel %vm547, 4294967295, 65535
        %v806 = vsel %vm527, %v805, 0
        %v808 = vand.u32 %v795, %v806
        %810 = vmatprep.subr.bf16.mxu0 0
        %811 = vmatpush1.bf16.msra.mxu0 %v794
        %812 = vmatprep.subr.bf16.mxu0 0
        %813 = vmatpush1.bf16.msra.mxu0 %v808
        %814 = vmatprep.subr.bf16.mxu0 0
        %815 = vmatpush1.bf16.msra.mxu0 0
        %816 = vmatprep.subr.bf16.mxu0 0
        %817 = vmatpush1.bf16.msra.mxu0 0
        %818 = vmatprep.subr.bf16.mxu0 0
        %819 = vmatpush1.bf16.msra.mxu0 0
        %820 = vmatprep.subr.bf16.mxu0 0
        %821 = vmatpush1.bf16.msra.mxu0 0
        %822 = vmatprep.subr.bf16.mxu0 0
        %823 = vmatpush1.bf16.msra.mxu0 0
        %824 = vmatprep.subr.bf16.mxu0 0
        %825 = vmatpush1.bf16.msra.mxu0 0
        %826 = vmatprep.subr.bf16.mxu0 0
        %827 = vmatpush1.bf16.msra.mxu0 0
        %828 = vmatprep.subr.bf16.mxu0 0
        %829 = vmatpush1.bf16.msra.mxu0 0
        %830 = vmatprep.subr.bf16.mxu0 0
        %831 = vmatpush1.bf16.msra.mxu0 0
        %832 = vmatprep.subr.bf16.mxu0 0
        %833 = vmatpush1.bf16.msra.mxu0 0
        %834 = vmatprep.subr.bf16.mxu0 0
        %835 = vmatpush1.bf16.msra.mxu0 0
        %836 = vmatprep.subr.bf16.mxu0 0
        %837 = vmatpush1.bf16.msra.mxu0 0
        %838 = vmatprep.subr.bf16.mxu0 0
        %839 = vmatpush1.bf16.msra.mxu0 0
        %840 = vmatprep.subr.bf16.mxu0 0
        %841 = vmatpush1.bf16.msra.mxu0 0
        %842 = vmatprep.mubr.bf16.mxu0 0
        %843 = vmatmul.mubr.bf16.gmra.mrb[0].mxu0 %v803
        %v844 = vpop.f32.mrb[0].mxu0
        %v845 = vadd.f32 0.0, %v844
        %v846 = vpop.f32.mrb[0].mxu0
        %v847 = vpop.f32.mrb[0].mxu0
        %v848 = vadd.f32 0.0, %v847
        %v849 = vpop.f32.mrb[0].mxu0
        %850 = vdwg.mxu0
        %v853 = vrot.slane %v845, 1
        %v854 = vrot.slane %v848, 1
        %v855 = vsel %vm507, %v853, %v854
        %856 = vrot.lane.b32.xlu0 %v855, 84
        %v857 = vpop.permute.xlu0 %856
        %858 = vrot.lane.b32.xlu0 %v854, 84
        %v859 = vpop.permute.xlu0 %858
        %v862 = vrot.slane %v845, 2
        %v863 = vrot.slane %v848, 2
        %v864 = vsel %vm527, %v862, %v863
        %865 = vrot.lane.b32.xlu0 %v864, 40
        %v866 = vpop.permute.xlu0 %865
        %867 = vrot.lane.b32.xlu0 %v863, 40
        %v868 = vpop.permute.xlu0 %867
        %v871 = vrot.slane %v845, 3
        %v872 = vrot.slane %v848, 3
        %v873 = vsel %vm547, %v871, %v872
        %874 = vrot.lane.b32.xlu0 %v873, 124
        %v875 = vpop.permute.xlu0 %874
        %876 = vrot.lane.b32.xlu0 %v872, 124
        %v877 = vpop.permute.xlu0 %876
        %v880 = vrot.slane %v845, 4
        %v881 = vrot.slane %v848, 4
        %v882 = vsel %vm567, %v880, %v881
        %883 = vrot.lane.b32.xlu0 %v882, 80
        %v884 = vpop.permute.xlu0 %883
        %885 = vrot.lane.b32.xlu0 %v881, 80
        %v886 = vpop.permute.xlu0 %885
        %vm889 = vcmask 687104
        %v890 = vsel %vm889, %v845, %v857
        %v891 = vsel %vm889, %v848, %v859
        %vm892 = vcmask 326656
        %v893 = vsel %vm892, %v857, %v866
        %v894 = vsel %vm892, %v859, %v868
        %vm895 = vcmask 1014784
        %v896 = vsel %vm895, %v893, %v875
        %v897 = vsel %vm895, %v894, %v877
        %vm898 = vcmask 654336
        %v899 = vsel %vm898, %v875, %v884
        %v900 = vsel %vm898, %v877, %v886
        %v901 = vpack.c.bf16 %v891, %v890
        %v902 = vpack.c.bf16 %v897, %v896
        %v903 = vpack.c.bf16 %v900, %v899
        %v904 = vpack.c.bf16 %v886, %v884
        %v958 = vunpack.c.l.b16 %v438
        %v959 = vunpack.c.h.b16 %v438
        %v960 = vunpack.c.l.b16 %v439
        %v961 = vunpack.c.h.b16 %v439
        %v962 = vunpack.c.l.b16 %v440
        %v963 = vunpack.c.h.b16 %v440
        %v964 = vunpack.c.l.b16 %v441
        %v965 = vunpack.c.h.b16 %v441
        %v966 = vunpack.c.l.b16 %v442
        %v967 = vunpack.c.h.b16 %v442
        %v968 = vunpack.c.l.b16 %v443
        %v969 = vunpack.c.h.b16 %v443
        %v970 = vunpack.c.l.b16 %v444
        %v971 = vunpack.c.h.b16 %v444
        %v972 = vunpack.c.l.b16 %v445
        %v973 = vunpack.c.h.b16 %v445
        %v974 = vunpack.c.l.b16 %v446
        %v975 = vunpack.c.h.b16 %v446
        %v976 = vunpack.c.l.b16 %v447
        %v977 = vunpack.c.h.b16 %v447
        %v978 = vunpack.c.l.b16 %v448
        %v979 = vunpack.c.h.b16 %v448
        %v980 = vunpack.c.l.b16 %v449
        %v981 = vunpack.c.h.b16 %v449
        %v982 = vunpack.c.l.b16 %v450
        %v983 = vunpack.c.h.b16 %v450
        %v984 = vunpack.c.l.b16 %v451
        %v985 = vunpack.c.h.b16 %v451
        %v986 = vunpack.c.l.b16 %v452
        %v987 = vunpack.c.h.b16 %v452
        %v988 = vunpack.c.l.b16 %v453
        %v989 = vunpack.c.h.b16 %v453
        %v990 = vunpack.c.l.b16 %v454
        %v991 = vunpack.c.h.b16 %v454
        %v992 = vunpack.c.l.b16 %v455
        %v993 = vunpack.c.h.b16 %v455
        %v994 = vunpack.c.l.b16 %v456
        %v995 = vunpack.c.h.b16 %v456
        %v996 = vunpack.c.l.b16 %v457
        %v997 = vunpack.c.h.b16 %v457
        %v998 = vunpack.c.l.b16 %v458
        %v999 = vunpack.c.h.b16 %v458
        %v1000 = vunpack.c.l.b16 %v459
        %v1001 = vunpack.c.h.b16 %v459
        %v1002 = vunpack.c.l.b16 %v460
        %v1003 = vunpack.c.h.b16 %v460
        %v1004 = vunpack.c.l.b16 %v461
        %v1005 = vunpack.c.h.b16 %v461
        %v1006 = vunpack.c.l.b16 %v462
        %v1007 = vunpack.c.h.b16 %v462
        %v1008 = vunpack.c.l.b16 %v463
        %v1009 = vunpack.c.h.b16 %v463
        %v1010 = vunpack.c.l.b16 %v464
        %v1011 = vunpack.c.h.b16 %v464
        %v1012 = vunpack.c.l.b16 %v465
        %v1013 = vunpack.c.h.b16 %v465
        %v1014 = vunpack.c.l.b16 %v466
        %v1015 = vunpack.c.h.b16 %v466
        %v1016 = vunpack.c.l.b16 %v467
        %v1017 = vunpack.c.h.b16 %v467
        %v1018 = vunpack.c.l.b16 %v468
        %v1019 = vunpack.c.h.b16 %v468
        %v1020 = vunpack.c.l.b16 %v469
        %v1021 = vunpack.c.h.b16 %v469
        %v1022 = vunpack.c.l.b16 %v470
        %v1023 = vunpack.c.h.b16 %v470
        %v1024 = vunpack.c.l.b16 %v471
        %v1025 = vunpack.c.h.b16 %v471
        %v1026 = vunpack.c.l.b16 %v472
        %v1027 = vunpack.c.h.b16 %v472
        %v1028 = vunpack.c.l.b16 %v473
        %v1029 = vunpack.c.h.b16 %v473
        %v1030 = vunpack.c.l.b16 %v474
        %v1031 = vunpack.c.h.b16 %v474
        %v1032 = vunpack.c.l.b16 %v475
        %v1033 = vunpack.c.h.b16 %v475
        %v1034 = vunpack.c.l.b16 %v476
        %v1035 = vunpack.c.h.b16 %v476
        %v1036 = vunpack.c.l.b16 %v477
        %v1037 = vunpack.c.h.b16 %v477
        %v1038 = vunpack.c.l.b16 %v478
        %v1039 = vunpack.c.h.b16 %v478
        %v1040 = vunpack.c.l.b16 %v479
        %v1041 = vunpack.c.h.b16 %v479
        %v1042 = vunpack.c.l.b16 %v480
        %v1043 = vunpack.c.h.b16 %v480
        %v1044 = vunpack.c.l.b16 %v481
        %v1045 = vunpack.c.h.b16 %v481
        %v1046 = vunpack.c.l.b16 %v482
        %v1047 = vunpack.c.h.b16 %v482
        %v1048 = vunpack.c.l.b16 %v483
        %v1049 = vunpack.c.h.b16 %v483
        %v1050 = vunpack.c.l.b16 %v484
        %v1051 = vunpack.c.h.b16 %v484
        %v1052 = vunpack.c.l.b16 %v485
        %v1053 = vunpack.c.h.b16 %v485
        %v1054 = vunpack.c.l.b16 %v486
        %v1055 = vunpack.c.h.b16 %v486
        %v1056 = vunpack.c.l.b16 %v487
        %v1057 = vunpack.c.h.b16 %v487
        %v1058 = vunpack.c.l.b16 %v488
        %v1059 = vunpack.c.h.b16 %v488
        %v1060 = vunpack.c.l.b16 %v489
        %v1061 = vunpack.c.h.b16 %v489
        %v1062 = vunpack.c.l.b16 %v490
        %v1063 = vunpack.c.h.b16 %v490
        %v1064 = vpack.c.b16 %v960, %v958
        %v1065 = vpack.c.b16 %v961, %v959
        %v1066 = vpack.c.b16 %v964, %v962
        %v1067 = vpack.c.b16 %v965, %v963
        %v1068 = vpack.c.b16 %v968, %v966
        %v1069 = vpack.c.b16 %v969, %v967
        %v1070 = vpack.c.b16 %v972, %v970
        %v1071 = vpack.c.b16 %v973, %v971
        %v1072 = vpack.c.b16 %v976, %v974
        %v1073 = vpack.c.b16 %v977, %v975
        %v1074 = vpack.c.b16 %v980, %v978
        %v1075 = vpack.c.b16 %v981, %v979
        %v1076 = vpack.c.b16 %v984, %v982
        %v1077 = vpack.c.b16 %v985, %v983
        %v1078 = vpack.c.b16 %v988, %v986
        %v1079 = vpack.c.b16 %v989, %v987
        %v1080 = vpack.c.b16 %v992, %v990
        %v1081 = vpack.c.b16 %v993, %v991
        %v1082 = vpack.c.b16 %v996, %v994
        %v1083 = vpack.c.b16 %v997, %v995
        %v1084 = vpack.c.b16 %v1000, %v998
        %v1085 = vpack.c.b16 %v1001, %v999
        %v1086 = vpack.c.b16 %v1004, %v1002
        %v1087 = vpack.c.b16 %v1005, %v1003
        %v1088 = vpack.c.b16 %v1008, %v1006
        %v1089 = vpack.c.b16 %v1009, %v1007
        %v1090 = vpack.c.b16 %v1012, %v1010
        %v1091 = vpack.c.b16 %v1013, %v1011
        %v1092 = vpack.c.b16 %v1016, %v1014
        %v1093 = vpack.c.b16 %v1017, %v1015
        %v1094 = vpack.c.b16 %v1020, %v1018
        %v1095 = vpack.c.b16 %v1021, %v1019
        %v1096 = vpack.c.b16 %v1024, %v1022
        %v1097 = vpack.c.b16 %v1025, %v1023
        %v1098 = vpack.c.b16 %v1028, %v1026
        %v1099 = vpack.c.b16 %v1029, %v1027
        %v1100 = vpack.c.b16 %v1032, %v1030
        %v1101 = vpack.c.b16 %v1033, %v1031
        %v1102 = vpack.c.b16 %v1036, %v1034
        %v1103 = vpack.c.b16 %v1037, %v1035
        %v1104 = vpack.c.b16 %v1040, %v1038
        %v1105 = vpack.c.b16 %v1041, %v1039
        %v1106 = vpack.c.b16 %v1044, %v1042
        %v1107 = vpack.c.b16 %v1045, %v1043
        %v1108 = vpack.c.b16 %v1048, %v1046
        %v1109 = vpack.c.b16 %v1049, %v1047
        %v1110 = vpack.c.b16 %v1052, %v1050
        %v1111 = vpack.c.b16 %v1053, %v1051
        %v1112 = vpack.c.b16 %v1056, %v1054
        %v1113 = vpack.c.b16 %v1057, %v1055
        %v1114 = vpack.c.b16 %v1060, %v1058
        %v1115 = vpack.c.b16 %v1061, %v1059
        %v1116 = vpack.c.b16 %v1062, %v1062
        %v1117 = vpack.c.b16 %v1063, %v1063
        %vm1170 = vcmask 293888
        %v1172 = vsel %vm1170, %v904, 0
        %vm1174 = vcmask 1041408
        %v1176 = vsel %vm1174, %v1116, 0
        %v1179 = vsel %vm1174, %v1117, 0
        %1181 = vmatprep.subr.bf16.mxu0 %v1065
        %1182 = vmatpush1.bf16.msra.mxu0 %v1064
        %1183 = vmatprep.subr.bf16.mxu0 %v1067
        %1184 = vmatpush1.bf16.msra.mxu0 %v1066
        %1185 = vmatprep.subr.bf16.mxu0 %v1069
        %1186 = vmatpush1.bf16.msra.mxu0 %v1068
        %1187 = vmatprep.subr.bf16.mxu0 %v1071
        %1188 = vmatpush1.bf16.msra.mxu0 %v1070
        %1189 = vmatprep.subr.bf16.mxu0 %v1073
        %1190 = vmatpush1.bf16.msra.mxu0 %v1072
        %1191 = vmatprep.subr.bf16.mxu0 %v1075
        %1192 = vmatpush1.bf16.msra.mxu0 %v1074
        %1193 = vmatprep.subr.bf16.mxu0 %v1077
        %1194 = vmatpush1.bf16.msra.mxu0 %v1076
        %1195 = vmatprep.subr.bf16.mxu0 %v1079
        %1196 = vmatpush1.bf16.msra.mxu0 %v1078
        %1197 = vmatprep.subr.bf16.mxu0 %v1081
        %1198 = vmatpush1.bf16.msra.mxu0 %v1080
        %1199 = vmatprep.subr.bf16.mxu0 %v1083
        %1200 = vmatpush1.bf16.msra.mxu0 %v1082
        %1201 = vmatprep.subr.bf16.mxu0 %v1085
        %1202 = vmatpush1.bf16.msra.mxu0 %v1084
        %1203 = vmatprep.subr.bf16.mxu0 %v1087
        %1204 = vmatpush1.bf16.msra.mxu0 %v1086
        %1205 = vmatprep.subr.bf16.mxu0 %v1089
        %1206 = vmatpush1.bf16.msra.mxu0 %v1088
        %1207 = vmatprep.subr.bf16.mxu0 %v1091
        %1208 = vmatpush1.bf16.msra.mxu0 %v1090
        %1209 = vmatprep.subr.bf16.mxu0 %v1093
        %1210 = vmatpush1.bf16.msra.mxu0 %v1092
        %1211 = vmatprep.subr.bf16.mxu0 %v1095
        %1212 = vmatpush1.bf16.msra.mxu0 %v1094
        %1213 = vmatprep.mubr.bf16.mxu0 %v902
        %1214 = vmatmul.mubr.bf16.gmra.mrb[0].mxu0 %v901
        %v1215 = vpop.f32.mrb[0].mxu0
        %v1216 = vadd.f32 0.0, %v1215
        %v1217 = vpop.f32.mrb[0].mxu0
        %v1218 = vadd.f32 0.0, %v1217
        %v1219 = vpop.f32.mrb[0].mxu0
        %v1220 = vadd.f32 0.0, %v1219
        %v1221 = vpop.f32.mrb[0].mxu0
        %v1222 = vadd.f32 0.0, %v1221
        %1223 = vdwg.mxu0
        %1224 = vmatprep.subr.bf16.mxu0 %v1097
        %1225 = vmatpush1.bf16.msra.mxu0 %v1096
        %1226 = vmatprep.subr.bf16.mxu0 %v1099
        %1227 = vmatpush1.bf16.msra.mxu0 %v1098
        %1228 = vmatprep.subr.bf16.mxu0 %v1101
        %1229 = vmatpush1.bf16.msra.mxu0 %v1100
        %1230 = vmatprep.subr.bf16.mxu0 %v1103
        %1231 = vmatpush1.bf16.msra.mxu0 %v1102
        %1232 = vmatprep.subr.bf16.mxu0 %v1105
        %1233 = vmatpush1.bf16.msra.mxu0 %v1104
        %1234 = vmatprep.subr.bf16.mxu0 %v1107
        %1235 = vmatpush1.bf16.msra.mxu0 %v1106
        %1236 = vmatprep.subr.bf16.mxu0 %v1109
        %1237 = vmatpush1.bf16.msra.mxu0 %v1108
        %1238 = vmatprep.subr.bf16.mxu0 %v1111
        %1239 = vmatpush1.bf16.msra.mxu0 %v1110
        %1240 = vmatprep.subr.bf16.mxu0 %v1113
        %1241 = vmatpush1.bf16.msra.mxu0 %v1112
        %1242 = vmatprep.subr.bf16.mxu0 %v1115
        %1243 = vmatpush1.bf16.msra.mxu0 %v1114
        %1244 = vmatprep.subr.bf16.mxu0 %v1179
        %1245 = vmatpush1.bf16.msra.mxu0 %v1176
        %1246 = vmatprep.subr.bf16.mxu0 0
        %1247 = vmatpush1.bf16.msra.mxu0 0
        %1248 = vmatprep.subr.bf16.mxu0 0
        %1249 = vmatpush1.bf16.msra.mxu0 0
        %1250 = vmatprep.subr.bf16.mxu0 0
        %1251 = vmatpush1.bf16.msra.mxu0 0
        %1252 = vmatprep.subr.bf16.mxu0 0
        %1253 = vmatpush1.bf16.msra.mxu0 0
        %1254 = vmatprep.subr.bf16.mxu0 0
        %1255 = vmatpush1.bf16.msra.mxu0 0
        %1256 = vmatprep.mubr.bf16.mxu0 %v1172
        %1257 = vmatmul.mubr.bf16.gmra.mrb[0].mxu0 %v903
        %v1258 = vpop.f32.mrb[0].mxu0
        %v1259 = vadd.f32 %v1216, %v1258
        %v1260 = vpop.f32.mrb[0].mxu0
        %v1261 = vadd.f32 %v1218, %v1260
        %v1262 = vpop.f32.mrb[0].mxu0
        %v1263 = vadd.f32 %v1220, %v1262
        %v1264 = vpop.f32.mrb[0].mxu0
        %v1265 = vadd.f32 %v1222, %v1264
        %1266 = vdwg.mxu0
        %v1267 = vmax.f32 %v1259, %v1261
        %v1268 = vmax.f32 %v1263, %v1265
        %v1271 = vrot.slane %v1267, 1
        %v1272 = vrot.slane %v1268, 1
        %v1273 = vsel %vm507, %v1271, %v1272
        %v1276 = vmax.f32 %v1267, %v1273
        %v1277 = vmax.f32 %v1268, %v1272
        %v1278 = vadd.f32 %v1276, %v494
        %v1279 = vmax.f32 %v1278, 0.0
        %v1281 = vlaneseq
        %v1282 = vshrl.u32 %v1281, 7
        %v1283 = vsub.s32 0, %v1282
        %v1284 = vrot.slane %v494, %v1283
        %v1286 = vadd.f32 %v1276, %v1284
        %v1287 = vmax.f32 %v1286, 0.0
        %v1288 = vadd.f32 %v1277, %v494
        %v1289 = vmax.f32 %v1288, 0.0
        %v1291 = vrot.slane %v1287, 2
        %1292 = vrot.lane.b32.xlu0 %v1291, 80
        %v1293 = vpop.permute.xlu0 %1292
        %v1295 = vrot.slane %v1287, 4
        %1296 = vrot.lane.b32.xlu0 %v1295, 32
        %v1297 = vpop.permute.xlu0 %1296
        %v1299 = vrot.slane %v1287, 6
        %1300 = vrot.lane.b32.xlu0 %v1299, 112
        %v1301 = vpop.permute.xlu0 %1300
        %1304 = vrot.lane.b32.xlu0 %v1289, 64
        %v1305 = vpop.permute.xlu0 %1304
        %v1307 = vsel %vm898, %v1279, %v1293
        %v1308 = vsel %vm579, %v1293, %v1297
        %vm1309 = vcmask 916480
        %v1310 = vsel %vm1309, %v1308, %v1301
        %v1311 = vsel %vm584, %v1301, %v1305
        %s1312 = scalar_lea.vmem %s415, 16
        %v1313 = vld [vmem:[%s1312] sm:$0xf]
        %v1314 = vld [vmem:[%s1312 + $0x4] sm:$0xf]
        %v1315 = vld [vmem:[%s1312 + $0x8] sm:$0xf]
        %v1316 = vld [vmem:[%s1312 + $0xc] sm:$0xf]
        %v1317 = vunpack.c.l.bf16 %v1313
        %v1318 = vunpack.c.l.bf16 %v1314
        %v1319 = vunpack.c.l.bf16 %v1315
        %v1320 = vunpack.c.l.bf16 %v1316
        %v1325 = vrot.slane %v1317, 1
        %v1326 = vrot.slane %v1318, 1
        %v1327 = vsel %vm507, %v1325, %v1326
        %v1328 = vrot.slane %v1319, 1
        %v1329 = vsel %vm507, %v1326, %v1328
        %v1330 = vrot.slane %v1320, 1
        %v1331 = vsel %vm507, %v1328, %v1330
        %1332 = vrot.lane.b32.xlu0 %v1327, 32
        %v1333 = vpop.permute.xlu0 %1332
        %1334 = vrot.lane.b32.xlu0 %v1329, 32
        %v1335 = vpop.permute.xlu0 %1334
        %1336 = vrot.lane.b32.xlu0 %v1331, 32
        %v1337 = vpop.permute.xlu0 %1336
        %1338 = vrot.lane.b32.xlu0 %v1330, 32
        %v1339 = vpop.permute.xlu0 %1338
        %v1344 = vrot.slane %v1317, 2
        %v1345 = vrot.slane %v1318, 2
        %v1346 = vsel %vm527, %v1344, %v1345
        %v1347 = vrot.slane %v1319, 2
        %v1348 = vsel %vm527, %v1345, %v1347
        %v1349 = vrot.slane %v1320, 2
        %v1350 = vsel %vm527, %v1347, %v1349
        %1351 = vrot.lane.b32.xlu0 %v1346, 64
        %v1352 = vpop.permute.xlu0 %1351
        %1353 = vrot.lane.b32.xlu0 %v1348, 64
        %v1354 = vpop.permute.xlu0 %1353
        %1355 = vrot.lane.b32.xlu0 %v1350, 64
        %v1356 = vpop.permute.xlu0 %1355
        %1357 = vrot.lane.b32.xlu0 %v1349, 64
        %v1358 = vpop.permute.xlu0 %1357
        %v1363 = vrot.slane %v1317, 3
        %v1364 = vrot.slane %v1318, 3
        %v1365 = vsel %vm547, %v1363, %v1364
        %v1366 = vrot.slane %v1319, 3
        %v1367 = vsel %vm547, %v1364, %v1366
        %v1368 = vrot.slane %v1320, 3
        %v1369 = vsel %vm547, %v1366, %v1368
        %1370 = vrot.lane.b32.xlu0 %v1365, 96
        %v1371 = vpop.permute.xlu0 %1370
        %1372 = vrot.lane.b32.xlu0 %v1367, 96
        %v1373 = vpop.permute.xlu0 %1372
        %1374 = vrot.lane.b32.xlu0 %v1369, 96
        %v1375 = vpop.permute.xlu0 %1374
        %1376 = vrot.lane.b32.xlu0 %v1368, 96
        %v1377 = vpop.permute.xlu0 %1376
        %v1382 = vrot.slane %v1317, 4
        %v1383 = vrot.slane %v1318, 4
        %v1384 = vsel %vm567, %v1382, %v1383
        %v1385 = vrot.slane %v1319, 4
        %v1386 = vsel %vm567, %v1383, %v1385
        %v1387 = vrot.slane %v1320, 4
        %v1388 = vsel %vm567, %v1385, %v1387
        %v1393 = vsel %vm579, %v1317, %v1333
        %v1394 = vsel %vm579, %v1318, %v1335
        %v1395 = vsel %vm579, %v1319, %v1337
        %v1396 = vsel %vm579, %v1320, %v1339
        %v1397 = vsel %vm584, %v1393, %v1352
        %v1398 = vsel %vm584, %v1394, %v1354
        %v1399 = vsel %vm584, %v1395, %v1356
        %v1400 = vsel %vm584, %v1396, %v1358
        %v1401 = vsel %vm589, %v1397, %v1371
        %v1402 = vsel %vm589, %v1398, %v1373
        %v1403 = vsel %vm589, %v1399, %v1375
        %v1404 = vsel %vm589, %v1400, %v1377
        %v1405 = vpack.c.bf16 %v1402, %v1401
        %v1406 = vpack.c.bf16 %v1386, %v1384
        %v1407 = vpack.c.bf16 %v1404, %v1403
        %v1408 = vpack.c.bf16 %v1387, %v1388
        %v1410 = vsel %vm579, %v1406, 0
        %v1413 = vsel %vm579, %v1408, 0
        %1415 = vmatprep.subr.bf16.mxu0 %v659
        %1416 = vmatpush1.bf16.msra.mxu0 %v658
        %1417 = vmatprep.subr.bf16.mxu0 %v661
        %1418 = vmatpush1.bf16.msra.mxu0 %v660
        %1419 = vmatprep.subr.bf16.mxu0 %v663
        %1420 = vmatpush1.bf16.msra.mxu0 %v662
        %1421 = vmatprep.subr.bf16.mxu0 %v665
        %1422 = vmatpush1.bf16.msra.mxu0 %v664
        %1423 = vmatprep.subr.bf16.mxu0 %v667
        %1424 = vmatpush1.bf16.msra.mxu0 %v666
        %1425 = vmatprep.subr.bf16.mxu0 %v669
        %1426 = vmatpush1.bf16.msra.mxu0 %v668
        %1427 = vmatprep.subr.bf16.mxu0 %v671
        %1428 = vmatpush1.bf16.msra.mxu0 %v670
        %1429 = vmatprep.subr.bf16.mxu0 %v673
        %1430 = vmatpush1.bf16.msra.mxu0 %v672
        %1431 = vmatprep.subr.bf16.mxu0 %v675
        %1432 = vmatpush1.bf16.msra.mxu0 %v674
        %1433 = vmatprep.subr.bf16.mxu0 %v677
        %1434 = vmatpush1.bf16.msra.mxu0 %v676
        %1435 = vmatprep.subr.bf16.mxu0 0
        %1436 = vmatpush1.bf16.msra.mxu0 0
        %1437 = vmatprep.subr.bf16.mxu0 0
        %1438 = vmatpush1.bf16.msra.mxu0 0
        %1439 = vmatprep.subr.bf16.mxu0 0
        %1440 = vmatpush1.bf16.msra.mxu0 0
        %1441 = vmatprep.subr.bf16.mxu0 0
        %1442 = vmatpush1.bf16.msra.mxu0 0
        %1443 = vmatprep.subr.bf16.mxu0 0
        %1444 = vmatpush1.bf16.msra.mxu0 0
        %1445 = vmatprep.subr.bf16.mxu0 0
        %1446 = vmatpush1.bf16.msra.mxu0 0
        %1447 = vmatprep.mubr.bf16.mxu0 %v1410
        %1448 = vmatmul.mubr.bf16.gmra.mrb[0].mxu0 %v1405
        %v1449 = vpop.f32.mrb[0].mxu0
        %v1450 = vadd.f32 0.0, %v1449
        %v1451 = vpop.f32.mrb[0].mxu0
        %v1452 = vadd.f32 0.0, %v1451
        %v1453 = vpop.f32.mrb[0].mxu0
        %v1454 = vadd.f32 0.0, %v1453
        %v1455 = vpop.f32.mrb[0].mxu0
        %v1456 = vadd.f32 0.0, %v1455
        %1457 = vmatprep.mubr.bf16.mxu0 %v1413
        %1458 = vmatmul.mubr.bf16.gmra.mrb[0].mxu0 %v1407
        %v1459 = vpop.f32.mrb[0].mxu0
        %v1460 = vadd.f32 0.0, %v1459
        %v1461 = vpop.f32.mrb[0].mxu0
        %v1462 = vadd.f32 0.0, %v1461
        %v1463 = vpop.f32.mrb[0].mxu0
        %v1464 = vadd.f32 0.0, %v1463
        %v1465 = vpop.f32.mrb[0].mxu0
        %v1466 = vadd.f32 0.0, %v1465
        %1467 = vdwg.mxu0
        %v1468 = vmax.f32 %v1450, %v1452
        %v1469 = vmax.f32 %v1454, %v1456
        %v1470 = vmax.f32 %v1460, %v1462
        %v1471 = vmax.f32 %v1464, %v1466
        %v1476 = vrot.slane %v1468, 1
        %v1477 = vrot.slane %v1469, 1
        %v1478 = vsel %vm507, %v1476, %v1477
        %v1479 = vrot.slane %v1470, 1
        %v1480 = vsel %vm507, %v1477, %v1479
        %v1481 = vrot.slane %v1471, 1
        %v1482 = vsel %vm507, %v1479, %v1481
        %v1487 = vmax.f32 %v1468, %v1478
        %v1488 = vmax.f32 %v1469, %v1480
        %v1489 = vmax.f32 %v1470, %v1482
        %v1490 = vmax.f32 %v1471, %v1481
        %v1491 = vadd.f32 %v1487, %v784
        %v1492 = vadd.f32 %v1488, %v784
        %v1493 = vadd.f32 %v1489, %v784
        %v1494 = vadd.f32 %v1490, %v784
        %v1495 = vmax.f32 %v1491, 0.0
        %v1496 = vmax.f32 %v1492, 0.0
        %v1497 = vmax.f32 %v1493, 0.0
        %v1498 = vmax.f32 %v1494, 0.0
        %v1499 = vpack.c.bf16 %v1496, %v1495
        %v1500 = vpack.c.bf16 %v1498, %v1497
        %v1502 = vand.u32 %v1500, %v806
        %1504 = vmatprep.subr.bf16.mxu0 0
        %1505 = vmatpush1.bf16.msra.mxu0 %v1499
        %1506 = vmatprep.subr.bf16.mxu0 0
        %1507 = vmatpush1.bf16.msra.mxu0 %v1502
        %1508 = vmatprep.subr.bf16.mxu0 0
        %1509 = vmatpush1.bf16.msra.mxu0 0
        %1510 = vmatprep.subr.bf16.mxu0 0
        %1511 = vmatpush1.bf16.msra.mxu0 0
        %1512 = vmatprep.subr.bf16.mxu0 0
        %1513 = vmatpush1.bf16.msra.mxu0 0
        %1514 = vmatprep.subr.bf16.mxu0 0
        %1515 = vmatpush1.bf16.msra.mxu0 0
        %1516 = vmatprep.subr.bf16.mxu0 0
        %1517 = vmatpush1.bf16.msra.mxu0 0
        %1518 = vmatprep.subr.bf16.mxu0 0
        %1519 = vmatpush1.bf16.msra.mxu0 0
        %1520 = vmatprep.subr.bf16.mxu0 0
        %1521 = vmatpush1.bf16.msra.mxu0 0
        %1522 = vmatprep.subr.bf16.mxu0 0
        %1523 = vmatpush1.bf16.msra.mxu0 0
        %1524 = vmatprep.subr.bf16.mxu0 0
        %1525 = vmatpush1.bf16.msra.mxu0 0
        %1526 = vmatprep.subr.bf16.mxu0 0
        %1527 = vmatpush1.bf16.msra.mxu0 0
        %1528 = vmatprep.subr.bf16.mxu0 0
        %1529 = vmatpush1.bf16.msra.mxu0 0
        %1530 = vmatprep.subr.bf16.mxu0 0
        %1531 = vmatpush1.bf16.msra.mxu0 0
        %1532 = vmatprep.subr.bf16.mxu0 0
        %1533 = vmatpush1.bf16.msra.mxu0 0
        %1534 = vmatprep.subr.bf16.mxu0 0
        %1535 = vmatpush1.bf16.msra.mxu0 0
        %1536 = vmatprep.mubr.bf16.mxu0 0
        %1537 = vmatmul.mubr.bf16.gmra.mrb[0].mxu0 %v803
        %v1538 = vpop.f32.mrb[0].mxu0
        %v1539 = vadd.f32 0.0, %v1538
        %v1540 = vpop.f32.mrb[0].mxu0
        %v1541 = vpop.f32.mrb[0].mxu0
        %v1542 = vadd.f32 0.0, %v1541
        %v1543 = vpop.f32.mrb[0].mxu0
        %1544 = vdwg.mxu0
        %v1547 = vrot.slane %v1539, 1
        %v1548 = vrot.slane %v1542, 1
        %v1549 = vsel %vm507, %v1547, %v1548
        %1550 = vrot.lane.b32.xlu0 %v1549, 84
        %v1551 = vpop.permute.xlu0 %1550
        %1552 = vrot.lane.b32.xlu0 %v1548, 84
        %v1553 = vpop.permute.xlu0 %1552
        %v1556 = vrot.slane %v1539, 2
        %v1557 = vrot.slane %v1542, 2
        %v1558 = vsel %vm527, %v1556, %v1557
        %1559 = vrot.lane.b32.xlu0 %v1558, 40
        %v1560 = vpop.permute.xlu0 %1559
        %1561 = vrot.lane.b32.xlu0 %v1557, 40
        %v1562 = vpop.permute.xlu0 %1561
        %v1565 = vrot.slane %v1539, 3
        %v1566 = vrot.slane %v1542, 3
        %v1567 = vsel %vm547, %v1565, %v1566
        %1568 = vrot.lane.b32.xlu0 %v1567, 124
        %v1569 = vpop.permute.xlu0 %1568
        %1570 = vrot.lane.b32.xlu0 %v1566, 124
        %v1571 = vpop.permute.xlu0 %1570
        %v1574 = vrot.slane %v1539, 4
        %v1575 = vrot.slane %v1542, 4
        %v1576 = vsel %vm567, %v1574, %v1575
        %1577 = vrot.lane.b32.xlu0 %v1576, 80
        %v1578 = vpop.permute.xlu0 %1577
        %1579 = vrot.lane.b32.xlu0 %v1575, 80
        %v1580 = vpop.permute.xlu0 %1579
        %v1583 = vsel %vm889, %v1539, %v1551
        %v1584 = vsel %vm889, %v1542, %v1553
        %v1585 = vsel %vm892, %v1551, %v1560
        %v1586 = vsel %vm892, %v1553, %v1562
        %v1587 = vsel %vm895, %v1585, %v1569
        %v1588 = vsel %vm895, %v1586, %v1571
        %v1589 = vsel %vm898, %v1569, %v1578
        %v1590 = vsel %vm898, %v1571, %v1580
        %v1591 = vpack.c.bf16 %v1584, %v1583
        %v1592 = vpack.c.bf16 %v1588, %v1587
        %v1593 = vpack.c.bf16 %v1590, %v1589
        %v1594 = vpack.c.bf16 %v1580, %v1578
        %v1596 = vsel %vm1170, %v1594, 0
        %1598 = vmatprep.subr.bf16.mxu0 %v1065
        %1599 = vmatpush1.bf16.msra.mxu0 %v1064
        %1600 = vmatprep.subr.bf16.mxu0 %v1067
        %1601 = vmatpush1.bf16.msra.mxu0 %v1066
        %1602 = vmatprep.subr.bf16.mxu0 %v1069
        %1603 = vmatpush1.bf16.msra.mxu0 %v1068
        %1604 = vmatprep.subr.bf16.mxu0 %v1071
        %1605 = vmatpush1.bf16.msra.mxu0 %v1070
        %1606 = vmatprep.subr.bf16.mxu0 %v1073
        %1607 = vmatpush1.bf16.msra.mxu0 %v1072
        %1608 = vmatprep.subr.bf16.mxu0 %v1075
        %1609 = vmatpush1.bf16.msra.mxu0 %v1074
        %1610 = vmatprep.subr.bf16.mxu0 %v1077
        %1611 = vmatpush1.bf16.msra.mxu0 %v1076
        %1612 = vmatprep.subr.bf16.mxu0 %v1079
        %1613 = vmatpush1.bf16.msra.mxu0 %v1078
        %1614 = vmatprep.subr.bf16.mxu0 %v1081
        %1615 = vmatpush1.bf16.msra.mxu0 %v1080
        %1616 = vmatprep.subr.bf16.mxu0 %v1083
        %1617 = vmatpush1.bf16.msra.mxu0 %v1082
        %1618 = vmatprep.subr.bf16.mxu0 %v1085
        %1619 = vmatpush1.bf16.msra.mxu0 %v1084
        %1620 = vmatprep.subr.bf16.mxu0 %v1087
        %1621 = vmatpush1.bf16.msra.mxu0 %v1086
        %1622 = vmatprep.subr.bf16.mxu0 %v1089
        %1623 = vmatpush1.bf16.msra.mxu0 %v1088
        %1624 = vmatprep.subr.bf16.mxu0 %v1091
        %1625 = vmatpush1.bf16.msra.mxu0 %v1090
        %1626 = vmatprep.subr.bf16.mxu0 %v1093
        %1627 = vmatpush1.bf16.msra.mxu0 %v1092
        %1628 = vmatprep.subr.bf16.mxu0 %v1095
        %1629 = vmatpush1.bf16.msra.mxu0 %v1094
        %1630 = vmatprep.mubr.bf16.mxu0 %v1592
        %1631 = vmatmul.mubr.bf16.gmra.mrb[0].mxu0 %v1591
        %v1632 = vpop.f32.mrb[0].mxu0
        %v1633 = vadd.f32 0.0, %v1632
        %v1634 = vpop.f32.mrb[0].mxu0
        %v1635 = vadd.f32 0.0, %v1634
        %v1636 = vpop.f32.mrb[0].mxu0
        %v1637 = vadd.f32 0.0, %v1636
        %v1638 = vpop.f32.mrb[0].mxu0
        %v1639 = vadd.f32 0.0, %v1638
        %1640 = vdwg.mxu0
        %1641 = vmatprep.subr.bf16.mxu0 %v1097
        %1642 = vmatpush1.bf16.msra.mxu0 %v1096
        %1643 = vmatprep.subr.bf16.mxu0 %v1099
        %1644 = vmatpush1.bf16.msra.mxu0 %v1098
        %1645 = vmatprep.subr.bf16.mxu0 %v1101
        %1646 = vmatpush1.bf16.msra.mxu0 %v1100
        %1647 = vmatprep.subr.bf16.mxu0 %v1103
        %1648 = vmatpush1.bf16.msra.mxu0 %v1102
        %1649 = vmatprep.subr.bf16.mxu0 %v1105
        %1650 = vmatpush1.bf16.msra.mxu0 %v1104
        %1651 = vmatprep.subr.bf16.mxu0 %v1107
        %1652 = vmatpush1.bf16.msra.mxu0 %v1106
        %1653 = vmatprep.subr.bf16.mxu0 %v1109
        %1654 = vmatpush1.bf16.msra.mxu0 %v1108
        %1655 = vmatprep.subr.bf16.mxu0 %v1111
        %1656 = vmatpush1.bf16.msra.mxu0 %v1110
        %1657 = vmatprep.subr.bf16.mxu0 %v1113
        %1658 = vmatpush1.bf16.msra.mxu0 %v1112
        %1659 = vmatprep.subr.bf16.mxu0 %v1115
        %1660 = vmatpush1.bf16.msra.mxu0 %v1114
        %1661 = vmatprep.subr.bf16.mxu0 %v1179
        %1662 = vmatpush1.bf16.msra.mxu0 %v1176
        %1663 = vmatprep.subr.bf16.mxu0 0
        %1664 = vmatpush1.bf16.msra.mxu0 0
        %1665 = vmatprep.subr.bf16.mxu0 0
        %1666 = vmatpush1.bf16.msra.mxu0 0
        %1667 = vmatprep.subr.bf16.mxu0 0
        %1668 = vmatpush1.bf16.msra.mxu0 0
        %1669 = vmatprep.subr.bf16.mxu0 0
        %1670 = vmatpush1.bf16.msra.mxu0 0
        %1671 = vmatprep.subr.bf16.mxu0 0
        %1672 = vmatpush1.bf16.msra.mxu0 0
        %1673 = vmatprep.mubr.bf16.mxu0 %v1596
        %1674 = vmatmul.mubr.bf16.gmra.mrb[0].mxu0 %v1593
        %v1675 = vpop.f32.mrb[0].mxu0
        %v1676 = vadd.f32 %v1633, %v1675
        %v1677 = vpop.f32.mrb[0].mxu0
        %v1678 = vadd.f32 %v1635, %v1677
        %v1679 = vpop.f32.mrb[0].mxu0
        %v1680 = vadd.f32 %v1637, %v1679
        %v1681 = vpop.f32.mrb[0].mxu0
        %v1682 = vadd.f32 %v1639, %v1681
        %1683 = vdwg.mxu0
        %v1684 = vmax.f32 %v1676, %v1678
        %v1685 = vmax.f32 %v1680, %v1682
        %v1688 = vrot.slane %v1684, 1
        %v1689 = vrot.slane %v1685, 1
        %v1690 = vsel %vm507, %v1688, %v1689
        %v1693 = vmax.f32 %v1684, %v1690
        %v1694 = vmax.f32 %v1685, %v1689
        %v1695 = vadd.f32 %v1693, %v494
        %v1696 = vmax.f32 %v1695, 0.0
        %v1697 = vadd.f32 %v1693, %v1284
        %v1698 = vmax.f32 %v1697, 0.0
        %v1699 = vadd.f32 %v1694, %v494
        %v1700 = vmax.f32 %v1699, 0.0
        %v1702 = vrot.slane %v1698, 2
        %1703 = vrot.lane.b32.xlu0 %v1702, 80
        %v1704 = vpop.permute.xlu0 %1703
        %v1706 = vrot.slane %v1698, 4
        %1707 = vrot.lane.b32.xlu0 %v1706, 32
        %v1708 = vpop.permute.xlu0 %1707
        %v1710 = vrot.slane %v1698, 6
        %1711 = vrot.lane.b32.xlu0 %v1710, 112
        %v1712 = vpop.permute.xlu0 %1711
        %1715 = vrot.lane.b32.xlu0 %v1700, 64
        %v1716 = vpop.permute.xlu0 %1715
        %v1718 = vsel %vm898, %v1696, %v1704
        %v1719 = vsel %vm579, %v1704, %v1708
        %v1720 = vsel %vm1309, %v1719, %v1712
        %v1721 = vsel %vm584, %v1712, %v1716
        %s1722 = scalar_lea.vmem %s415, 32
        %v1723 = vld [vmem:[%s1722] sm:$0xf]
        %v1724 = vld [vmem:[%s1722 + $0x4] sm:$0xf]
        %v1725 = vld [vmem:[%s1722 + $0x8] sm:$0xf]
        %v1726 = vld [vmem:[%s1722 + $0xc] sm:$0xf]
        %v1727 = vunpack.c.l.bf16 %v1723
        %v1728 = vunpack.c.l.bf16 %v1724
        %v1729 = vunpack.c.l.bf16 %v1725
        %v1730 = vunpack.c.l.bf16 %v1726
        %v1735 = vrot.slane %v1727, 1
        %v1736 = vrot.slane %v1728, 1
        %v1737 = vsel %vm507, %v1735, %v1736
        %v1738 = vrot.slane %v1729, 1
        %v1739 = vsel %vm507, %v1736, %v1738
        %v1740 = vrot.slane %v1730, 1
        %v1741 = vsel %vm507, %v1738, %v1740
        %1742 = vrot.lane.b32.xlu0 %v1737, 32
        %v1743 = vpop.permute.xlu0 %1742
        %1744 = vrot.lane.b32.xlu0 %v1739, 32
        %v1745 = vpop.permute.xlu0 %1744
        %1746 = vrot.lane.b32.xlu0 %v1741, 32
        %v1747 = vpop.permute.xlu0 %1746
        %1748 = vrot.lane.b32.xlu0 %v1740, 32
        %v1749 = vpop.permute.xlu0 %1748
        %v1754 = vrot.slane %v1727, 2
        %v1755 = vrot.slane %v1728, 2
        %v1756 = vsel %vm527, %v1754, %v1755
        %v1757 = vrot.slane %v1729, 2
        %v1758 = vsel %vm527, %v1755, %v1757
        %v1759 = vrot.slane %v1730, 2
        %v1760 = vsel %vm527, %v1757, %v1759
        %1761 = vrot.lane.b32.xlu0 %v1756, 64
        %v1762 = vpop.permute.xlu0 %1761
        %1763 = vrot.lane.b32.xlu0 %v1758, 64
        %v1764 = vpop.permute.xlu0 %1763
        %1765 = vrot.lane.b32.xlu0 %v1760, 64
        %v1766 = vpop.permute.xlu0 %1765
        %1767 = vrot.lane.b32.xlu0 %v1759, 64
        %v1768 = vpop.permute.xlu0 %1767
        %v1773 = vrot.slane %v1727, 3
        %v1774 = vrot.slane %v1728, 3
        %v1775 = vsel %vm547, %v1773, %v1774
        %v1776 = vrot.slane %v1729, 3
        %v1777 = vsel %vm547, %v1774, %v1776
        %v1778 = vrot.slane %v1730, 3
        %v1779 = vsel %vm547, %v1776, %v1778
        %1780 = vrot.lane.b32.xlu0 %v1775, 96
        %v1781 = vpop.permute.xlu0 %1780
        %1782 = vrot.lane.b32.xlu0 %v1777, 96
        %v1783 = vpop.permute.xlu0 %1782
        %1784 = vrot.lane.b32.xlu0 %v1779, 96
        %v1785 = vpop.permute.xlu0 %1784
        %1786 = vrot.lane.b32.xlu0 %v1778, 96
        %v1787 = vpop.permute.xlu0 %1786
        %v1792 = vrot.slane %v1727, 4
        %v1793 = vrot.slane %v1728, 4
        %v1794 = vsel %vm567, %v1792, %v1793
        %v1795 = vrot.slane %v1729, 4
        %v1796 = vsel %vm567, %v1793, %v1795
        %v1797 = vrot.slane %v1730, 4
        %v1798 = vsel %vm567, %v1795, %v1797
        %v1803 = vsel %vm579, %v1727, %v1743
        %v1804 = vsel %vm579, %v1728, %v1745
        %v1805 = vsel %vm579, %v1729, %v1747
        %v1806 = vsel %vm579, %v1730, %v1749
        %v1807 = vsel %vm584, %v1803, %v1762
        %v1808 = vsel %vm584, %v1804, %v1764
        %v1809 = vsel %vm584, %v1805, %v1766
        %v1810 = vsel %vm584, %v1806, %v1768
        %v1811 = vsel %vm589, %v1807, %v1781
        %v1812 = vsel %vm589, %v1808, %v1783
        %v1813 = vsel %vm589, %v1809, %v1785
        %v1814 = vsel %vm589, %v1810, %v1787
        %v1815 = vpack.c.bf16 %v1812, %v1811
        %v1816 = vpack.c.bf16 %v1796, %v1794
        %v1817 = vpack.c.bf16 %v1814, %v1813
        %v1818 = vpack.c.bf16 %v1797, %v1798
        %v1820 = vsel %vm579, %v1816, 0
        %v1823 = vsel %vm579, %v1818, 0
        %1825 = vmatprep.subr.bf16.mxu0 %v659
        %1826 = vmatpush1.bf16.msra.mxu0 %v658
        %1827 = vmatprep.subr.bf16.mxu0 %v661
        %1828 = vmatpush1.bf16.msra.mxu0 %v660
        %1829 = vmatprep.subr.bf16.mxu0 %v663
        %1830 = vmatpush1.bf16.msra.mxu0 %v662
        %1831 = vmatprep.subr.bf16.mxu0 %v665
        %1832 = vmatpush1.bf16.msra.mxu0 %v664
        %1833 = vmatprep.subr.bf16.mxu0 %v667
        %1834 = vmatpush1.bf16.msra.mxu0 %v666
        %1835 = vmatprep.subr.bf16.mxu0 %v669
        %1836 = vmatpush1.bf16.msra.mxu0 %v668
        %1837 = vmatprep.subr.bf16.mxu0 %v671
        %1838 = vmatpush1.bf16.msra.mxu0 %v670
        %1839 = vmatprep.subr.bf16.mxu0 %v673
        %1840 = vmatpush1.bf16.msra.mxu0 %v672
        %1841 = vmatprep.subr.bf16.mxu0 %v675
        %1842 = vmatpush1.bf16.msra.mxu0 %v674
        %1843 = vmatprep.subr.bf16.mxu0 %v677
        %1844 = vmatpush1.bf16.msra.mxu0 %v676
        %1845 = vmatprep.subr.bf16.mxu0 0
        %1846 = vmatpush1.bf16.msra.mxu0 0
        %1847 = vmatprep.subr.bf16.mxu0 0
        %1848 = vmatpush1.bf16.msra.mxu0 0
        %1849 = vmatprep.subr.bf16.mxu0 0
        %1850 = vmatpush1.bf16.msra.mxu0 0
        %1851 = vmatprep.subr.bf16.mxu0 0
        %1852 = vmatpush1.bf16.msra.mxu0 0
        %1853 = vmatprep.subr.bf16.mxu0 0
        %1854 = vmatpush1.bf16.msra.mxu0 0
        %1855 = vmatprep.subr.bf16.mxu0 0
        %1856 = vmatpush1.bf16.msra.mxu0 0
        %1857 = vmatprep.mubr.bf16.mxu0 %v1820
        %1858 = vmatmul.mubr.bf16.gmra.mrb[0].mxu0 %v1815
        %v1859 = vpop.f32.mrb[0].mxu0
        %v1860 = vadd.f32 0.0, %v1859
        %v1861 = vpop.f32.mrb[0].mxu0
        %v1862 = vadd.f32 0.0, %v1861
        %v1863 = vpop.f32.mrb[0].mxu0
        %v1864 = vadd.f32 0.0, %v1863
        %v1865 = vpop.f32.mrb[0].mxu0
        %v1866 = vadd.f32 0.0, %v1865
        %1867 = vmatprep.mubr.bf16.mxu0 %v1823
        %1868 = vmatmul.mubr.bf16.gmra.mrb[0].mxu0 %v1817
        %v1869 = vpop.f32.mrb[0].mxu0
        %v1870 = vadd.f32 0.0, %v1869
        %v1871 = vpop.f32.mrb[0].mxu0
        %v1872 = vadd.f32 0.0, %v1871
        %v1873 = vpop.f32.mrb[0].mxu0
        %v1874 = vadd.f32 0.0, %v1873
        %v1875 = vpop.f32.mrb[0].mxu0
        %v1876 = vadd.f32 0.0, %v1875
        %1877 = vdwg.mxu0
        %v1878 = vmax.f32 %v1860, %v1862
        %v1879 = vmax.f32 %v1864, %v1866
        %v1880 = vmax.f32 %v1870, %v1872
        %v1881 = vmax.f32 %v1874, %v1876
        %v1886 = vrot.slane %v1878, 1
        %v1887 = vrot.slane %v1879, 1
        %v1888 = vsel %vm507, %v1886, %v1887
        %v1889 = vrot.slane %v1880, 1
        %v1890 = vsel %vm507, %v1887, %v1889
        %v1891 = vrot.slane %v1881, 1
        %v1892 = vsel %vm507, %v1889, %v1891
        %v1897 = vmax.f32 %v1878, %v1888
        %v1898 = vmax.f32 %v1879, %v1890
        %v1899 = vmax.f32 %v1880, %v1892
        %v1900 = vmax.f32 %v1881, %v1891
        %v1901 = vadd.f32 %v1897, %v784
        %v1902 = vadd.f32 %v1898, %v784
        %v1903 = vadd.f32 %v1899, %v784
        %v1904 = vadd.f32 %v1900, %v784
        %v1905 = vmax.f32 %v1901, 0.0
        %v1906 = vmax.f32 %v1902, 0.0
        %v1907 = vmax.f32 %v1903, 0.0
        %v1908 = vmax.f32 %v1904, 0.0
        %v1909 = vpack.c.bf16 %v1906, %v1905
        %v1910 = vpack.c.bf16 %v1908, %v1907
        %v1912 = vand.u32 %v1910, %v806
        %1914 = vmatprep.subr.bf16.mxu0 0
        %1915 = vmatpush1.bf16.msra.mxu0 %v1909
        %1916 = vmatprep.subr.bf16.mxu0 0
        %1917 = vmatpush1.bf16.msra.mxu0 %v1912
        %1918 = vmatprep.subr.bf16.mxu0 0
        %1919 = vmatpush1.bf16.msra.mxu0 0
        %1920 = vmatprep.subr.bf16.mxu0 0
        %1921 = vmatpush1.bf16.msra.mxu0 0
        %1922 = vmatprep.subr.bf16.mxu0 0
        %1923 = vmatpush1.bf16.msra.mxu0 0
        %1924 = vmatprep.subr.bf16.mxu0 0
        %1925 = vmatpush1.bf16.msra.mxu0 0
        %1926 = vmatprep.subr.bf16.mxu0 0
        %1927 = vmatpush1.bf16.msra.mxu0 0
        %1928 = vmatprep.subr.bf16.mxu0 0
        %1929 = vmatpush1.bf16.msra.mxu0 0
        %1930 = vmatprep.subr.bf16.mxu0 0
        %1931 = vmatpush1.bf16.msra.mxu0 0
        %1932 = vmatprep.subr.bf16.mxu0 0
        %1933 = vmatpush1.bf16.msra.mxu0 0
        %1934 = vmatprep.subr.bf16.mxu0 0
        %1935 = vmatpush1.bf16.msra.mxu0 0
        %1936 = vmatprep.subr.bf16.mxu0 0
        %1937 = vmatpush1.bf16.msra.mxu0 0
        %1938 = vmatprep.subr.bf16.mxu0 0
        %1939 = vmatpush1.bf16.msra.mxu0 0
        %1940 = vmatprep.subr.bf16.mxu0 0
        %1941 = vmatpush1.bf16.msra.mxu0 0
        %1942 = vmatprep.subr.bf16.mxu0 0
        %1943 = vmatpush1.bf16.msra.mxu0 0
        %1944 = vmatprep.subr.bf16.mxu0 0
        %1945 = vmatpush1.bf16.msra.mxu0 0
        %1946 = vmatprep.mubr.bf16.mxu0 0
        %1947 = vmatmul.mubr.bf16.gmra.mrb[0].mxu0 %v803
        %v1948 = vpop.f32.mrb[0].mxu0
        %v1949 = vadd.f32 0.0, %v1948
        %v1950 = vpop.f32.mrb[0].mxu0
        %v1951 = vpop.f32.mrb[0].mxu0
        %v1952 = vadd.f32 0.0, %v1951
        %v1953 = vpop.f32.mrb[0].mxu0
        %1954 = vdwg.mxu0
        %v1957 = vrot.slane %v1949, 1
        %v1958 = vrot.slane %v1952, 1
        %v1959 = vsel %vm507, %v1957, %v1958
        %1960 = vrot.lane.b32.xlu0 %v1959, 84
        %v1961 = vpop.permute.xlu0 %1960
        %1962 = vrot.lane.b32.xlu0 %v1958, 84
        %v1963 = vpop.permute.xlu0 %1962
        %v1966 = vrot.slane %v1949, 2
        %v1967 = vrot.slane %v1952, 2
        %v1968 = vsel %vm527, %v1966, %v1967
        %1969 = vrot.lane.b32.xlu0 %v1968, 40
        %v1970 = vpop.permute.xlu0 %1969
        %1971 = vrot.lane.b32.xlu0 %v1967, 40
        %v1972 = vpop.permute.xlu0 %1971
        %v1975 = vrot.slane %v1949, 3
        %v1976 = vrot.slane %v1952, 3
        %v1977 = vsel %vm547, %v1975, %v1976
        %1978 = vrot.lane.b32.xlu0 %v1977, 124
        %v1979 = vpop.permute.xlu0 %1978
        %1980 = vrot.lane.b32.xlu0 %v1976, 124
        %v1981 = vpop.permute.xlu0 %1980
        %v1984 = vrot.slane %v1949, 4
        %v1985 = vrot.slane %v1952, 4
        %v1986 = vsel %vm567, %v1984, %v1985
        %1987 = vrot.lane.b32.xlu0 %v1986, 80
        %v1988 = vpop.permute.xlu0 %1987
        %1989 = vrot.lane.b32.xlu0 %v1985, 80
        %v1990 = vpop.permute.xlu0 %1989
        %v1993 = vsel %vm889, %v1949, %v1961
        %v1994 = vsel %vm889, %v1952, %v1963
        %v1995 = vsel %vm892, %v1961, %v1970
        %v1996 = vsel %vm892, %v1963, %v1972
        %v1997 = vsel %vm895, %v1995, %v1979
        %v1998 = vsel %vm895, %v1996, %v1981
        %v1999 = vsel %vm898, %v1979, %v1988
        %v2000 = vsel %vm898, %v1981, %v1990
        %v2001 = vpack.c.bf16 %v1994, %v1993
        %v2002 = vpack.c.bf16 %v1998, %v1997
        %v2003 = vpack.c.bf16 %v2000, %v1999
        %v2004 = vpack.c.bf16 %v1990, %v1988
        %v2006 = vsel %vm1170, %v2004, 0
        %2008 = vmatprep.subr.bf16.mxu0 %v1065
        %2009 = vmatpush1.bf16.msra.mxu0 %v1064
        %2010 = vmatprep.subr.bf16.mxu0 %v1067
        %2011 = vmatpush1.bf16.msra.mxu0 %v1066
        %2012 = vmatprep.subr.bf16.mxu0 %v1069
        %2013 = vmatpush1.bf16.msra.mxu0 %v1068
        %2014 = vmatprep.subr.bf16.mxu0 %v1071
        %2015 = vmatpush1.bf16.msra.mxu0 %v1070
        %2016 = vmatprep.subr.bf16.mxu0 %v1073
        %2017 = vmatpush1.bf16.msra.mxu0 %v1072
        %2018 = vmatprep.subr.bf16.mxu0 %v1075
        %2019 = vmatpush1.bf16.msra.mxu0 %v1074
        %2020 = vmatprep.subr.bf16.mxu0 %v1077
        %2021 = vmatpush1.bf16.msra.mxu0 %v1076
        %2022 = vmatprep.subr.bf16.mxu0 %v1079
        %2023 = vmatpush1.bf16.msra.mxu0 %v1078
        %2024 = vmatprep.subr.bf16.mxu0 %v1081
        %2025 = vmatpush1.bf16.msra.mxu0 %v1080
        %2026 = vmatprep.subr.bf16.mxu0 %v1083
        %2027 = vmatpush1.bf16.msra.mxu0 %v1082
        %2028 = vmatprep.subr.bf16.mxu0 %v1085
        %2029 = vmatpush1.bf16.msra.mxu0 %v1084
        %2030 = vmatprep.subr.bf16.mxu0 %v1087
        %2031 = vmatpush1.bf16.msra.mxu0 %v1086
        %2032 = vmatprep.subr.bf16.mxu0 %v1089
        %2033 = vmatpush1.bf16.msra.mxu0 %v1088
        %2034 = vmatprep.subr.bf16.mxu0 %v1091
        %2035 = vmatpush1.bf16.msra.mxu0 %v1090
        %2036 = vmatprep.subr.bf16.mxu0 %v1093
        %2037 = vmatpush1.bf16.msra.mxu0 %v1092
        %2038 = vmatprep.subr.bf16.mxu0 %v1095
        %2039 = vmatpush1.bf16.msra.mxu0 %v1094
        %2040 = vmatprep.mubr.bf16.mxu0 %v2002
        %2041 = vmatmul.mubr.bf16.gmra.mrb[0].mxu0 %v2001
        %v2042 = vpop.f32.mrb[0].mxu0
        %v2043 = vadd.f32 0.0, %v2042
        %v2044 = vpop.f32.mrb[0].mxu0
        %v2045 = vadd.f32 0.0, %v2044
        %v2046 = vpop.f32.mrb[0].mxu0
        %v2047 = vadd.f32 0.0, %v2046
        %v2048 = vpop.f32.mrb[0].mxu0
        %v2049 = vadd.f32 0.0, %v2048
        %2050 = vdwg.mxu0
        %2051 = vmatprep.subr.bf16.mxu0 %v1097
        %2052 = vmatpush1.bf16.msra.mxu0 %v1096
        %2053 = vmatprep.subr.bf16.mxu0 %v1099
        %2054 = vmatpush1.bf16.msra.mxu0 %v1098
        %2055 = vmatprep.subr.bf16.mxu0 %v1101
        %2056 = vmatpush1.bf16.msra.mxu0 %v1100
        %2057 = vmatprep.subr.bf16.mxu0 %v1103
        %2058 = vmatpush1.bf16.msra.mxu0 %v1102
        %2059 = vmatprep.subr.bf16.mxu0 %v1105
        %2060 = vmatpush1.bf16.msra.mxu0 %v1104
        %2061 = vmatprep.subr.bf16.mxu0 %v1107
        %2062 = vmatpush1.bf16.msra.mxu0 %v1106
        %2063 = vmatprep.subr.bf16.mxu0 %v1109
        %2064 = vmatpush1.bf16.msra.mxu0 %v1108
        %2065 = vmatprep.subr.bf16.mxu0 %v1111
        %2066 = vmatpush1.bf16.msra.mxu0 %v1110
        %2067 = vmatprep.subr.bf16.mxu0 %v1113
        %2068 = vmatpush1.bf16.msra.mxu0 %v1112
        %2069 = vmatprep.subr.bf16.mxu0 %v1115
        %2070 = vmatpush1.bf16.msra.mxu0 %v1114
        %2071 = vmatprep.subr.bf16.mxu0 %v1179
        %2072 = vmatpush1.bf16.msra.mxu0 %v1176
        %2073 = vmatprep.subr.bf16.mxu0 0
        %2074 = vmatpush1.bf16.msra.mxu0 0
        %2075 = vmatprep.subr.bf16.mxu0 0
        %2076 = vmatpush1.bf16.msra.mxu0 0
        %2077 = vmatprep.subr.bf16.mxu0 0
        %2078 = vmatpush1.bf16.msra.mxu0 0
        %2079 = vmatprep.subr.bf16.mxu0 0
        %2080 = vmatpush1.bf16.msra.mxu0 0
        %2081 = vmatprep.subr.bf16.mxu0 0
        %2082 = vmatpush1.bf16.msra.mxu0 0
        %2083 = vmatprep.mubr.bf16.mxu0 %v2006
        %2084 = vmatmul.mubr.bf16.gmra.mrb[0].mxu0 %v2003
        %v2085 = vpop.f32.mrb[0].mxu0
        %v2086 = vadd.f32 %v2043, %v2085
        %v2087 = vpop.f32.mrb[0].mxu0
        %v2088 = vadd.f32 %v2045, %v2087
        %v2089 = vpop.f32.mrb[0].mxu0
        %v2090 = vadd.f32 %v2047, %v2089
        %v2091 = vpop.f32.mrb[0].mxu0
        %v2092 = vadd.f32 %v2049, %v2091
        %2093 = vdwg.mxu0
        %v2094 = vmax.f32 %v2086, %v2088
        %v2095 = vmax.f32 %v2090, %v2092
        %v2098 = vrot.slane %v2094, 1
        %v2099 = vrot.slane %v2095, 1
        %v2100 = vsel %vm507, %v2098, %v2099
        %v2103 = vmax.f32 %v2094, %v2100
        %v2104 = vmax.f32 %v2095, %v2099
        %v2105 = vadd.f32 %v2103, %v494
        %v2106 = vmax.f32 %v2105, 0.0
        %v2107 = vadd.f32 %v2103, %v1284
        %v2108 = vmax.f32 %v2107, 0.0
        %v2109 = vadd.f32 %v2104, %v494
        %v2110 = vmax.f32 %v2109, 0.0
        %v2112 = vrot.slane %v2108, 2
        %2113 = vrot.lane.b32.xlu0 %v2112, 80
        %v2114 = vpop.permute.xlu0 %2113
        %v2116 = vrot.slane %v2108, 4
        %2117 = vrot.lane.b32.xlu0 %v2116, 32
        %v2118 = vpop.permute.xlu0 %2117
        %v2120 = vrot.slane %v2108, 6
        %2121 = vrot.lane.b32.xlu0 %v2120, 112
        %v2122 = vpop.permute.xlu0 %2121
        %2125 = vrot.lane.b32.xlu0 %v2110, 64
        %v2126 = vpop.permute.xlu0 %2125
        %v2128 = vsel %vm898, %v2106, %v2114
        %v2129 = vsel %vm579, %v2114, %v2118
        %v2130 = vsel %vm1309, %v2129, %v2122
        %v2131 = vsel %vm584, %v2122, %v2126
        %s2132 = scalar_lea.vmem %s415, 48
        %v2133 = vld [vmem:[%s2132] sm:$0xf]
        %v2134 = vld [vmem:[%s2132 + $0x4] sm:$0xf]
        %v2135 = vld [vmem:[%s2132 + $0x8] sm:$0xf]
        %v2136 = vld [vmem:[%s2132 + $0xc] sm:$0xf]
        %v2137 = vunpack.c.l.bf16 %v2133
        %v2138 = vunpack.c.l.bf16 %v2134
        %v2139 = vunpack.c.l.bf16 %v2135
        %v2140 = vunpack.c.l.bf16 %v2136
        %v2145 = vrot.slane %v2137, 1
        %v2146 = vrot.slane %v2138, 1
        %v2147 = vsel %vm507, %v2145, %v2146
        %v2148 = vrot.slane %v2139, 1
        %v2149 = vsel %vm507, %v2146, %v2148
        %v2150 = vrot.slane %v2140, 1
        %v2151 = vsel %vm507, %v2148, %v2150
        %2152 = vrot.lane.b32.xlu0 %v2147, 32
        %v2153 = vpop.permute.xlu0 %2152
        %2154 = vrot.lane.b32.xlu0 %v2149, 32
        %v2155 = vpop.permute.xlu0 %2154
        %2156 = vrot.lane.b32.xlu0 %v2151, 32
        %v2157 = vpop.permute.xlu0 %2156
        %2158 = vrot.lane.b32.xlu0 %v2150, 32
        %v2159 = vpop.permute.xlu0 %2158
        %v2164 = vrot.slane %v2137, 2
        %v2165 = vrot.slane %v2138, 2
        %v2166 = vsel %vm527, %v2164, %v2165
        %v2167 = vrot.slane %v2139, 2
        %v2168 = vsel %vm527, %v2165, %v2167
        %v2169 = vrot.slane %v2140, 2
        %v2170 = vsel %vm527, %v2167, %v2169
        %2171 = vrot.lane.b32.xlu0 %v2166, 64
        %v2172 = vpop.permute.xlu0 %2171
        %2173 = vrot.lane.b32.xlu0 %v2168, 64
        %v2174 = vpop.permute.xlu0 %2173
        %2175 = vrot.lane.b32.xlu0 %v2170, 64
        %v2176 = vpop.permute.xlu0 %2175
        %2177 = vrot.lane.b32.xlu0 %v2169, 64
        %v2178 = vpop.permute.xlu0 %2177
        %v2183 = vrot.slane %v2137, 3
        %v2184 = vrot.slane %v2138, 3
        %v2185 = vsel %vm547, %v2183, %v2184
        %v2186 = vrot.slane %v2139, 3
        %v2187 = vsel %vm547, %v2184, %v2186
        %v2188 = vrot.slane %v2140, 3
        %v2189 = vsel %vm547, %v2186, %v2188
        %2190 = vrot.lane.b32.xlu0 %v2185, 96
        %v2191 = vpop.permute.xlu0 %2190
        %2192 = vrot.lane.b32.xlu0 %v2187, 96
        %v2193 = vpop.permute.xlu0 %2192
        %2194 = vrot.lane.b32.xlu0 %v2189, 96
        %v2195 = vpop.permute.xlu0 %2194
        %2196 = vrot.lane.b32.xlu0 %v2188, 96
        %v2197 = vpop.permute.xlu0 %2196
        %v2202 = vrot.slane %v2137, 4
        %v2203 = vrot.slane %v2138, 4
        %v2204 = vsel %vm567, %v2202, %v2203
        %v2205 = vrot.slane %v2139, 4
        %v2206 = vsel %vm567, %v2203, %v2205
        %v2207 = vrot.slane %v2140, 4
        %v2208 = vsel %vm567, %v2205, %v2207
        %v2213 = vsel %vm579, %v2137, %v2153
        %v2214 = vsel %vm579, %v2138, %v2155
        %v2215 = vsel %vm579, %v2139, %v2157
        %v2216 = vsel %vm579, %v2140, %v2159
        %v2217 = vsel %vm584, %v2213, %v2172
        %v2218 = vsel %vm584, %v2214, %v2174
        %v2219 = vsel %vm584, %v2215, %v2176
        %v2220 = vsel %vm584, %v2216, %v2178
        %v2221 = vsel %vm589, %v2217, %v2191
        %v2222 = vsel %vm589, %v2218, %v2193
        %v2223 = vsel %vm589, %v2219, %v2195
        %v2224 = vsel %vm589, %v2220, %v2197
        %v2225 = vpack.c.bf16 %v2222, %v2221
        %v2226 = vpack.c.bf16 %v2206, %v2204
        %v2227 = vpack.c.bf16 %v2224, %v2223
        %v2228 = vpack.c.bf16 %v2207, %v2208
        %v2230 = vsel %vm579, %v2226, 0
        %v2233 = vsel %vm579, %v2228, 0
        %2235 = vmatprep.subr.bf16.mxu0 %v659
        %2236 = vmatpush1.bf16.msra.mxu0 %v658
        %2237 = vmatprep.subr.bf16.mxu0 %v661
        %2238 = vmatpush1.bf16.msra.mxu0 %v660
        %2239 = vmatprep.subr.bf16.mxu0 %v663
        %2240 = vmatpush1.bf16.msra.mxu0 %v662
        %2241 = vmatprep.subr.bf16.mxu0 %v665
        %2242 = vmatpush1.bf16.msra.mxu0 %v664
        %2243 = vmatprep.subr.bf16.mxu0 %v667
        %2244 = vmatpush1.bf16.msra.mxu0 %v666
        %2245 = vmatprep.subr.bf16.mxu0 %v669
        %2246 = vmatpush1.bf16.msra.mxu0 %v668
        %2247 = vmatprep.subr.bf16.mxu0 %v671
        %2248 = vmatpush1.bf16.msra.mxu0 %v670
        %2249 = vmatprep.subr.bf16.mxu0 %v673
        %2250 = vmatpush1.bf16.msra.mxu0 %v672
        %2251 = vmatprep.subr.bf16.mxu0 %v675
        %2252 = vmatpush1.bf16.msra.mxu0 %v674
        %2253 = vmatprep.subr.bf16.mxu0 %v677
        %2254 = vmatpush1.bf16.msra.mxu0 %v676
        %2255 = vmatprep.subr.bf16.mxu0 0
        %2256 = vmatpush1.bf16.msra.mxu0 0
        %2257 = vmatprep.subr.bf16.mxu0 0
        %2258 = vmatpush1.bf16.msra.mxu0 0
        %2259 = vmatprep.subr.bf16.mxu0 0
        %2260 = vmatpush1.bf16.msra.mxu0 0
        %2261 = vmatprep.subr.bf16.mxu0 0
        %2262 = vmatpush1.bf16.msra.mxu0 0
        %2263 = vmatprep.subr.bf16.mxu0 0
        %2264 = vmatpush1.bf16.msra.mxu0 0
        %2265 = vmatprep.subr.bf16.mxu0 0
        %2266 = vmatpush1.bf16.msra.mxu0 0
        %2267 = vmatprep.mubr.bf16.mxu0 %v2230
        %2268 = vmatmul.mubr.bf16.gmra.mrb[0].mxu0 %v2225
        %v2269 = vpop.f32.mrb[0].mxu0
        %v2270 = vadd.f32 0.0, %v2269
        %v2271 = vpop.f32.mrb[0].mxu0
        %v2272 = vadd.f32 0.0, %v2271
        %v2273 = vpop.f32.mrb[0].mxu0
        %v2274 = vadd.f32 0.0, %v2273
        %v2275 = vpop.f32.mrb[0].mxu0
        %v2276 = vadd.f32 0.0, %v2275
        %2277 = vmatprep.mubr.bf16.mxu0 %v2233
        %2278 = vmatmul.mubr.bf16.gmra.mrb[0].mxu0 %v2227
        %v2279 = vpop.f32.mrb[0].mxu0
        %v2280 = vadd.f32 0.0, %v2279
        %v2281 = vpop.f32.mrb[0].mxu0
        %v2282 = vadd.f32 0.0, %v2281
        %v2283 = vpop.f32.mrb[0].mxu0
        %v2284 = vadd.f32 0.0, %v2283
        %v2285 = vpop.f32.mrb[0].mxu0
        %v2286 = vadd.f32 0.0, %v2285
        %2287 = vdwg.mxu0
        %v2288 = vmax.f32 %v2270, %v2272
        %v2289 = vmax.f32 %v2274, %v2276
        %v2290 = vmax.f32 %v2280, %v2282
        %v2291 = vmax.f32 %v2284, %v2286
        %v2296 = vrot.slane %v2288, 1
        %v2297 = vrot.slane %v2289, 1
        %v2298 = vsel %vm507, %v2296, %v2297
        %v2299 = vrot.slane %v2290, 1
        %v2300 = vsel %vm507, %v2297, %v2299
        %v2301 = vrot.slane %v2291, 1
        %v2302 = vsel %vm507, %v2299, %v2301
        %v2307 = vmax.f32 %v2288, %v2298
        %v2308 = vmax.f32 %v2289, %v2300
        %v2309 = vmax.f32 %v2290, %v2302
        %v2310 = vmax.f32 %v2291, %v2301
        %v2311 = vadd.f32 %v2307, %v784
        %v2312 = vadd.f32 %v2308, %v784
        %v2313 = vadd.f32 %v2309, %v784
        %v2314 = vadd.f32 %v2310, %v784
        %v2315 = vmax.f32 %v2311, 0.0
        %v2316 = vmax.f32 %v2312, 0.0
        %v2317 = vmax.f32 %v2313, 0.0
        %v2318 = vmax.f32 %v2314, 0.0
        %v2319 = vpack.c.bf16 %v2316, %v2315
        %v2320 = vpack.c.bf16 %v2318, %v2317
        %v2322 = vand.u32 %v2320, %v806
        %2324 = vmatprep.subr.bf16.mxu0 0
        %2325 = vmatpush1.bf16.msra.mxu0 %v2319
        %2326 = vmatprep.subr.bf16.mxu0 0
        %2327 = vmatpush1.bf16.msra.mxu0 %v2322
        %2328 = vmatprep.subr.bf16.mxu0 0
        %2329 = vmatpush1.bf16.msra.mxu0 0
        %2330 = vmatprep.subr.bf16.mxu0 0
        %2331 = vmatpush1.bf16.msra.mxu0 0
        %2332 = vmatprep.subr.bf16.mxu0 0
        %2333 = vmatpush1.bf16.msra.mxu0 0
        %2334 = vmatprep.subr.bf16.mxu0 0
        %2335 = vmatpush1.bf16.msra.mxu0 0
        %2336 = vmatprep.subr.bf16.mxu0 0
        %2337 = vmatpush1.bf16.msra.mxu0 0
        %2338 = vmatprep.subr.bf16.mxu0 0
        %2339 = vmatpush1.bf16.msra.mxu0 0
        %2340 = vmatprep.subr.bf16.mxu0 0
        %2341 = vmatpush1.bf16.msra.mxu0 0
        %2342 = vmatprep.subr.bf16.mxu0 0
        %2343 = vmatpush1.bf16.msra.mxu0 0
        %2344 = vmatprep.subr.bf16.mxu0 0
        %2345 = vmatpush1.bf16.msra.mxu0 0
        %2346 = vmatprep.subr.bf16.mxu0 0
        %2347 = vmatpush1.bf16.msra.mxu0 0
        %2348 = vmatprep.subr.bf16.mxu0 0
        %2349 = vmatpush1.bf16.msra.mxu0 0
        %2350 = vmatprep.subr.bf16.mxu0 0
        %2351 = vmatpush1.bf16.msra.mxu0 0
        %2352 = vmatprep.subr.bf16.mxu0 0
        %2353 = vmatpush1.bf16.msra.mxu0 0
        %2354 = vmatprep.subr.bf16.mxu0 0
        %2355 = vmatpush1.bf16.msra.mxu0 0
        %2356 = vmatprep.mubr.bf16.mxu0 0
        %2357 = vmatmul.mubr.bf16.gmra.mrb[0].mxu0 %v803
        %v2358 = vpop.f32.mrb[0].mxu0
        %v2359 = vadd.f32 0.0, %v2358
        %v2360 = vpop.f32.mrb[0].mxu0
        %v2361 = vpop.f32.mrb[0].mxu0
        %v2362 = vadd.f32 0.0, %v2361
        %v2363 = vpop.f32.mrb[0].mxu0
        %2364 = vdwg.mxu0
        %v2367 = vrot.slane %v2359, 1
        %v2368 = vrot.slane %v2362, 1
        %v2369 = vsel %vm507, %v2367, %v2368
        %2370 = vrot.lane.b32.xlu0 %v2369, 84
        %v2371 = vpop.permute.xlu0 %2370
        %2372 = vrot.lane.b32.xlu0 %v2368, 84
        %v2373 = vpop.permute.xlu0 %2372
        %v2376 = vrot.slane %v2359, 2
        %v2377 = vrot.slane %v2362, 2
        %v2378 = vsel %vm527, %v2376, %v2377
        %2379 = vrot.lane.b32.xlu0 %v2378, 40
        %v2380 = vpop.permute.xlu0 %2379
        %2381 = vrot.lane.b32.xlu0 %v2377, 40
        %v2382 = vpop.permute.xlu0 %2381
        %v2385 = vrot.slane %v2359, 3
        %v2386 = vrot.slane %v2362, 3
        %v2387 = vsel %vm547, %v2385, %v2386
        %2388 = vrot.lane.b32.xlu0 %v2387, 124
        %v2389 = vpop.permute.xlu0 %2388
        %2390 = vrot.lane.b32.xlu0 %v2386, 124
        %v2391 = vpop.permute.xlu0 %2390
        %v2394 = vrot.slane %v2359, 4
        %v2395 = vrot.slane %v2362, 4
        %v2396 = vsel %vm567, %v2394, %v2395
        %2397 = vrot.lane.b32.xlu0 %v2396, 80
        %v2398 = vpop.permute.xlu0 %2397
        %2399 = vrot.lane.b32.xlu0 %v2395, 80
        %v2400 = vpop.permute.xlu0 %2399
        %v2403 = vsel %vm889, %v2359, %v2371
        %v2404 = vsel %vm889, %v2362, %v2373
        %v2405 = vsel %vm892, %v2371, %v2380
        %v2406 = vsel %vm892, %v2373, %v2382
        %v2407 = vsel %vm895, %v2405, %v2389
        %v2408 = vsel %vm895, %v2406, %v2391
        %v2409 = vsel %vm898, %v2389, %v2398
        %v2410 = vsel %vm898, %v2391, %v2400
        %v2411 = vpack.c.bf16 %v2404, %v2403
        %v2412 = vpack.c.bf16 %v2408, %v2407
        %v2413 = vpack.c.bf16 %v2410, %v2409
        %v2414 = vpack.c.bf16 %v2400, %v2398
        %v2416 = vsel %vm1170, %v2414, 0
        %2418 = vmatprep.subr.bf16.mxu0 %v1065
        %2419 = vmatpush1.bf16.msra.mxu0 %v1064
        %2420 = vmatprep.subr.bf16.mxu0 %v1067
        %2421 = vmatpush1.bf16.msra.mxu0 %v1066
        %2422 = vmatprep.subr.bf16.mxu0 %v1069
        %2423 = vmatpush1.bf16.msra.mxu0 %v1068
        %2424 = vmatprep.subr.bf16.mxu0 %v1071
        %2425 = vmatpush1.bf16.msra.mxu0 %v1070
        %2426 = vmatprep.subr.bf16.mxu0 %v1073
        %2427 = vmatpush1.bf16.msra.mxu0 %v1072
        %2428 = vmatprep.subr.bf16.mxu0 %v1075
        %2429 = vmatpush1.bf16.msra.mxu0 %v1074
        %2430 = vmatprep.subr.bf16.mxu0 %v1077
        %2431 = vmatpush1.bf16.msra.mxu0 %v1076
        %2432 = vmatprep.subr.bf16.mxu0 %v1079
        %2433 = vmatpush1.bf16.msra.mxu0 %v1078
        %2434 = vmatprep.subr.bf16.mxu0 %v1081
        %2435 = vmatpush1.bf16.msra.mxu0 %v1080
        %2436 = vmatprep.subr.bf16.mxu0 %v1083
        %2437 = vmatpush1.bf16.msra.mxu0 %v1082
        %2438 = vmatprep.subr.bf16.mxu0 %v1085
        %2439 = vmatpush1.bf16.msra.mxu0 %v1084
        %2440 = vmatprep.subr.bf16.mxu0 %v1087
        %2441 = vmatpush1.bf16.msra.mxu0 %v1086
        %2442 = vmatprep.subr.bf16.mxu0 %v1089
        %2443 = vmatpush1.bf16.msra.mxu0 %v1088
        %2444 = vmatprep.subr.bf16.mxu0 %v1091
        %2445 = vmatpush1.bf16.msra.mxu0 %v1090
        %2446 = vmatprep.subr.bf16.mxu0 %v1093
        %2447 = vmatpush1.bf16.msra.mxu0 %v1092
        %2448 = vmatprep.subr.bf16.mxu0 %v1095
        %2449 = vmatpush1.bf16.msra.mxu0 %v1094
        %2450 = vmatprep.mubr.bf16.mxu0 %v2412
        %2451 = vmatmul.mubr.bf16.gmra.mrb[0].mxu0 %v2411
        %v2452 = vpop.f32.mrb[0].mxu0
        %v2453 = vadd.f32 0.0, %v2452
        %v2454 = vpop.f32.mrb[0].mxu0
        %v2455 = vadd.f32 0.0, %v2454
        %v2456 = vpop.f32.mrb[0].mxu0
        %v2457 = vadd.f32 0.0, %v2456
        %v2458 = vpop.f32.mrb[0].mxu0
        %v2459 = vadd.f32 0.0, %v2458
        %2460 = vdwg.mxu0
        %2461 = vmatprep.subr.bf16.mxu0 %v1097
        %2462 = vmatpush1.bf16.msra.mxu0 %v1096
        %2463 = vmatprep.subr.bf16.mxu0 %v1099
        %2464 = vmatpush1.bf16.msra.mxu0 %v1098
        %2465 = vmatprep.subr.bf16.mxu0 %v1101
        %2466 = vmatpush1.bf16.msra.mxu0 %v1100
        %2467 = vmatprep.subr.bf16.mxu0 %v1103
        %2468 = vmatpush1.bf16.msra.mxu0 %v1102
        %2469 = vmatprep.subr.bf16.mxu0 %v1105
        %2470 = vmatpush1.bf16.msra.mxu0 %v1104
        %2471 = vmatprep.subr.bf16.mxu0 %v1107
        %2472 = vmatpush1.bf16.msra.mxu0 %v1106
        %2473 = vmatprep.subr.bf16.mxu0 %v1109
        %2474 = vmatpush1.bf16.msra.mxu0 %v1108
        %2475 = vmatprep.subr.bf16.mxu0 %v1111
        %2476 = vmatpush1.bf16.msra.mxu0 %v1110
        %2477 = vmatprep.subr.bf16.mxu0 %v1113
        %2478 = vmatpush1.bf16.msra.mxu0 %v1112
        %2479 = vmatprep.subr.bf16.mxu0 %v1115
        %2480 = vmatpush1.bf16.msra.mxu0 %v1114
        %2481 = vmatprep.subr.bf16.mxu0 %v1179
        %2482 = vmatpush1.bf16.msra.mxu0 %v1176
        %2483 = vmatprep.subr.bf16.mxu0 0
        %2484 = vmatpush1.bf16.msra.mxu0 0
        %2485 = vmatprep.subr.bf16.mxu0 0
        %2486 = vmatpush1.bf16.msra.mxu0 0
        %2487 = vmatprep.subr.bf16.mxu0 0
        %2488 = vmatpush1.bf16.msra.mxu0 0
        %2489 = vmatprep.subr.bf16.mxu0 0
        %2490 = vmatpush1.bf16.msra.mxu0 0
        %2491 = vmatprep.subr.bf16.mxu0 0
        %2492 = vmatpush1.bf16.msra.mxu0 0
        %2493 = vmatprep.mubr.bf16.mxu0 %v2416
        %2494 = vmatmul.mubr.bf16.gmra.mrb[0].mxu0 %v2413
        %v2495 = vpop.f32.mrb[0].mxu0
        %v2496 = vadd.f32 %v2453, %v2495
        %v2497 = vpop.f32.mrb[0].mxu0
        %v2498 = vadd.f32 %v2455, %v2497
        %v2499 = vpop.f32.mrb[0].mxu0
        %v2500 = vadd.f32 %v2457, %v2499
        %v2501 = vpop.f32.mrb[0].mxu0
        %v2502 = vadd.f32 %v2459, %v2501
        %2503 = vdwg.mxu0
        %v2504 = vmax.f32 %v2496, %v2498
        %v2505 = vmax.f32 %v2500, %v2502
        %v2508 = vrot.slane %v2504, 1
        %v2509 = vrot.slane %v2505, 1
        %v2510 = vsel %vm507, %v2508, %v2509
        %v2513 = vmax.f32 %v2504, %v2510
        %v2514 = vmax.f32 %v2505, %v2509
        %v2515 = vadd.f32 %v2513, %v494
        %v2516 = vmax.f32 %v2515, 0.0
        %v2517 = vadd.f32 %v2513, %v1284
        %v2518 = vmax.f32 %v2517, 0.0
        %v2519 = vadd.f32 %v2514, %v494
        %v2520 = vmax.f32 %v2519, 0.0
        %v2522 = vrot.slane %v2518, 2
        %2523 = vrot.lane.b32.xlu0 %v2522, 80
        %v2524 = vpop.permute.xlu0 %2523
        %v2526 = vrot.slane %v2518, 4
        %2527 = vrot.lane.b32.xlu0 %v2526, 32
        %v2528 = vpop.permute.xlu0 %2527
        %v2530 = vrot.slane %v2518, 6
        %2531 = vrot.lane.b32.xlu0 %v2530, 112
        %v2532 = vpop.permute.xlu0 %2531
        %2535 = vrot.lane.b32.xlu0 %v2520, 64
        %v2536 = vpop.permute.xlu0 %2535
        %v2538 = vsel %vm898, %v2516, %v2524
        %v2539 = vsel %vm579, %v2524, %v2528
        %v2540 = vsel %vm1309, %v2539, %v2532
        %v2541 = vsel %vm584, %v2532, %v2536
        %s2542 = scalar_lea.vmem %s415, 64
        %v2543 = vld [vmem:[%s2542] sm:$0xf]
        %v2544 = vld [vmem:[%s2542 + $0x4] sm:$0xf]
        %v2545 = vld [vmem:[%s2542 + $0x8] sm:$0xf]
        %v2546 = vld [vmem:[%s2542 + $0xc] sm:$0xf]
        %v2547 = vunpack.c.l.bf16 %v2543
        %v2548 = vunpack.c.l.bf16 %v2544
        %v2549 = vunpack.c.l.bf16 %v2545
        %v2550 = vunpack.c.l.bf16 %v2546
        %v2555 = vrot.slane %v2547, 1
        %v2556 = vrot.slane %v2548, 1
        %v2557 = vsel %vm507, %v2555, %v2556
        %v2558 = vrot.slane %v2549, 1
        %v2559 = vsel %vm507, %v2556, %v2558
        %v2560 = vrot.slane %v2550, 1
        %v2561 = vsel %vm507, %v2558, %v2560
        %2562 = vrot.lane.b32.xlu0 %v2557, 32
        %v2563 = vpop.permute.xlu0 %2562
        %2564 = vrot.lane.b32.xlu0 %v2559, 32
        %v2565 = vpop.permute.xlu0 %2564
        %2566 = vrot.lane.b32.xlu0 %v2561, 32
        %v2567 = vpop.permute.xlu0 %2566
        %2568 = vrot.lane.b32.xlu0 %v2560, 32
        %v2569 = vpop.permute.xlu0 %2568
        %v2574 = vrot.slane %v2547, 2
        %v2575 = vrot.slane %v2548, 2
        %v2576 = vsel %vm527, %v2574, %v2575
        %v2577 = vrot.slane %v2549, 2
        %v2578 = vsel %vm527, %v2575, %v2577
        %v2579 = vrot.slane %v2550, 2
        %v2580 = vsel %vm527, %v2577, %v2579
        %2581 = vrot.lane.b32.xlu0 %v2576, 64
        %v2582 = vpop.permute.xlu0 %2581
        %2583 = vrot.lane.b32.xlu0 %v2578, 64
        %v2584 = vpop.permute.xlu0 %2583
        %2585 = vrot.lane.b32.xlu0 %v2580, 64
        %v2586 = vpop.permute.xlu0 %2585
        %2587 = vrot.lane.b32.xlu0 %v2579, 64
        %v2588 = vpop.permute.xlu0 %2587
        %v2593 = vrot.slane %v2547, 3
        %v2594 = vrot.slane %v2548, 3
        %v2595 = vsel %vm547, %v2593, %v2594
        %v2596 = vrot.slane %v2549, 3
        %v2597 = vsel %vm547, %v2594, %v2596
        %v2598 = vrot.slane %v2550, 3
        %v2599 = vsel %vm547, %v2596, %v2598
        %2600 = vrot.lane.b32.xlu0 %v2595, 96
        %v2601 = vpop.permute.xlu0 %2600
        %2602 = vrot.lane.b32.xlu0 %v2597, 96
        %v2603 = vpop.permute.xlu0 %2602
        %2604 = vrot.lane.b32.xlu0 %v2599, 96
        %v2605 = vpop.permute.xlu0 %2604
        %2606 = vrot.lane.b32.xlu0 %v2598, 96
        %v2607 = vpop.permute.xlu0 %2606
        %v2612 = vrot.slane %v2547, 4
        %v2613 = vrot.slane %v2548, 4
        %v2614 = vsel %vm567, %v2612, %v2613
        %v2615 = vrot.slane %v2549, 4
        %v2616 = vsel %vm567, %v2613, %v2615
        %v2617 = vrot.slane %v2550, 4
        %v2618 = vsel %vm567, %v2615, %v2617
        %v2623 = vsel %vm579, %v2547, %v2563
        %v2624 = vsel %vm579, %v2548, %v2565
        %v2625 = vsel %vm579, %v2549, %v2567
        %v2626 = vsel %vm579, %v2550, %v2569
        %v2627 = vsel %vm584, %v2623, %v2582
        %v2628 = vsel %vm584, %v2624, %v2584
        %v2629 = vsel %vm584, %v2625, %v2586
        %v2630 = vsel %vm584, %v2626, %v2588
        %v2631 = vsel %vm589, %v2627, %v2601
        %v2632 = vsel %vm589, %v2628, %v2603
        %v2633 = vsel %vm589, %v2629, %v2605
        %v2634 = vsel %vm589, %v2630, %v2607
        %v2635 = vpack.c.bf16 %v2632, %v2631
        %v2636 = vpack.c.bf16 %v2616, %v2614
        %v2637 = vpack.c.bf16 %v2634, %v2633
        %v2638 = vpack.c.bf16 %v2617, %v2618
        %v2640 = vsel %vm579, %v2636, 0
        %v2643 = vsel %vm579, %v2638, 0
        %2645 = vmatprep.subr.bf16.mxu0 %v659
        %2646 = vmatpush1.bf16.msra.mxu0 %v658
        %2647 = vmatprep.subr.bf16.mxu0 %v661
        %2648 = vmatpush1.bf16.msra.mxu0 %v660
        %2649 = vmatprep.subr.bf16.mxu0 %v663
        %2650 = vmatpush1.bf16.msra.mxu0 %v662
        %2651 = vmatprep.subr.bf16.mxu0 %v665
        %2652 = vmatpush1.bf16.msra.mxu0 %v664
        %2653 = vmatprep.subr.bf16.mxu0 %v667
        %2654 = vmatpush1.bf16.msra.mxu0 %v666
        %2655 = vmatprep.subr.bf16.mxu0 %v669
        %2656 = vmatpush1.bf16.msra.mxu0 %v668
        %2657 = vmatprep.subr.bf16.mxu0 %v671
        %2658 = vmatpush1.bf16.msra.mxu0 %v670
        %2659 = vmatprep.subr.bf16.mxu0 %v673
        %2660 = vmatpush1.bf16.msra.mxu0 %v672
        %2661 = vmatprep.subr.bf16.mxu0 %v675
        %2662 = vmatpush1.bf16.msra.mxu0 %v674
        %2663 = vmatprep.subr.bf16.mxu0 %v677
        %2664 = vmatpush1.bf16.msra.mxu0 %v676
        %2665 = vmatprep.subr.bf16.mxu0 0
        %2666 = vmatpush1.bf16.msra.mxu0 0
        %2667 = vmatprep.subr.bf16.mxu0 0
        %2668 = vmatpush1.bf16.msra.mxu0 0
        %2669 = vmatprep.subr.bf16.mxu0 0
        %2670 = vmatpush1.bf16.msra.mxu0 0
        %2671 = vmatprep.subr.bf16.mxu0 0
        %2672 = vmatpush1.bf16.msra.mxu0 0
        %2673 = vmatprep.subr.bf16.mxu0 0
        %2674 = vmatpush1.bf16.msra.mxu0 0
        %2675 = vmatprep.subr.bf16.mxu0 0
        %2676 = vmatpush1.bf16.msra.mxu0 0
        %2677 = vmatprep.mubr.bf16.mxu0 %v2640
        %2678 = vmatmul.mubr.bf16.gmra.mrb[0].mxu0 %v2635
        %v2679 = vpop.f32.mrb[0].mxu0
        %v2680 = vadd.f32 0.0, %v2679
        %v2681 = vpop.f32.mrb[0].mxu0
        %v2682 = vadd.f32 0.0, %v2681
        %v2683 = vpop.f32.mrb[0].mxu0
        %v2684 = vadd.f32 0.0, %v2683
        %v2685 = vpop.f32.mrb[0].mxu0
        %v2686 = vadd.f32 0.0, %v2685
        %2687 = vmatprep.mubr.bf16.mxu0 %v2643
        %2688 = vmatmul.mubr.bf16.gmra.mrb[0].mxu0 %v2637
        %v2689 = vpop.f32.mrb[0].mxu0
        %v2690 = vadd.f32 0.0, %v2689
        %v2691 = vpop.f32.mrb[0].mxu0
        %v2692 = vadd.f32 0.0, %v2691
        %v2693 = vpop.f32.mrb[0].mxu0
        %v2694 = vadd.f32 0.0, %v2693
        %v2695 = vpop.f32.mrb[0].mxu0
        %v2696 = vadd.f32 0.0, %v2695
        %2697 = vdwg.mxu0
        %v2698 = vmax.f32 %v2680, %v2682
        %v2699 = vmax.f32 %v2684, %v2686
        %v2700 = vmax.f32 %v2690, %v2692
        %v2701 = vmax.f32 %v2694, %v2696
        %v2706 = vrot.slane %v2698, 1
        %v2707 = vrot.slane %v2699, 1
        %v2708 = vsel %vm507, %v2706, %v2707
        %v2709 = vrot.slane %v2700, 1
        %v2710 = vsel %vm507, %v2707, %v2709
        %v2711 = vrot.slane %v2701, 1
        %v2712 = vsel %vm507, %v2709, %v2711
        %v2717 = vmax.f32 %v2698, %v2708
        %v2718 = vmax.f32 %v2699, %v2710
        %v2719 = vmax.f32 %v2700, %v2712
        %v2720 = vmax.f32 %v2701, %v2711
        %v2721 = vadd.f32 %v2717, %v784
        %v2722 = vadd.f32 %v2718, %v784
        %v2723 = vadd.f32 %v2719, %v784
        %v2724 = vadd.f32 %v2720, %v784
        %v2725 = vmax.f32 %v2721, 0.0
        %v2726 = vmax.f32 %v2722, 0.0
        %v2727 = vmax.f32 %v2723, 0.0
        %v2728 = vmax.f32 %v2724, 0.0
        %v2729 = vpack.c.bf16 %v2726, %v2725
        %v2730 = vpack.c.bf16 %v2728, %v2727
        %v2732 = vand.u32 %v2730, %v806
        %2734 = vmatprep.subr.bf16.mxu0 0
        %2735 = vmatpush1.bf16.msra.mxu0 %v2729
        %2736 = vmatprep.subr.bf16.mxu0 0
        %2737 = vmatpush1.bf16.msra.mxu0 %v2732
        %2738 = vmatprep.subr.bf16.mxu0 0
        %2739 = vmatpush1.bf16.msra.mxu0 0
        %2740 = vmatprep.subr.bf16.mxu0 0
        %2741 = vmatpush1.bf16.msra.mxu0 0
        %2742 = vmatprep.subr.bf16.mxu0 0
        %2743 = vmatpush1.bf16.msra.mxu0 0
        %2744 = vmatprep.subr.bf16.mxu0 0
        %2745 = vmatpush1.bf16.msra.mxu0 0
        %2746 = vmatprep.subr.bf16.mxu0 0
        %2747 = vmatpush1.bf16.msra.mxu0 0
        %2748 = vmatprep.subr.bf16.mxu0 0
        %2749 = vmatpush1.bf16.msra.mxu0 0
        %2750 = vmatprep.subr.bf16.mxu0 0
        %2751 = vmatpush1.bf16.msra.mxu0 0
        %2752 = vmatprep.subr.bf16.mxu0 0
        %2753 = vmatpush1.bf16.msra.mxu0 0
        %2754 = vmatprep.subr.bf16.mxu0 0
        %2755 = vmatpush1.bf16.msra.mxu0 0
        %2756 = vmatprep.subr.bf16.mxu0 0
        %2757 = vmatpush1.bf16.msra.mxu0 0
        %2758 = vmatprep.subr.bf16.mxu0 0
        %2759 = vmatpush1.bf16.msra.mxu0 0
        %2760 = vmatprep.subr.bf16.mxu0 0
        %2761 = vmatpush1.bf16.msra.mxu0 0
        %2762 = vmatprep.subr.bf16.mxu0 0
        %2763 = vmatpush1.bf16.msra.mxu0 0
        %2764 = vmatprep.subr.bf16.mxu0 0
        %2765 = vmatpush1.bf16.msra.mxu0 0
        %2766 = vmatprep.mubr.bf16.mxu0 0
        %2767 = vmatmul.mubr.bf16.gmra.mrb[0].mxu0 %v803
        %v2768 = vpop.f32.mrb[0].mxu0
        %v2769 = vadd.f32 0.0, %v2768
        %v2770 = vpop.f32.mrb[0].mxu0
        %v2771 = vpop.f32.mrb[0].mxu0
        %v2772 = vadd.f32 0.0, %v2771
        %v2773 = vpop.f32.mrb[0].mxu0
        %2774 = vdwg.mxu0
        %v2777 = vrot.slane %v2769, 1
        %v2778 = vrot.slane %v2772, 1
        %v2779 = vsel %vm507, %v2777, %v2778
        %2780 = vrot.lane.b32.xlu0 %v2779, 84
        %v2781 = vpop.permute.xlu0 %2780
        %2782 = vrot.lane.b32.xlu0 %v2778, 84
        %v2783 = vpop.permute.xlu0 %2782
        %v2786 = vrot.slane %v2769, 2
        %v2787 = vrot.slane %v2772, 2
        %v2788 = vsel %vm527, %v2786, %v2787
        %2789 = vrot.lane.b32.xlu0 %v2788, 40
        %v2790 = vpop.permute.xlu0 %2789
        %2791 = vrot.lane.b32.xlu0 %v2787, 40
        %v2792 = vpop.permute.xlu0 %2791
        %v2795 = vrot.slane %v2769, 3
        %v2796 = vrot.slane %v2772, 3
        %v2797 = vsel %vm547, %v2795, %v2796
        %2798 = vrot.lane.b32.xlu0 %v2797, 124
        %v2799 = vpop.permute.xlu0 %2798
        %2800 = vrot.lane.b32.xlu0 %v2796, 124
        %v2801 = vpop.permute.xlu0 %2800
        %v2804 = vrot.slane %v2769, 4
        %v2805 = vrot.slane %v2772, 4
        %v2806 = vsel %vm567, %v2804, %v2805
        %2807 = vrot.lane.b32.xlu0 %v2806, 80
        %v2808 = vpop.permute.xlu0 %2807
        %2809 = vrot.lane.b32.xlu0 %v2805, 80
        %v2810 = vpop.permute.xlu0 %2809
        %v2813 = vsel %vm889, %v2769, %v2781
        %v2814 = vsel %vm889, %v2772, %v2783
        %v2815 = vsel %vm892, %v2781, %v2790
        %v2816 = vsel %vm892, %v2783, %v2792
        %v2817 = vsel %vm895, %v2815, %v2799
        %v2818 = vsel %vm895, %v2816, %v2801
        %v2819 = vsel %vm898, %v2799, %v2808
        %v2820 = vsel %vm898, %v2801, %v2810
        %v2821 = vpack.c.bf16 %v2814, %v2813
        %v2822 = vpack.c.bf16 %v2818, %v2817
        %v2823 = vpack.c.bf16 %v2820, %v2819
        %v2824 = vpack.c.bf16 %v2810, %v2808
        %v2826 = vsel %vm1170, %v2824, 0
        %2828 = vmatprep.subr.bf16.mxu0 %v1065
        %2829 = vmatpush1.bf16.msra.mxu0 %v1064
        %2830 = vmatprep.subr.bf16.mxu0 %v1067
        %2831 = vmatpush1.bf16.msra.mxu0 %v1066
        %2832 = vmatprep.subr.bf16.mxu0 %v1069
        %2833 = vmatpush1.bf16.msra.mxu0 %v1068
        %2834 = vmatprep.subr.bf16.mxu0 %v1071
        %2835 = vmatpush1.bf16.msra.mxu0 %v1070
        %2836 = vmatprep.subr.bf16.mxu0 %v1073
        %2837 = vmatpush1.bf16.msra.mxu0 %v1072
        %2838 = vmatprep.subr.bf16.mxu0 %v1075
        %2839 = vmatpush1.bf16.msra.mxu0 %v1074
        %2840 = vmatprep.subr.bf16.mxu0 %v1077
        %2841 = vmatpush1.bf16.msra.mxu0 %v1076
        %2842 = vmatprep.subr.bf16.mxu0 %v1079
        %2843 = vmatpush1.bf16.msra.mxu0 %v1078
        %2844 = vmatprep.subr.bf16.mxu0 %v1081
        %2845 = vmatpush1.bf16.msra.mxu0 %v1080
        %2846 = vmatprep.subr.bf16.mxu0 %v1083
        %2847 = vmatpush1.bf16.msra.mxu0 %v1082
        %2848 = vmatprep.subr.bf16.mxu0 %v1085
        %2849 = vmatpush1.bf16.msra.mxu0 %v1084
        %2850 = vmatprep.subr.bf16.mxu0 %v1087
        %2851 = vmatpush1.bf16.msra.mxu0 %v1086
        %2852 = vmatprep.subr.bf16.mxu0 %v1089
        %2853 = vmatpush1.bf16.msra.mxu0 %v1088
        %2854 = vmatprep.subr.bf16.mxu0 %v1091
        %2855 = vmatpush1.bf16.msra.mxu0 %v1090
        %2856 = vmatprep.subr.bf16.mxu0 %v1093
        %2857 = vmatpush1.bf16.msra.mxu0 %v1092
        %2858 = vmatprep.subr.bf16.mxu0 %v1095
        %2859 = vmatpush1.bf16.msra.mxu0 %v1094
        %2860 = vmatprep.mubr.bf16.mxu0 %v2822
        %2861 = vmatmul.mubr.bf16.gmra.mrb[0].mxu0 %v2821
        %v2862 = vpop.f32.mrb[0].mxu0
        %v2863 = vadd.f32 0.0, %v2862
        %v2864 = vpop.f32.mrb[0].mxu0
        %v2865 = vadd.f32 0.0, %v2864
        %v2866 = vpop.f32.mrb[0].mxu0
        %v2867 = vadd.f32 0.0, %v2866
        %v2868 = vpop.f32.mrb[0].mxu0
        %v2869 = vadd.f32 0.0, %v2868
        %2870 = vdwg.mxu0
        %2871 = vmatprep.subr.bf16.mxu0 %v1097
        %2872 = vmatpush1.bf16.msra.mxu0 %v1096
        %2873 = vmatprep.subr.bf16.mxu0 %v1099
        %2874 = vmatpush1.bf16.msra.mxu0 %v1098
        %2875 = vmatprep.subr.bf16.mxu0 %v1101
        %2876 = vmatpush1.bf16.msra.mxu0 %v1100
        %2877 = vmatprep.subr.bf16.mxu0 %v1103
        %2878 = vmatpush1.bf16.msra.mxu0 %v1102
        %2879 = vmatprep.subr.bf16.mxu0 %v1105
        %2880 = vmatpush1.bf16.msra.mxu0 %v1104
        %2881 = vmatprep.subr.bf16.mxu0 %v1107
        %2882 = vmatpush1.bf16.msra.mxu0 %v1106
        %2883 = vmatprep.subr.bf16.mxu0 %v1109
        %2884 = vmatpush1.bf16.msra.mxu0 %v1108
        %2885 = vmatprep.subr.bf16.mxu0 %v1111
        %2886 = vmatpush1.bf16.msra.mxu0 %v1110
        %2887 = vmatprep.subr.bf16.mxu0 %v1113
        %2888 = vmatpush1.bf16.msra.mxu0 %v1112
        %2889 = vmatprep.subr.bf16.mxu0 %v1115
        %2890 = vmatpush1.bf16.msra.mxu0 %v1114
        %2891 = vmatprep.subr.bf16.mxu0 %v1179
        %2892 = vmatpush1.bf16.msra.mxu0 %v1176
        %2893 = vmatprep.subr.bf16.mxu0 0
        %2894 = vmatpush1.bf16.msra.mxu0 0
        %2895 = vmatprep.subr.bf16.mxu0 0
        %2896 = vmatpush1.bf16.msra.mxu0 0
        %2897 = vmatprep.subr.bf16.mxu0 0
        %2898 = vmatpush1.bf16.msra.mxu0 0
        %2899 = vmatprep.subr.bf16.mxu0 0
        %2900 = vmatpush1.bf16.msra.mxu0 0
        %2901 = vmatprep.subr.bf16.mxu0 0
        %2902 = vmatpush1.bf16.msra.mxu0 0
        %2903 = vmatprep.mubr.bf16.mxu0 %v2826
        %2904 = vmatmul.mubr.bf16.gmra.mrb[0].mxu0 %v2823
        %v2905 = vpop.f32.mrb[0].mxu0
        %v2906 = vadd.f32 %v2863, %v2905
        %v2907 = vpop.f32.mrb[0].mxu0
        %v2908 = vadd.f32 %v2865, %v2907
        %v2909 = vpop.f32.mrb[0].mxu0
        %v2910 = vadd.f32 %v2867, %v2909
        %v2911 = vpop.f32.mrb[0].mxu0
        %v2912 = vadd.f32 %v2869, %v2911
        %2913 = vdwg.mxu0
        %v2914 = vmax.f32 %v2906, %v2908
        %v2915 = vmax.f32 %v2910, %v2912
        %v2918 = vrot.slane %v2914, 1
        %v2919 = vrot.slane %v2915, 1
        %v2920 = vsel %vm507, %v2918, %v2919
        %v2923 = vmax.f32 %v2914, %v2920
        %v2924 = vmax.f32 %v2915, %v2919
        %v2925 = vadd.f32 %v2923, %v494
        %v2926 = vmax.f32 %v2925, 0.0
        %v2927 = vadd.f32 %v2923, %v1284
        %v2928 = vmax.f32 %v2927, 0.0
        %v2929 = vadd.f32 %v2924, %v494
        %v2930 = vmax.f32 %v2929, 0.0
        %v2932 = vrot.slane %v2928, 2
        %2933 = vrot.lane.b32.xlu0 %v2932, 80
        %v2934 = vpop.permute.xlu0 %2933
        %v2936 = vrot.slane %v2928, 4
        %2937 = vrot.lane.b32.xlu0 %v2936, 32
        %v2938 = vpop.permute.xlu0 %2937
        %v2940 = vrot.slane %v2928, 6
        %2941 = vrot.lane.b32.xlu0 %v2940, 112
        %v2942 = vpop.permute.xlu0 %2941
        %2945 = vrot.lane.b32.xlu0 %v2930, 64
        %v2946 = vpop.permute.xlu0 %2945
        %v2948 = vsel %vm898, %v2926, %v2934
        %v2949 = vsel %vm579, %v2934, %v2938
        %v2950 = vsel %vm1309, %v2949, %v2942
        %v2951 = vsel %vm584, %v2942, %v2946
        %s2952 = scalar_lea.vmem %s415, 80
        %v2953 = vld [vmem:[%s2952] sm:$0xf]
        %v2954 = vld [vmem:[%s2952 + $0x4] sm:$0xf]
        %v2955 = vld [vmem:[%s2952 + $0x8] sm:$0xf]
        %v2956 = vld [vmem:[%s2952 + $0xc] sm:$0xf]
        %v2957 = vunpack.c.l.bf16 %v2953
        %v2958 = vunpack.c.l.bf16 %v2954
        %v2959 = vunpack.c.l.bf16 %v2955
        %v2960 = vunpack.c.l.bf16 %v2956
        %v2965 = vrot.slane %v2957, 1
        %v2966 = vrot.slane %v2958, 1
        %v2967 = vsel %vm507, %v2965, %v2966
        %v2968 = vrot.slane %v2959, 1
        %v2969 = vsel %vm507, %v2966, %v2968
        %v2970 = vrot.slane %v2960, 1
        %v2971 = vsel %vm507, %v2968, %v2970
        %2972 = vrot.lane.b32.xlu0 %v2967, 32
        %v2973 = vpop.permute.xlu0 %2972
        %2974 = vrot.lane.b32.xlu0 %v2969, 32
        %v2975 = vpop.permute.xlu0 %2974
        %2976 = vrot.lane.b32.xlu0 %v2971, 32
        %v2977 = vpop.permute.xlu0 %2976
        %2978 = vrot.lane.b32.xlu0 %v2970, 32
        %v2979 = vpop.permute.xlu0 %2978
        %v2984 = vrot.slane %v2957, 2
        %v2985 = vrot.slane %v2958, 2
        %v2986 = vsel %vm527, %v2984, %v2985
        %v2987 = vrot.slane %v2959, 2
        %v2988 = vsel %vm527, %v2985, %v2987
        %v2989 = vrot.slane %v2960, 2
        %v2990 = vsel %vm527, %v2987, %v2989
        %2991 = vrot.lane.b32.xlu0 %v2986, 64
        %v2992 = vpop.permute.xlu0 %2991
        %2993 = vrot.lane.b32.xlu0 %v2988, 64
        %v2994 = vpop.permute.xlu0 %2993
        %2995 = vrot.lane.b32.xlu0 %v2990, 64
        %v2996 = vpop.permute.xlu0 %2995
        %2997 = vrot.lane.b32.xlu0 %v2989, 64
        %v2998 = vpop.permute.xlu0 %2997
        %v3003 = vrot.slane %v2957, 3
        %v3004 = vrot.slane %v2958, 3
        %v3005 = vsel %vm547, %v3003, %v3004
        %v3006 = vrot.slane %v2959, 3
        %v3007 = vsel %vm547, %v3004, %v3006
        %v3008 = vrot.slane %v2960, 3
        %v3009 = vsel %vm547, %v3006, %v3008
        %3010 = vrot.lane.b32.xlu0 %v3005, 96
        %v3011 = vpop.permute.xlu0 %3010
        %3012 = vrot.lane.b32.xlu0 %v3007, 96
        %v3013 = vpop.permute.xlu0 %3012
        %3014 = vrot.lane.b32.xlu0 %v3009, 96
        %v3015 = vpop.permute.xlu0 %3014
        %3016 = vrot.lane.b32.xlu0 %v3008, 96
        %v3017 = vpop.permute.xlu0 %3016
        %v3022 = vrot.slane %v2957, 4
        %v3023 = vrot.slane %v2958, 4
        %v3024 = vsel %vm567, %v3022, %v3023
        %v3025 = vrot.slane %v2959, 4
        %v3026 = vsel %vm567, %v3023, %v3025
        %v3027 = vrot.slane %v2960, 4
        %v3028 = vsel %vm567, %v3025, %v3027
        %v3033 = vsel %vm579, %v2957, %v2973
        %v3034 = vsel %vm579, %v2958, %v2975
        %v3035 = vsel %vm579, %v2959, %v2977
        %v3036 = vsel %vm579, %v2960, %v2979
        %v3037 = vsel %vm584, %v3033, %v2992
        %v3038 = vsel %vm584, %v3034, %v2994
        %v3039 = vsel %vm584, %v3035, %v2996
        %v3040 = vsel %vm584, %v3036, %v2998
        %v3041 = vsel %vm589, %v3037, %v3011
        %v3042 = vsel %vm589, %v3038, %v3013
        %v3043 = vsel %vm589, %v3039, %v3015
        %v3044 = vsel %vm589, %v3040, %v3017
        %v3045 = vpack.c.bf16 %v3042, %v3041
        %v3046 = vpack.c.bf16 %v3026, %v3024
        %v3047 = vpack.c.bf16 %v3044, %v3043
        %v3048 = vpack.c.bf16 %v3027, %v3028
        %v3050 = vsel %vm579, %v3046, 0
        %v3053 = vsel %vm579, %v3048, 0
        %3055 = vmatprep.subr.bf16.mxu0 %v659
        %3056 = vmatpush1.bf16.msra.mxu0 %v658
        %3057 = vmatprep.subr.bf16.mxu0 %v661
        %3058 = vmatpush1.bf16.msra.mxu0 %v660
        %3059 = vmatprep.subr.bf16.mxu0 %v663
        %3060 = vmatpush1.bf16.msra.mxu0 %v662
        %3061 = vmatprep.subr.bf16.mxu0 %v665
        %3062 = vmatpush1.bf16.msra.mxu0 %v664
        %3063 = vmatprep.subr.bf16.mxu0 %v667
        %3064 = vmatpush1.bf16.msra.mxu0 %v666
        %3065 = vmatprep.subr.bf16.mxu0 %v669
        %3066 = vmatpush1.bf16.msra.mxu0 %v668
        %3067 = vmatprep.subr.bf16.mxu0 %v671
        %3068 = vmatpush1.bf16.msra.mxu0 %v670
        %3069 = vmatprep.subr.bf16.mxu0 %v673
        %3070 = vmatpush1.bf16.msra.mxu0 %v672
        %3071 = vmatprep.subr.bf16.mxu0 %v675
        %3072 = vmatpush1.bf16.msra.mxu0 %v674
        %3073 = vmatprep.subr.bf16.mxu0 %v677
        %3074 = vmatpush1.bf16.msra.mxu0 %v676
        %3075 = vmatprep.subr.bf16.mxu0 0
        %3076 = vmatpush1.bf16.msra.mxu0 0
        %3077 = vmatprep.subr.bf16.mxu0 0
        %3078 = vmatpush1.bf16.msra.mxu0 0
        %3079 = vmatprep.subr.bf16.mxu0 0
        %3080 = vmatpush1.bf16.msra.mxu0 0
        %3081 = vmatprep.subr.bf16.mxu0 0
        %3082 = vmatpush1.bf16.msra.mxu0 0
        %3083 = vmatprep.subr.bf16.mxu0 0
        %3084 = vmatpush1.bf16.msra.mxu0 0
        %3085 = vmatprep.subr.bf16.mxu0 0
        %3086 = vmatpush1.bf16.msra.mxu0 0
        %3087 = vmatprep.mubr.bf16.mxu0 %v3050
        %3088 = vmatmul.mubr.bf16.gmra.mrb[0].mxu0 %v3045
        %v3089 = vpop.f32.mrb[0].mxu0
        %v3090 = vadd.f32 0.0, %v3089
        %v3091 = vpop.f32.mrb[0].mxu0
        %v3092 = vadd.f32 0.0, %v3091
        %v3093 = vpop.f32.mrb[0].mxu0
        %v3094 = vadd.f32 0.0, %v3093
        %v3095 = vpop.f32.mrb[0].mxu0
        %v3096 = vadd.f32 0.0, %v3095
        %3097 = vmatprep.mubr.bf16.mxu0 %v3053
        %3098 = vmatmul.mubr.bf16.gmra.mrb[0].mxu0 %v3047
        %v3099 = vpop.f32.mrb[0].mxu0
        %v3100 = vadd.f32 0.0, %v3099
        %v3101 = vpop.f32.mrb[0].mxu0
        %v3102 = vadd.f32 0.0, %v3101
        %v3103 = vpop.f32.mrb[0].mxu0
        %v3104 = vadd.f32 0.0, %v3103
        %v3105 = vpop.f32.mrb[0].mxu0
        %v3106 = vadd.f32 0.0, %v3105
        %3107 = vdwg.mxu0
        %v3108 = vmax.f32 %v3090, %v3092
        %v3109 = vmax.f32 %v3094, %v3096
        %v3110 = vmax.f32 %v3100, %v3102
        %v3111 = vmax.f32 %v3104, %v3106
        %v3116 = vrot.slane %v3108, 1
        %v3117 = vrot.slane %v3109, 1
        %v3118 = vsel %vm507, %v3116, %v3117
        %v3119 = vrot.slane %v3110, 1
        %v3120 = vsel %vm507, %v3117, %v3119
        %v3121 = vrot.slane %v3111, 1
        %v3122 = vsel %vm507, %v3119, %v3121
        %v3127 = vmax.f32 %v3108, %v3118
        %v3128 = vmax.f32 %v3109, %v3120
        %v3129 = vmax.f32 %v3110, %v3122
        %v3130 = vmax.f32 %v3111, %v3121
        %v3131 = vadd.f32 %v3127, %v784
        %v3132 = vadd.f32 %v3128, %v784
        %v3133 = vadd.f32 %v3129, %v784
        %v3134 = vadd.f32 %v3130, %v784
        %v3135 = vmax.f32 %v3131, 0.0
        %v3136 = vmax.f32 %v3132, 0.0
        %v3137 = vmax.f32 %v3133, 0.0
        %v3138 = vmax.f32 %v3134, 0.0
        %v3139 = vpack.c.bf16 %v3136, %v3135
        %v3140 = vpack.c.bf16 %v3138, %v3137
        %v3142 = vand.u32 %v3140, %v806
        %3144 = vmatprep.subr.bf16.mxu0 0
        %3145 = vmatpush1.bf16.msra.mxu0 %v3139
        %3146 = vmatprep.subr.bf16.mxu0 0
        %3147 = vmatpush1.bf16.msra.mxu0 %v3142
        %3148 = vmatprep.subr.bf16.mxu0 0
        %3149 = vmatpush1.bf16.msra.mxu0 0
        %3150 = vmatprep.subr.bf16.mxu0 0
        %3151 = vmatpush1.bf16.msra.mxu0 0
        %3152 = vmatprep.subr.bf16.mxu0 0
        %3153 = vmatpush1.bf16.msra.mxu0 0
        %3154 = vmatprep.subr.bf16.mxu0 0
        %3155 = vmatpush1.bf16.msra.mxu0 0
        %3156 = vmatprep.subr.bf16.mxu0 0
        %3157 = vmatpush1.bf16.msra.mxu0 0
        %3158 = vmatprep.subr.bf16.mxu0 0
        %3159 = vmatpush1.bf16.msra.mxu0 0
        %3160 = vmatprep.subr.bf16.mxu0 0
        %3161 = vmatpush1.bf16.msra.mxu0 0
        %3162 = vmatprep.subr.bf16.mxu0 0
        %3163 = vmatpush1.bf16.msra.mxu0 0
        %3164 = vmatprep.subr.bf16.mxu0 0
        %3165 = vmatpush1.bf16.msra.mxu0 0
        %3166 = vmatprep.subr.bf16.mxu0 0
        %3167 = vmatpush1.bf16.msra.mxu0 0
        %3168 = vmatprep.subr.bf16.mxu0 0
        %3169 = vmatpush1.bf16.msra.mxu0 0
        %3170 = vmatprep.subr.bf16.mxu0 0
        %3171 = vmatpush1.bf16.msra.mxu0 0
        %3172 = vmatprep.subr.bf16.mxu0 0
        %3173 = vmatpush1.bf16.msra.mxu0 0
        %3174 = vmatprep.subr.bf16.mxu0 0
        %3175 = vmatpush1.bf16.msra.mxu0 0
        %3176 = vmatprep.mubr.bf16.mxu0 0
        %3177 = vmatmul.mubr.bf16.gmra.mrb[0].mxu0 %v803
        %v3178 = vpop.f32.mrb[0].mxu0
        %v3179 = vadd.f32 0.0, %v3178
        %v3180 = vpop.f32.mrb[0].mxu0
        %v3181 = vpop.f32.mrb[0].mxu0
        %v3182 = vadd.f32 0.0, %v3181
        %v3183 = vpop.f32.mrb[0].mxu0
        %3184 = vdwg.mxu0
        %v3187 = vrot.slane %v3179, 1
        %v3188 = vrot.slane %v3182, 1
        %v3189 = vsel %vm507, %v3187, %v3188
        %3190 = vrot.lane.b32.xlu0 %v3189, 84
        %v3191 = vpop.permute.xlu0 %3190
        %3192 = vrot.lane.b32.xlu0 %v3188, 84
        %v3193 = vpop.permute.xlu0 %3192
        %v3196 = vrot.slane %v3179, 2
        %v3197 = vrot.slane %v3182, 2
        %v3198 = vsel %vm527, %v3196, %v3197
        %3199 = vrot.lane.b32.xlu0 %v3198, 40
        %v3200 = vpop.permute.xlu0 %3199
        %3201 = vrot.lane.b32.xlu0 %v3197, 40
        %v3202 = vpop.permute.xlu0 %3201
        %v3205 = vrot.slane %v3179, 3
        %v3206 = vrot.slane %v3182, 3
        %v3207 = vsel %vm547, %v3205, %v3206
        %3208 = vrot.lane.b32.xlu0 %v3207, 124
        %v3209 = vpop.permute.xlu0 %3208
        %3210 = vrot.lane.b32.xlu0 %v3206, 124
        %v3211 = vpop.permute.xlu0 %3210
        %v3214 = vrot.slane %v3179, 4
        %v3215 = vrot.slane %v3182, 4
        %v3216 = vsel %vm567, %v3214, %v3215
        %3217 = vrot.lane.b32.xlu0 %v3216, 80
        %v3218 = vpop.permute.xlu0 %3217
        %3219 = vrot.lane.b32.xlu0 %v3215, 80
        %v3220 = vpop.permute.xlu0 %3219
        %v3223 = vsel %vm889, %v3179, %v3191
        %v3224 = vsel %vm889, %v3182, %v3193
        %v3225 = vsel %vm892, %v3191, %v3200
        %v3226 = vsel %vm892, %v3193, %v3202
        %v3227 = vsel %vm895, %v3225, %v3209
        %v3228 = vsel %vm895, %v3226, %v3211
        %v3229 = vsel %vm898, %v3209, %v3218
        %v3230 = vsel %vm898, %v3211, %v3220
        %v3231 = vpack.c.bf16 %v3224, %v3223
        %v3232 = vpack.c.bf16 %v3228, %v3227
        %v3233 = vpack.c.bf16 %v3230, %v3229
        %v3234 = vpack.c.bf16 %v3220, %v3218
        %v3236 = vsel %vm1170, %v3234, 0
        %3238 = vmatprep.subr.bf16.mxu0 %v1065
        %3239 = vmatpush1.bf16.msra.mxu0 %v1064
        %3240 = vmatprep.subr.bf16.mxu0 %v1067
        %3241 = vmatpush1.bf16.msra.mxu0 %v1066
        %3242 = vmatprep.subr.bf16.mxu0 %v1069
        %3243 = vmatpush1.bf16.msra.mxu0 %v1068
        %3244 = vmatprep.subr.bf16.mxu0 %v1071
        %3245 = vmatpush1.bf16.msra.mxu0 %v1070
        %3246 = vmatprep.subr.bf16.mxu0 %v1073
        %3247 = vmatpush1.bf16.msra.mxu0 %v1072
        %3248 = vmatprep.subr.bf16.mxu0 %v1075
        %3249 = vmatpush1.bf16.msra.mxu0 %v1074
        %3250 = vmatprep.subr.bf16.mxu0 %v1077
        %3251 = vmatpush1.bf16.msra.mxu0 %v1076
        %3252 = vmatprep.subr.bf16.mxu0 %v1079
        %3253 = vmatpush1.bf16.msra.mxu0 %v1078
        %3254 = vmatprep.subr.bf16.mxu0 %v1081
        %3255 = vmatpush1.bf16.msra.mxu0 %v1080
        %3256 = vmatprep.subr.bf16.mxu0 %v1083
        %3257 = vmatpush1.bf16.msra.mxu0 %v1082
        %3258 = vmatprep.subr.bf16.mxu0 %v1085
        %3259 = vmatpush1.bf16.msra.mxu0 %v1084
        %3260 = vmatprep.subr.bf16.mxu0 %v1087
        %3261 = vmatpush1.bf16.msra.mxu0 %v1086
        %3262 = vmatprep.subr.bf16.mxu0 %v1089
        %3263 = vmatpush1.bf16.msra.mxu0 %v1088
        %3264 = vmatprep.subr.bf16.mxu0 %v1091
        %3265 = vmatpush1.bf16.msra.mxu0 %v1090
        %3266 = vmatprep.subr.bf16.mxu0 %v1093
        %3267 = vmatpush1.bf16.msra.mxu0 %v1092
        %3268 = vmatprep.subr.bf16.mxu0 %v1095
        %3269 = vmatpush1.bf16.msra.mxu0 %v1094
        %3270 = vmatprep.mubr.bf16.mxu0 %v3232
        %3271 = vmatmul.mubr.bf16.gmra.mrb[0].mxu0 %v3231
        %v3272 = vpop.f32.mrb[0].mxu0
        %v3273 = vadd.f32 0.0, %v3272
        %v3274 = vpop.f32.mrb[0].mxu0
        %v3275 = vadd.f32 0.0, %v3274
        %v3276 = vpop.f32.mrb[0].mxu0
        %v3277 = vadd.f32 0.0, %v3276
        %v3278 = vpop.f32.mrb[0].mxu0
        %v3279 = vadd.f32 0.0, %v3278
        %3280 = vdwg.mxu0
        %3281 = vmatprep.subr.bf16.mxu0 %v1097
        %3282 = vmatpush1.bf16.msra.mxu0 %v1096
        %3283 = vmatprep.subr.bf16.mxu0 %v1099
        %3284 = vmatpush1.bf16.msra.mxu0 %v1098
        %3285 = vmatprep.subr.bf16.mxu0 %v1101
        %3286 = vmatpush1.bf16.msra.mxu0 %v1100
        %3287 = vmatprep.subr.bf16.mxu0 %v1103
        %3288 = vmatpush1.bf16.msra.mxu0 %v1102
        %3289 = vmatprep.subr.bf16.mxu0 %v1105
        %3290 = vmatpush1.bf16.msra.mxu0 %v1104
        %3291 = vmatprep.subr.bf16.mxu0 %v1107
        %3292 = vmatpush1.bf16.msra.mxu0 %v1106
        %3293 = vmatprep.subr.bf16.mxu0 %v1109
        %3294 = vmatpush1.bf16.msra.mxu0 %v1108
        %3295 = vmatprep.subr.bf16.mxu0 %v1111
        %3296 = vmatpush1.bf16.msra.mxu0 %v1110
        %3297 = vmatprep.subr.bf16.mxu0 %v1113
        %3298 = vmatpush1.bf16.msra.mxu0 %v1112
        %3299 = vmatprep.subr.bf16.mxu0 %v1115
        %3300 = vmatpush1.bf16.msra.mxu0 %v1114
        %3301 = vmatprep.subr.bf16.mxu0 %v1179
        %3302 = vmatpush1.bf16.msra.mxu0 %v1176
        %3303 = vmatprep.subr.bf16.mxu0 0
        %3304 = vmatpush1.bf16.msra.mxu0 0
        %3305 = vmatprep.subr.bf16.mxu0 0
        %3306 = vmatpush1.bf16.msra.mxu0 0
        %3307 = vmatprep.subr.bf16.mxu0 0
        %3308 = vmatpush1.bf16.msra.mxu0 0
        %3309 = vmatprep.subr.bf16.mxu0 0
        %3310 = vmatpush1.bf16.msra.mxu0 0
        %3311 = vmatprep.subr.bf16.mxu0 0
        %3312 = vmatpush1.bf16.msra.mxu0 0
        %3313 = vmatprep.mubr.bf16.mxu0 %v3236
        %3314 = vmatmul.mubr.bf16.gmra.mrb[0].mxu0 %v3233
        %v3315 = vpop.f32.mrb[0].mxu0
        %v3316 = vadd.f32 %v3273, %v3315
        %v3317 = vpop.f32.mrb[0].mxu0
        %v3318 = vadd.f32 %v3275, %v3317
        %v3319 = vpop.f32.mrb[0].mxu0
        %v3320 = vadd.f32 %v3277, %v3319
        %v3321 = vpop.f32.mrb[0].mxu0
        %v3322 = vadd.f32 %v3279, %v3321
        %3323 = vdwg.mxu0
        %v3324 = vmax.f32 %v3316, %v3318
        %v3325 = vmax.f32 %v3320, %v3322
        %v3328 = vrot.slane %v3324, 1
        %v3329 = vrot.slane %v3325, 1
        %v3330 = vsel %vm507, %v3328, %v3329
        %v3333 = vmax.f32 %v3324, %v3330
        %v3334 = vmax.f32 %v3325, %v3329
        %v3335 = vadd.f32 %v3333, %v494
        %v3336 = vmax.f32 %v3335, 0.0
        %v3337 = vadd.f32 %v3333, %v1284
        %v3338 = vmax.f32 %v3337, 0.0
        %v3339 = vadd.f32 %v3334, %v494
        %v3340 = vmax.f32 %v3339, 0.0
        %v3342 = vrot.slane %v3338, 2
        %3343 = vrot.lane.b32.xlu0 %v3342, 80
        %v3344 = vpop.permute.xlu0 %3343
        %v3346 = vrot.slane %v3338, 4
        %3347 = vrot.lane.b32.xlu0 %v3346, 32
        %v3348 = vpop.permute.xlu0 %3347
        %v3350 = vrot.slane %v3338, 6
        %3351 = vrot.lane.b32.xlu0 %v3350, 112
        %v3352 = vpop.permute.xlu0 %3351
        %3355 = vrot.lane.b32.xlu0 %v3340, 64
        %v3356 = vpop.permute.xlu0 %3355
        %v3358 = vsel %vm898, %v3336, %v3344
        %v3359 = vsel %vm579, %v3344, %v3348
        %v3360 = vsel %vm1309, %v3359, %v3352
        %v3361 = vsel %vm584, %v3352, %v3356
        %s3362 = scalar_lea.vmem %s415, 96
        %v3363 = vld [vmem:[%s3362] sm:$0xf]
        %v3364 = vld [vmem:[%s3362 + $0x4] sm:$0xf]
        %v3365 = vld [vmem:[%s3362 + $0x8] sm:$0xf]
        %v3366 = vld [vmem:[%s3362 + $0xc] sm:$0xf]
        %v3367 = vunpack.c.l.bf16 %v3363
        %v3368 = vunpack.c.l.bf16 %v3364
        %v3369 = vunpack.c.l.bf16 %v3365
        %v3370 = vunpack.c.l.bf16 %v3366
        %v3375 = vrot.slane %v3367, 1
        %v3376 = vrot.slane %v3368, 1
        %v3377 = vsel %vm507, %v3375, %v3376
        %v3378 = vrot.slane %v3369, 1
        %v3379 = vsel %vm507, %v3376, %v3378
        %v3380 = vrot.slane %v3370, 1
        %v3381 = vsel %vm507, %v3378, %v3380
        %3382 = vrot.lane.b32.xlu0 %v3377, 32
        %v3383 = vpop.permute.xlu0 %3382
        %3384 = vrot.lane.b32.xlu0 %v3379, 32
        %v3385 = vpop.permute.xlu0 %3384
        %3386 = vrot.lane.b32.xlu0 %v3381, 32
        %v3387 = vpop.permute.xlu0 %3386
        %3388 = vrot.lane.b32.xlu0 %v3380, 32
        %v3389 = vpop.permute.xlu0 %3388
        %v3394 = vrot.slane %v3367, 2
        %v3395 = vrot.slane %v3368, 2
        %v3396 = vsel %vm527, %v3394, %v3395
        %v3397 = vrot.slane %v3369, 2
        %v3398 = vsel %vm527, %v3395, %v3397
        %v3399 = vrot.slane %v3370, 2
        %v3400 = vsel %vm527, %v3397, %v3399
        %3401 = vrot.lane.b32.xlu0 %v3396, 64
        %v3402 = vpop.permute.xlu0 %3401
        %3403 = vrot.lane.b32.xlu0 %v3398, 64
        %v3404 = vpop.permute.xlu0 %3403
        %3405 = vrot.lane.b32.xlu0 %v3400, 64
        %v3406 = vpop.permute.xlu0 %3405
        %3407 = vrot.lane.b32.xlu0 %v3399, 64
        %v3408 = vpop.permute.xlu0 %3407
        %v3413 = vrot.slane %v3367, 3
        %v3414 = vrot.slane %v3368, 3
        %v3415 = vsel %vm547, %v3413, %v3414
        %v3416 = vrot.slane %v3369, 3
        %v3417 = vsel %vm547, %v3414, %v3416
        %v3418 = vrot.slane %v3370, 3
        %v3419 = vsel %vm547, %v3416, %v3418
        %3420 = vrot.lane.b32.xlu0 %v3415, 96
        %v3421 = vpop.permute.xlu0 %3420
        %3422 = vrot.lane.b32.xlu0 %v3417, 96
        %v3423 = vpop.permute.xlu0 %3422
        %3424 = vrot.lane.b32.xlu0 %v3419, 96
        %v3425 = vpop.permute.xlu0 %3424
        %3426 = vrot.lane.b32.xlu0 %v3418, 96
        %v3427 = vpop.permute.xlu0 %3426
        %v3432 = vrot.slane %v3367, 4
        %v3433 = vrot.slane %v3368, 4
        %v3434 = vsel %vm567, %v3432, %v3433
        %v3435 = vrot.slane %v3369, 4
        %v3436 = vsel %vm567, %v3433, %v3435
        %v3437 = vrot.slane %v3370, 4
        %v3438 = vsel %vm567, %v3435, %v3437
        %v3443 = vsel %vm579, %v3367, %v3383
        %v3444 = vsel %vm579, %v3368, %v3385
        %v3445 = vsel %vm579, %v3369, %v3387
        %v3446 = vsel %vm579, %v3370, %v3389
        %v3447 = vsel %vm584, %v3443, %v3402
        %v3448 = vsel %vm584, %v3444, %v3404
        %v3449 = vsel %vm584, %v3445, %v3406
        %v3450 = vsel %vm584, %v3446, %v3408
        %v3451 = vsel %vm589, %v3447, %v3421
        %v3452 = vsel %vm589, %v3448, %v3423
        %v3453 = vsel %vm589, %v3449, %v3425
        %v3454 = vsel %vm589, %v3450, %v3427
        %v3455 = vpack.c.bf16 %v3452, %v3451
        %v3456 = vpack.c.bf16 %v3436, %v3434
        %v3457 = vpack.c.bf16 %v3454, %v3453
        %v3458 = vpack.c.bf16 %v3437, %v3438
        %v3460 = vsel %vm579, %v3456, 0
        %v3463 = vsel %vm579, %v3458, 0
        %3465 = vmatprep.subr.bf16.mxu0 %v659
        %3466 = vmatpush1.bf16.msra.mxu0 %v658
        %3467 = vmatprep.subr.bf16.mxu0 %v661
        %3468 = vmatpush1.bf16.msra.mxu0 %v660
        %3469 = vmatprep.subr.bf16.mxu0 %v663
        %3470 = vmatpush1.bf16.msra.mxu0 %v662
        %3471 = vmatprep.subr.bf16.mxu0 %v665
        %3472 = vmatpush1.bf16.msra.mxu0 %v664
        %3473 = vmatprep.subr.bf16.mxu0 %v667
        %3474 = vmatpush1.bf16.msra.mxu0 %v666
        %3475 = vmatprep.subr.bf16.mxu0 %v669
        %3476 = vmatpush1.bf16.msra.mxu0 %v668
        %3477 = vmatprep.subr.bf16.mxu0 %v671
        %3478 = vmatpush1.bf16.msra.mxu0 %v670
        %3479 = vmatprep.subr.bf16.mxu0 %v673
        %3480 = vmatpush1.bf16.msra.mxu0 %v672
        %3481 = vmatprep.subr.bf16.mxu0 %v675
        %3482 = vmatpush1.bf16.msra.mxu0 %v674
        %3483 = vmatprep.subr.bf16.mxu0 %v677
        %3484 = vmatpush1.bf16.msra.mxu0 %v676
        %3485 = vmatprep.subr.bf16.mxu0 0
        %3486 = vmatpush1.bf16.msra.mxu0 0
        %3487 = vmatprep.subr.bf16.mxu0 0
        %3488 = vmatpush1.bf16.msra.mxu0 0
        %3489 = vmatprep.subr.bf16.mxu0 0
        %3490 = vmatpush1.bf16.msra.mxu0 0
        %3491 = vmatprep.subr.bf16.mxu0 0
        %3492 = vmatpush1.bf16.msra.mxu0 0
        %3493 = vmatprep.subr.bf16.mxu0 0
        %3494 = vmatpush1.bf16.msra.mxu0 0
        %3495 = vmatprep.subr.bf16.mxu0 0
        %3496 = vmatpush1.bf16.msra.mxu0 0
        %3497 = vmatprep.mubr.bf16.mxu0 %v3460
        %3498 = vmatmul.mubr.bf16.gmra.mrb[0].mxu0 %v3455
        %v3499 = vpop.f32.mrb[0].mxu0
        %v3500 = vadd.f32 0.0, %v3499
        %v3501 = vpop.f32.mrb[0].mxu0
        %v3502 = vadd.f32 0.0, %v3501
        %v3503 = vpop.f32.mrb[0].mxu0
        %v3504 = vadd.f32 0.0, %v3503
        %v3505 = vpop.f32.mrb[0].mxu0
        %v3506 = vadd.f32 0.0, %v3505
        %3507 = vmatprep.mubr.bf16.mxu0 %v3463
        %3508 = vmatmul.mubr.bf16.gmra.mrb[0].mxu0 %v3457
        %v3509 = vpop.f32.mrb[0].mxu0
        %v3510 = vadd.f32 0.0, %v3509
        %v3511 = vpop.f32.mrb[0].mxu0
        %v3512 = vadd.f32 0.0, %v3511
        %v3513 = vpop.f32.mrb[0].mxu0
        %v3514 = vadd.f32 0.0, %v3513
        %v3515 = vpop.f32.mrb[0].mxu0
        %v3516 = vadd.f32 0.0, %v3515
        %3517 = vdwg.mxu0
        %v3518 = vmax.f32 %v3500, %v3502
        %v3519 = vmax.f32 %v3504, %v3506
        %v3520 = vmax.f32 %v3510, %v3512
        %v3521 = vmax.f32 %v3514, %v3516
        %v3526 = vrot.slane %v3518, 1
        %v3527 = vrot.slane %v3519, 1
        %v3528 = vsel %vm507, %v3526, %v3527
        %v3529 = vrot.slane %v3520, 1
        %v3530 = vsel %vm507, %v3527, %v3529
        %v3531 = vrot.slane %v3521, 1
        %v3532 = vsel %vm507, %v3529, %v3531
        %v3537 = vmax.f32 %v3518, %v3528
        %v3538 = vmax.f32 %v3519, %v3530
        %v3539 = vmax.f32 %v3520, %v3532
        %v3540 = vmax.f32 %v3521, %v3531
        %v3541 = vadd.f32 %v3537, %v784
        %v3542 = vadd.f32 %v3538, %v784
        %v3543 = vadd.f32 %v3539, %v784
        %v3544 = vadd.f32 %v3540, %v784
        %v3545 = vmax.f32 %v3541, 0.0
        %v3546 = vmax.f32 %v3542, 0.0
        %v3547 = vmax.f32 %v3543, 0.0
        %v3548 = vmax.f32 %v3544, 0.0
        %v3549 = vpack.c.bf16 %v3546, %v3545
        %v3550 = vpack.c.bf16 %v3548, %v3547
        %v3552 = vand.u32 %v3550, %v806
        %3554 = vmatprep.subr.bf16.mxu0 0
        %3555 = vmatpush1.bf16.msra.mxu0 %v3549
        %3556 = vmatprep.subr.bf16.mxu0 0
        %3557 = vmatpush1.bf16.msra.mxu0 %v3552
        %3558 = vmatprep.subr.bf16.mxu0 0
        %3559 = vmatpush1.bf16.msra.mxu0 0
        %3560 = vmatprep.subr.bf16.mxu0 0
        %3561 = vmatpush1.bf16.msra.mxu0 0
        %3562 = vmatprep.subr.bf16.mxu0 0
        %3563 = vmatpush1.bf16.msra.mxu0 0
        %3564 = vmatprep.subr.bf16.mxu0 0
        %3565 = vmatpush1.bf16.msra.mxu0 0
        %3566 = vmatprep.subr.bf16.mxu0 0
        %3567 = vmatpush1.bf16.msra.mxu0 0
        %3568 = vmatprep.subr.bf16.mxu0 0
        %3569 = vmatpush1.bf16.msra.mxu0 0
        %3570 = vmatprep.subr.bf16.mxu0 0
        %3571 = vmatpush1.bf16.msra.mxu0 0
        %3572 = vmatprep.subr.bf16.mxu0 0
        %3573 = vmatpush1.bf16.msra.mxu0 0
        %3574 = vmatprep.subr.bf16.mxu0 0
        %3575 = vmatpush1.bf16.msra.mxu0 0
        %3576 = vmatprep.subr.bf16.mxu0 0
        %3577 = vmatpush1.bf16.msra.mxu0 0
        %3578 = vmatprep.subr.bf16.mxu0 0
        %3579 = vmatpush1.bf16.msra.mxu0 0
        %3580 = vmatprep.subr.bf16.mxu0 0
        %3581 = vmatpush1.bf16.msra.mxu0 0
        %3582 = vmatprep.subr.bf16.mxu0 0
        %3583 = vmatpush1.bf16.msra.mxu0 0
        %3584 = vmatprep.subr.bf16.mxu0 0
        %3585 = vmatpush1.bf16.msra.mxu0 0
        %3586 = vmatprep.mubr.bf16.mxu0 0
        %3587 = vmatmul.mubr.bf16.gmra.mrb[0].mxu0 %v803
        %v3588 = vpop.f32.mrb[0].mxu0
        %v3589 = vadd.f32 0.0, %v3588
        %v3590 = vpop.f32.mrb[0].mxu0
        %v3591 = vpop.f32.mrb[0].mxu0
        %v3592 = vadd.f32 0.0, %v3591
        %v3593 = vpop.f32.mrb[0].mxu0
        %3594 = vdwg.mxu0
        %v3597 = vrot.slane %v3589, 1
        %v3598 = vrot.slane %v3592, 1
        %v3599 = vsel %vm507, %v3597, %v3598
        %3600 = vrot.lane.b32.xlu0 %v3599, 84
        %v3601 = vpop.permute.xlu0 %3600
        %3602 = vrot.lane.b32.xlu0 %v3598, 84
        %v3603 = vpop.permute.xlu0 %3602
        %v3606 = vrot.slane %v3589, 2
        %v3607 = vrot.slane %v3592, 2
        %v3608 = vsel %vm527, %v3606, %v3607
        %3609 = vrot.lane.b32.xlu0 %v3608, 40
        %v3610 = vpop.permute.xlu0 %3609
        %3611 = vrot.lane.b32.xlu0 %v3607, 40
        %v3612 = vpop.permute.xlu0 %3611
        %v3615 = vrot.slane %v3589, 3
        %v3616 = vrot.slane %v3592, 3
        %v3617 = vsel %vm547, %v3615, %v3616
        %3618 = vrot.lane.b32.xlu0 %v3617, 124
        %v3619 = vpop.permute.xlu0 %3618
        %3620 = vrot.lane.b32.xlu0 %v3616, 124
        %v3621 = vpop.permute.xlu0 %3620
        %v3624 = vrot.slane %v3589, 4
        %v3625 = vrot.slane %v3592, 4
        %v3626 = vsel %vm567, %v3624, %v3625
        %3627 = vrot.lane.b32.xlu0 %v3626, 80
        %v3628 = vpop.permute.xlu0 %3627
        %3629 = vrot.lane.b32.xlu0 %v3625, 80
        %v3630 = vpop.permute.xlu0 %3629
        %v3633 = vsel %vm889, %v3589, %v3601
        %v3634 = vsel %vm889, %v3592, %v3603
        %v3635 = vsel %vm892, %v3601, %v3610
        %v3636 = vsel %vm892, %v3603, %v3612
        %v3637 = vsel %vm895, %v3635, %v3619
        %v3638 = vsel %vm895, %v3636, %v3621
        %v3639 = vsel %vm898, %v3619, %v3628
        %v3640 = vsel %vm898, %v3621, %v3630
        %v3641 = vpack.c.bf16 %v3634, %v3633
        %v3642 = vpack.c.bf16 %v3638, %v3637
        %v3643 = vpack.c.bf16 %v3640, %v3639
        %v3644 = vpack.c.bf16 %v3630, %v3628
        %v3646 = vsel %vm1170, %v3644, 0
        %3648 = vmatprep.subr.bf16.mxu0 %v1065
        %3649 = vmatpush1.bf16.msra.mxu0 %v1064
        %3650 = vmatprep.subr.bf16.mxu0 %v1067
        %3651 = vmatpush1.bf16.msra.mxu0 %v1066
        %3652 = vmatprep.subr.bf16.mxu0 %v1069
        %3653 = vmatpush1.bf16.msra.mxu0 %v1068
        %3654 = vmatprep.subr.bf16.mxu0 %v1071
        %3655 = vmatpush1.bf16.msra.mxu0 %v1070
        %3656 = vmatprep.subr.bf16.mxu0 %v1073
        %3657 = vmatpush1.bf16.msra.mxu0 %v1072
        %3658 = vmatprep.subr.bf16.mxu0 %v1075
        %3659 = vmatpush1.bf16.msra.mxu0 %v1074
        %3660 = vmatprep.subr.bf16.mxu0 %v1077
        %3661 = vmatpush1.bf16.msra.mxu0 %v1076
        %3662 = vmatprep.subr.bf16.mxu0 %v1079
        %3663 = vmatpush1.bf16.msra.mxu0 %v1078
        %3664 = vmatprep.subr.bf16.mxu0 %v1081
        %3665 = vmatpush1.bf16.msra.mxu0 %v1080
        %3666 = vmatprep.subr.bf16.mxu0 %v1083
        %3667 = vmatpush1.bf16.msra.mxu0 %v1082
        %3668 = vmatprep.subr.bf16.mxu0 %v1085
        %3669 = vmatpush1.bf16.msra.mxu0 %v1084
        %3670 = vmatprep.subr.bf16.mxu0 %v1087
        %3671 = vmatpush1.bf16.msra.mxu0 %v1086
        %3672 = vmatprep.subr.bf16.mxu0 %v1089
        %3673 = vmatpush1.bf16.msra.mxu0 %v1088
        %3674 = vmatprep.subr.bf16.mxu0 %v1091
        %3675 = vmatpush1.bf16.msra.mxu0 %v1090
        %3676 = vmatprep.subr.bf16.mxu0 %v1093
        %3677 = vmatpush1.bf16.msra.mxu0 %v1092
        %3678 = vmatprep.subr.bf16.mxu0 %v1095
        %3679 = vmatpush1.bf16.msra.mxu0 %v1094
        %3680 = vmatprep.mubr.bf16.mxu0 %v3642
        %3681 = vmatmul.mubr.bf16.gmra.mrb[0].mxu0 %v3641
        %v3682 = vpop.f32.mrb[0].mxu0
        %v3683 = vadd.f32 0.0, %v3682
        %v3684 = vpop.f32.mrb[0].mxu0
        %v3685 = vadd.f32 0.0, %v3684
        %v3686 = vpop.f32.mrb[0].mxu0
        %v3687 = vadd.f32 0.0, %v3686
        %v3688 = vpop.f32.mrb[0].mxu0
        %v3689 = vadd.f32 0.0, %v3688
        %3690 = vdwg.mxu0
        %3691 = vmatprep.subr.bf16.mxu0 %v1097
        %3692 = vmatpush1.bf16.msra.mxu0 %v1096
        %3693 = vmatprep.subr.bf16.mxu0 %v1099
        %3694 = vmatpush1.bf16.msra.mxu0 %v1098
        %3695 = vmatprep.subr.bf16.mxu0 %v1101
        %3696 = vmatpush1.bf16.msra.mxu0 %v1100
        %3697 = vmatprep.subr.bf16.mxu0 %v1103
        %3698 = vmatpush1.bf16.msra.mxu0 %v1102
        %3699 = vmatprep.subr.bf16.mxu0 %v1105
        %3700 = vmatpush1.bf16.msra.mxu0 %v1104
        %3701 = vmatprep.subr.bf16.mxu0 %v1107
        %3702 = vmatpush1.bf16.msra.mxu0 %v1106
        %3703 = vmatprep.subr.bf16.mxu0 %v1109
        %3704 = vmatpush1.bf16.msra.mxu0 %v1108
        %3705 = vmatprep.subr.bf16.mxu0 %v1111
        %3706 = vmatpush1.bf16.msra.mxu0 %v1110
        %3707 = vmatprep.subr.bf16.mxu0 %v1113
        %3708 = vmatpush1.bf16.msra.mxu0 %v1112
        %3709 = vmatprep.subr.bf16.mxu0 %v1115
        %3710 = vmatpush1.bf16.msra.mxu0 %v1114
        %3711 = vmatprep.subr.bf16.mxu0 %v1179
        %3712 = vmatpush1.bf16.msra.mxu0 %v1176
        %3713 = vmatprep.subr.bf16.mxu0 0
        %3714 = vmatpush1.bf16.msra.mxu0 0
        %3715 = vmatprep.subr.bf16.mxu0 0
        %3716 = vmatpush1.bf16.msra.mxu0 0
        %3717 = vmatprep.subr.bf16.mxu0 0
        %3718 = vmatpush1.bf16.msra.mxu0 0
        %3719 = vmatprep.subr.bf16.mxu0 0
        %3720 = vmatpush1.bf16.msra.mxu0 0
        %3721 = vmatprep.subr.bf16.mxu0 0
        %3722 = vmatpush1.bf16.msra.mxu0 0
        %3723 = vmatprep.mubr.bf16.mxu0 %v3646
        %3724 = vmatmul.mubr.bf16.gmra.mrb[0].mxu0 %v3643
        %v3725 = vpop.f32.mrb[0].mxu0
        %v3726 = vadd.f32 %v3683, %v3725
        %v3727 = vpop.f32.mrb[0].mxu0
        %v3728 = vadd.f32 %v3685, %v3727
        %v3729 = vpop.f32.mrb[0].mxu0
        %v3730 = vadd.f32 %v3687, %v3729
        %v3731 = vpop.f32.mrb[0].mxu0
        %v3732 = vadd.f32 %v3689, %v3731
        %3733 = vdwg.mxu0
        %v3734 = vmax.f32 %v3726, %v3728
        %v3735 = vmax.f32 %v3730, %v3732
        %v3738 = vrot.slane %v3734, 1
        %v3739 = vrot.slane %v3735, 1
        %v3740 = vsel %vm507, %v3738, %v3739
        %v3743 = vmax.f32 %v3734, %v3740
        %v3744 = vmax.f32 %v3735, %v3739
        %v3745 = vadd.f32 %v3743, %v494
        %v3746 = vmax.f32 %v3745, 0.0
        %v3747 = vadd.f32 %v3743, %v1284
        %v3748 = vmax.f32 %v3747, 0.0
        %v3749 = vadd.f32 %v3744, %v494
        %v3750 = vmax.f32 %v3749, 0.0
        %v3752 = vrot.slane %v3748, 2
        %3753 = vrot.lane.b32.xlu0 %v3752, 80
        %v3754 = vpop.permute.xlu0 %3753
        %v3756 = vrot.slane %v3748, 4
        %3757 = vrot.lane.b32.xlu0 %v3756, 32
        %v3758 = vpop.permute.xlu0 %3757
        %v3760 = vrot.slane %v3748, 6
        %3761 = vrot.lane.b32.xlu0 %v3760, 112
        %v3762 = vpop.permute.xlu0 %3761
        %3765 = vrot.lane.b32.xlu0 %v3750, 64
        %v3766 = vpop.permute.xlu0 %3765
        %v3768 = vsel %vm898, %v3746, %v3754
        %v3769 = vsel %vm579, %v3754, %v3758
        %v3770 = vsel %vm1309, %v3769, %v3762
        %v3771 = vsel %vm584, %v3762, %v3766
        %s3772 = scalar_lea.vmem %s415, 112
        %v3773 = vld [vmem:[%s3772] sm:$0xf]
        %v3774 = vld [vmem:[%s3772 + $0x4] sm:$0xf]
        %v3775 = vld [vmem:[%s3772 + $0x8] sm:$0xf]
        %v3776 = vld [vmem:[%s3772 + $0xc] sm:$0xf]
        %v3777 = vunpack.c.l.bf16 %v3773
        %v3778 = vunpack.c.l.bf16 %v3774
        %v3779 = vunpack.c.l.bf16 %v3775
        %v3780 = vunpack.c.l.bf16 %v3776
        %v3785 = vrot.slane %v3777, 1
        %v3786 = vrot.slane %v3778, 1
        %v3787 = vsel %vm507, %v3785, %v3786
        %v3788 = vrot.slane %v3779, 1
        %v3789 = vsel %vm507, %v3786, %v3788
        %v3790 = vrot.slane %v3780, 1
        %v3791 = vsel %vm507, %v3788, %v3790
        %3792 = vrot.lane.b32.xlu0 %v3787, 32
        %v3793 = vpop.permute.xlu0 %3792
        %3794 = vrot.lane.b32.xlu0 %v3789, 32
        %v3795 = vpop.permute.xlu0 %3794
        %3796 = vrot.lane.b32.xlu0 %v3791, 32
        %v3797 = vpop.permute.xlu0 %3796
        %3798 = vrot.lane.b32.xlu0 %v3790, 32
        %v3799 = vpop.permute.xlu0 %3798
        %v3804 = vrot.slane %v3777, 2
        %v3805 = vrot.slane %v3778, 2
        %v3806 = vsel %vm527, %v3804, %v3805
        %v3807 = vrot.slane %v3779, 2
        %v3808 = vsel %vm527, %v3805, %v3807
        %v3809 = vrot.slane %v3780, 2
        %v3810 = vsel %vm527, %v3807, %v3809
        %3811 = vrot.lane.b32.xlu0 %v3806, 64
        %v3812 = vpop.permute.xlu0 %3811
        %3813 = vrot.lane.b32.xlu0 %v3808, 64
        %v3814 = vpop.permute.xlu0 %3813
        %3815 = vrot.lane.b32.xlu0 %v3810, 64
        %v3816 = vpop.permute.xlu0 %3815
        %3817 = vrot.lane.b32.xlu0 %v3809, 64
        %v3818 = vpop.permute.xlu0 %3817
        %v3823 = vrot.slane %v3777, 3
        %v3824 = vrot.slane %v3778, 3
        %v3825 = vsel %vm547, %v3823, %v3824
        %v3826 = vrot.slane %v3779, 3
        %v3827 = vsel %vm547, %v3824, %v3826
        %v3828 = vrot.slane %v3780, 3
        %v3829 = vsel %vm547, %v3826, %v3828
        %3830 = vrot.lane.b32.xlu0 %v3825, 96
        %v3831 = vpop.permute.xlu0 %3830
        %3832 = vrot.lane.b32.xlu0 %v3827, 96
        %v3833 = vpop.permute.xlu0 %3832
        %3834 = vrot.lane.b32.xlu0 %v3829, 96
        %v3835 = vpop.permute.xlu0 %3834
        %3836 = vrot.lane.b32.xlu0 %v3828, 96
        %v3837 = vpop.permute.xlu0 %3836
        %v3842 = vrot.slane %v3777, 4
        %v3843 = vrot.slane %v3778, 4
        %v3844 = vsel %vm567, %v3842, %v3843
        %v3845 = vrot.slane %v3779, 4
        %v3846 = vsel %vm567, %v3843, %v3845
        %v3847 = vrot.slane %v3780, 4
        %v3848 = vsel %vm567, %v3845, %v3847
        %v3853 = vsel %vm579, %v3777, %v3793
        %v3854 = vsel %vm579, %v3778, %v3795
        %v3855 = vsel %vm579, %v3779, %v3797
        %v3856 = vsel %vm579, %v3780, %v3799
        %v3857 = vsel %vm584, %v3853, %v3812
        %v3858 = vsel %vm584, %v3854, %v3814
        %v3859 = vsel %vm584, %v3855, %v3816
        %v3860 = vsel %vm584, %v3856, %v3818
        %v3861 = vsel %vm589, %v3857, %v3831
        %v3862 = vsel %vm589, %v3858, %v3833
        %v3863 = vsel %vm589, %v3859, %v3835
        %v3864 = vsel %vm589, %v3860, %v3837
        %v3865 = vpack.c.bf16 %v3862, %v3861
        %v3866 = vpack.c.bf16 %v3846, %v3844
        %v3867 = vpack.c.bf16 %v3864, %v3863
        %v3868 = vpack.c.bf16 %v3847, %v3848
        %v3870 = vsel %vm579, %v3866, 0
        %v3873 = vsel %vm579, %v3868, 0
        %3875 = vmatprep.subr.bf16.mxu0 %v659
        %3876 = vmatpush1.bf16.msra.mxu0 %v658
        %3877 = vmatprep.subr.bf16.mxu0 %v661
        %3878 = vmatpush1.bf16.msra.mxu0 %v660
        %3879 = vmatprep.subr.bf16.mxu0 %v663
        %3880 = vmatpush1.bf16.msra.mxu0 %v662
        %3881 = vmatprep.subr.bf16.mxu0 %v665
        %3882 = vmatpush1.bf16.msra.mxu0 %v664
        %3883 = vmatprep.subr.bf16.mxu0 %v667
        %3884 = vmatpush1.bf16.msra.mxu0 %v666
        %3885 = vmatprep.subr.bf16.mxu0 %v669
        %3886 = vmatpush1.bf16.msra.mxu0 %v668
        %3887 = vmatprep.subr.bf16.mxu0 %v671
        %3888 = vmatpush1.bf16.msra.mxu0 %v670
        %3889 = vmatprep.subr.bf16.mxu0 %v673
        %3890 = vmatpush1.bf16.msra.mxu0 %v672
        %3891 = vmatprep.subr.bf16.mxu0 %v675
        %3892 = vmatpush1.bf16.msra.mxu0 %v674
        %3893 = vmatprep.subr.bf16.mxu0 %v677
        %3894 = vmatpush1.bf16.msra.mxu0 %v676
        %3895 = vmatprep.subr.bf16.mxu0 0
        %3896 = vmatpush1.bf16.msra.mxu0 0
        %3897 = vmatprep.subr.bf16.mxu0 0
        %3898 = vmatpush1.bf16.msra.mxu0 0
        %3899 = vmatprep.subr.bf16.mxu0 0
        %3900 = vmatpush1.bf16.msra.mxu0 0
        %3901 = vmatprep.subr.bf16.mxu0 0
        %3902 = vmatpush1.bf16.msra.mxu0 0
        %3903 = vmatprep.subr.bf16.mxu0 0
        %3904 = vmatpush1.bf16.msra.mxu0 0
        %3905 = vmatprep.subr.bf16.mxu0 0
        %3906 = vmatpush1.bf16.msra.mxu0 0
        %3907 = vmatprep.mubr.bf16.mxu0 %v3870
        %3908 = vmatmul.mubr.bf16.gmra.mrb[0].mxu0 %v3865
        %v3909 = vpop.f32.mrb[0].mxu0
        %v3910 = vadd.f32 0.0, %v3909
        %v3911 = vpop.f32.mrb[0].mxu0
        %v3912 = vadd.f32 0.0, %v3911
        %v3913 = vpop.f32.mrb[0].mxu0
        %v3914 = vadd.f32 0.0, %v3913
        %v3915 = vpop.f32.mrb[0].mxu0
        %v3916 = vadd.f32 0.0, %v3915
        %3917 = vmatprep.mubr.bf16.mxu0 %v3873
        %3918 = vmatmul.mubr.bf16.gmra.mrb[0].mxu0 %v3867
        %v3919 = vpop.f32.mrb[0].mxu0
        %v3920 = vadd.f32 0.0, %v3919
        %v3921 = vpop.f32.mrb[0].mxu0
        %v3922 = vadd.f32 0.0, %v3921
        %v3923 = vpop.f32.mrb[0].mxu0
        %v3924 = vadd.f32 0.0, %v3923
        %v3925 = vpop.f32.mrb[0].mxu0
        %v3926 = vadd.f32 0.0, %v3925
        %3927 = vdwg.mxu0
        %v3928 = vmax.f32 %v3910, %v3912
        %v3929 = vmax.f32 %v3914, %v3916
        %v3930 = vmax.f32 %v3920, %v3922
        %v3931 = vmax.f32 %v3924, %v3926
        %v3936 = vrot.slane %v3928, 1
        %v3937 = vrot.slane %v3929, 1
        %v3938 = vsel %vm507, %v3936, %v3937
        %v3939 = vrot.slane %v3930, 1
        %v3940 = vsel %vm507, %v3937, %v3939
        %v3941 = vrot.slane %v3931, 1
        %v3942 = vsel %vm507, %v3939, %v3941
        %v3947 = vmax.f32 %v3928, %v3938
        %v3948 = vmax.f32 %v3929, %v3940
        %v3949 = vmax.f32 %v3930, %v3942
        %v3950 = vmax.f32 %v3931, %v3941
        %v3951 = vadd.f32 %v3947, %v784
        %v3952 = vadd.f32 %v3948, %v784
        %v3953 = vadd.f32 %v3949, %v784
        %v3954 = vadd.f32 %v3950, %v784
        %v3955 = vmax.f32 %v3951, 0.0
        %v3956 = vmax.f32 %v3952, 0.0
        %v3957 = vmax.f32 %v3953, 0.0
        %v3958 = vmax.f32 %v3954, 0.0
        %v3959 = vpack.c.bf16 %v3956, %v3955
        %v3960 = vpack.c.bf16 %v3958, %v3957
        %v3962 = vand.u32 %v3960, %v806
        %3964 = vmatprep.subr.bf16.mxu0 0
        %3965 = vmatpush1.bf16.msra.mxu0 %v3959
        %3966 = vmatprep.subr.bf16.mxu0 0
        %3967 = vmatpush1.bf16.msra.mxu0 %v3962
        %3968 = vmatprep.subr.bf16.mxu0 0
        %3969 = vmatpush1.bf16.msra.mxu0 0
        %3970 = vmatprep.subr.bf16.mxu0 0
        %3971 = vmatpush1.bf16.msra.mxu0 0
        %3972 = vmatprep.subr.bf16.mxu0 0
        %3973 = vmatpush1.bf16.msra.mxu0 0
        %3974 = vmatprep.subr.bf16.mxu0 0
        %3975 = vmatpush1.bf16.msra.mxu0 0
        %3976 = vmatprep.subr.bf16.mxu0 0
        %3977 = vmatpush1.bf16.msra.mxu0 0
        %3978 = vmatprep.subr.bf16.mxu0 0
        %3979 = vmatpush1.bf16.msra.mxu0 0
        %3980 = vmatprep.subr.bf16.mxu0 0
        %3981 = vmatpush1.bf16.msra.mxu0 0
        %3982 = vmatprep.subr.bf16.mxu0 0
        %3983 = vmatpush1.bf16.msra.mxu0 0
        %3984 = vmatprep.subr.bf16.mxu0 0
        %3985 = vmatpush1.bf16.msra.mxu0 0
        %3986 = vmatprep.subr.bf16.mxu0 0
        %3987 = vmatpush1.bf16.msra.mxu0 0
        %3988 = vmatprep.subr.bf16.mxu0 0
        %3989 = vmatpush1.bf16.msra.mxu0 0
        %3990 = vmatprep.subr.bf16.mxu0 0
        %3991 = vmatpush1.bf16.msra.mxu0 0
        %3992 = vmatprep.subr.bf16.mxu0 0
        %3993 = vmatpush1.bf16.msra.mxu0 0
        %3994 = vmatprep.subr.bf16.mxu0 0
        %3995 = vmatpush1.bf16.msra.mxu0 0
        %3996 = vmatprep.mubr.bf16.mxu0 0
        %3997 = vmatmul.mubr.bf16.gmra.mrb[0].mxu0 %v803
        %v3998 = vpop.f32.mrb[0].mxu0
        %v3999 = vadd.f32 0.0, %v3998
        %v4000 = vpop.f32.mrb[0].mxu0
        %v4001 = vpop.f32.mrb[0].mxu0
        %v4002 = vadd.f32 0.0, %v4001
        %v4003 = vpop.f32.mrb[0].mxu0
        %4004 = vdwg.mxu0
        %v4007 = vrot.slane %v3999, 1
        %v4008 = vrot.slane %v4002, 1
        %v4009 = vsel %vm507, %v4007, %v4008
        %4010 = vrot.lane.b32.xlu0 %v4009, 84
        %v4011 = vpop.permute.xlu0 %4010
        %4012 = vrot.lane.b32.xlu0 %v4008, 84
        %v4013 = vpop.permute.xlu0 %4012
        %v4016 = vrot.slane %v3999, 2
        %v4017 = vrot.slane %v4002, 2
        %v4018 = vsel %vm527, %v4016, %v4017
        %4019 = vrot.lane.b32.xlu0 %v4018, 40
        %v4020 = vpop.permute.xlu0 %4019
        %4021 = vrot.lane.b32.xlu0 %v4017, 40
        %v4022 = vpop.permute.xlu0 %4021
        %v4025 = vrot.slane %v3999, 3
        %v4026 = vrot.slane %v4002, 3
        %v4027 = vsel %vm547, %v4025, %v4026
        %4028 = vrot.lane.b32.xlu0 %v4027, 124
        %v4029 = vpop.permute.xlu0 %4028
        %4030 = vrot.lane.b32.xlu0 %v4026, 124
        %v4031 = vpop.permute.xlu0 %4030
        %v4034 = vrot.slane %v3999, 4
        %v4035 = vrot.slane %v4002, 4
        %v4036 = vsel %vm567, %v4034, %v4035
        %4037 = vrot.lane.b32.xlu0 %v4036, 80
        %v4038 = vpop.permute.xlu0 %4037
        %4039 = vrot.lane.b32.xlu0 %v4035, 80
        %v4040 = vpop.permute.xlu0 %4039
        %v4043 = vsel %vm889, %v3999, %v4011
        %v4044 = vsel %vm889, %v4002, %v4013
        %v4045 = vsel %vm892, %v4011, %v4020
        %v4046 = vsel %vm892, %v4013, %v4022
        %v4047 = vsel %vm895, %v4045, %v4029
        %v4048 = vsel %vm895, %v4046, %v4031
        %v4049 = vsel %vm898, %v4029, %v4038
        %v4050 = vsel %vm898, %v4031, %v4040
        %v4051 = vpack.c.bf16 %v4044, %v4043
        %v4052 = vpack.c.bf16 %v4048, %v4047
        %v4053 = vpack.c.bf16 %v4050, %v4049
        %v4054 = vpack.c.bf16 %v4040, %v4038
        %v4056 = vsel %vm1170, %v4054, 0
        %4058 = vmatprep.subr.bf16.mxu0 %v1065
        %4059 = vmatpush1.bf16.msra.mxu0 %v1064
        %4060 = vmatprep.subr.bf16.mxu0 %v1067
        %4061 = vmatpush1.bf16.msra.mxu0 %v1066
        %4062 = vmatprep.subr.bf16.mxu0 %v1069
        %4063 = vmatpush1.bf16.msra.mxu0 %v1068
        %4064 = vmatprep.subr.bf16.mxu0 %v1071
        %4065 = vmatpush1.bf16.msra.mxu0 %v1070
        %4066 = vmatprep.subr.bf16.mxu0 %v1073
        %4067 = vmatpush1.bf16.msra.mxu0 %v1072
        %4068 = vmatprep.subr.bf16.mxu0 %v1075
        %4069 = vmatpush1.bf16.msra.mxu0 %v1074
        %4070 = vmatprep.subr.bf16.mxu0 %v1077
        %4071 = vmatpush1.bf16.msra.mxu0 %v1076
        %4072 = vmatprep.subr.bf16.mxu0 %v1079
        %4073 = vmatpush1.bf16.msra.mxu0 %v1078
        %4074 = vmatprep.subr.bf16.mxu0 %v1081
        %4075 = vmatpush1.bf16.msra.mxu0 %v1080
        %4076 = vmatprep.subr.bf16.mxu0 %v1083
        %4077 = vmatpush1.bf16.msra.mxu0 %v1082
        %4078 = vmatprep.subr.bf16.mxu0 %v1085
        %4079 = vmatpush1.bf16.msra.mxu0 %v1084
        %4080 = vmatprep.subr.bf16.mxu0 %v1087
        %4081 = vmatpush1.bf16.msra.mxu0 %v1086
        %4082 = vmatprep.subr.bf16.mxu0 %v1089
        %4083 = vmatpush1.bf16.msra.mxu0 %v1088
        %4084 = vmatprep.subr.bf16.mxu0 %v1091
        %4085 = vmatpush1.bf16.msra.mxu0 %v1090
        %4086 = vmatprep.subr.bf16.mxu0 %v1093
        %4087 = vmatpush1.bf16.msra.mxu0 %v1092
        %4088 = vmatprep.subr.bf16.mxu0 %v1095
        %4089 = vmatpush1.bf16.msra.mxu0 %v1094
        %4090 = vmatprep.mubr.bf16.mxu0 %v4052
        %4091 = vmatmul.mubr.bf16.gmra.mrb[0].mxu0 %v4051
        %v4092 = vpop.f32.mrb[0].mxu0
        %v4093 = vadd.f32 0.0, %v4092
        %v4094 = vpop.f32.mrb[0].mxu0
        %v4095 = vadd.f32 0.0, %v4094
        %v4096 = vpop.f32.mrb[0].mxu0
        %v4097 = vadd.f32 0.0, %v4096
        %v4098 = vpop.f32.mrb[0].mxu0
        %v4099 = vadd.f32 0.0, %v4098
        %4100 = vdwg.mxu0
        %4101 = vmatprep.subr.bf16.mxu0 %v1097
        %4102 = vmatpush1.bf16.msra.mxu0 %v1096
        %4103 = vmatprep.subr.bf16.mxu0 %v1099
        %4104 = vmatpush1.bf16.msra.mxu0 %v1098
        %4105 = vmatprep.subr.bf16.mxu0 %v1101
        %4106 = vmatpush1.bf16.msra.mxu0 %v1100
        %4107 = vmatprep.subr.bf16.mxu0 %v1103
        %4108 = vmatpush1.bf16.msra.mxu0 %v1102
        %4109 = vmatprep.subr.bf16.mxu0 %v1105
        %4110 = vmatpush1.bf16.msra.mxu0 %v1104
        %4111 = vmatprep.subr.bf16.mxu0 %v1107
        %4112 = vmatpush1.bf16.msra.mxu0 %v1106
        %4113 = vmatprep.subr.bf16.mxu0 %v1109
        %4114 = vmatpush1.bf16.msra.mxu0 %v1108
        %4115 = vmatprep.subr.bf16.mxu0 %v1111
        %4116 = vmatpush1.bf16.msra.mxu0 %v1110
        %4117 = vmatprep.subr.bf16.mxu0 %v1113
        %4118 = vmatpush1.bf16.msra.mxu0 %v1112
        %4119 = vmatprep.subr.bf16.mxu0 %v1115
        %4120 = vmatpush1.bf16.msra.mxu0 %v1114
        %4121 = vmatprep.subr.bf16.mxu0 %v1179
        %4122 = vmatpush1.bf16.msra.mxu0 %v1176
        %4123 = vmatprep.subr.bf16.mxu0 0
        %4124 = vmatpush1.bf16.msra.mxu0 0
        %4125 = vmatprep.subr.bf16.mxu0 0
        %4126 = vmatpush1.bf16.msra.mxu0 0
        %4127 = vmatprep.subr.bf16.mxu0 0
        %4128 = vmatpush1.bf16.msra.mxu0 0
        %4129 = vmatprep.subr.bf16.mxu0 0
        %4130 = vmatpush1.bf16.msra.mxu0 0
        %4131 = vmatprep.subr.bf16.mxu0 0
        %4132 = vmatpush1.bf16.msra.mxu0 0
        %4133 = vmatprep.mubr.bf16.mxu0 %v4056
        %4134 = vmatmul.mubr.bf16.gmra.mrb[0].mxu0 %v4053
        %v4135 = vpop.f32.mrb[0].mxu0
        %v4136 = vadd.f32 %v4093, %v4135
        %v4137 = vpop.f32.mrb[0].mxu0
        %v4138 = vadd.f32 %v4095, %v4137
        %v4139 = vpop.f32.mrb[0].mxu0
        %v4140 = vadd.f32 %v4097, %v4139
        %v4141 = vpop.f32.mrb[0].mxu0
        %v4142 = vadd.f32 %v4099, %v4141
        %4143 = vdwg.mxu0
        %v4144 = vmax.f32 %v4136, %v4138
        %v4145 = vmax.f32 %v4140, %v4142
        %v4148 = vrot.slane %v4144, 1
        %v4149 = vrot.slane %v4145, 1
        %v4150 = vsel %vm507, %v4148, %v4149
        %v4153 = vmax.f32 %v4144, %v4150
        %v4154 = vmax.f32 %v4145, %v4149
        %v4155 = vadd.f32 %v4153, %v494
        %v4156 = vmax.f32 %v4155, 0.0
        %v4157 = vadd.f32 %v4153, %v1284
        %v4158 = vmax.f32 %v4157, 0.0
        %v4159 = vadd.f32 %v4154, %v494
        %v4160 = vmax.f32 %v4159, 0.0
        %v4162 = vrot.slane %v4158, 2
        %4163 = vrot.lane.b32.xlu0 %v4162, 80
        %v4164 = vpop.permute.xlu0 %4163
        %v4166 = vrot.slane %v4158, 4
        %4167 = vrot.lane.b32.xlu0 %v4166, 32
        %v4168 = vpop.permute.xlu0 %4167
        %v4170 = vrot.slane %v4158, 6
        %4171 = vrot.lane.b32.xlu0 %v4170, 112
        %v4172 = vpop.permute.xlu0 %4171
        %4175 = vrot.lane.b32.xlu0 %v4160, 64
        %v4176 = vpop.permute.xlu0 %4175
        %v4178 = vsel %vm898, %v4156, %v4164
        %v4179 = vsel %vm579, %v4164, %v4168
        %v4180 = vsel %vm1309, %v4179, %v4172
        %v4181 = vsel %vm584, %v4172, %v4176
        %v4185 = vrot.slane %v1718, 7
        %v4186 = vrot.slane %v1720, 7
        %v4187 = vrot.slane %v1721, 7
        %v4188 = vrot.slane %v1716, 7
        %v4196 = vrot.slane %v2128, 6
        %v4197 = vrot.slane %v2130, 6
        %v4198 = vrot.slane %v2131, 6
        %v4199 = vrot.slane %v2126, 6
        %v4207 = vrot.slane %v2538, 5
        %v4208 = vrot.slane %v2540, 5
        %v4209 = vrot.slane %v2541, 5
        %v4210 = vrot.slane %v2536, 5
        %v4218 = vrot.slane %v2948, 4
        %v4219 = vrot.slane %v2950, 4
        %v4220 = vrot.slane %v2951, 4
        %v4221 = vrot.slane %v2946, 4
        %v4229 = vrot.slane %v3358, 3
        %v4230 = vrot.slane %v3360, 3
        %v4231 = vrot.slane %v3361, 3
        %v4232 = vrot.slane %v3356, 3
        %v4240 = vrot.slane %v3768, 2
        %v4241 = vrot.slane %v3770, 2
        %v4242 = vrot.slane %v3771, 2
        %v4243 = vrot.slane %v3766, 2
        %v4251 = vrot.slane %v4178, 1
        %v4252 = vrot.slane %v4180, 1
        %v4253 = vrot.slane %v4181, 1
        %v4254 = vrot.slane %v4176, 1
        %vm4259 = vcmask 1040384
        %v4260 = vsel %vm4259, %v1307, %v4185
        %v4261 = vsel %vm4259, %v1310, %v4186
        %v4262 = vsel %vm4259, %v1311, %v4187
        %v4263 = vsel %vm4259, %v1305, %v4188
        %v4264 = vsel %vm1174, %v4260, %v4196
        %v4265 = vsel %vm1174, %v4261, %v4197
        %v4266 = vsel %vm1174, %v4262, %v4198
        %v4267 = vsel %vm1174, %v4263, %v4199
        %vm4268 = vcmask 1042432
        %v4269 = vsel %vm4268, %v4264, %v4207
        %v4270 = vsel %vm4268, %v4265, %v4208
        %v4271 = vsel %vm4268, %v4266, %v4209
        %v4272 = vsel %vm4268, %v4267, %v4210
        %v4273 = vsel %vm567, %v4269, %v4218
        %v4274 = vsel %vm567, %v4270, %v4219
        %v4275 = vsel %vm567, %v4271, %v4220
        %v4276 = vsel %vm567, %v4272, %v4221
        %v4277 = vsel %vm547, %v4273, %v4229
        %v4278 = vsel %vm547, %v4274, %v4230
        %v4279 = vsel %vm547, %v4275, %v4231
        %v4280 = vsel %vm547, %v4276, %v4232
        %v4281 = vsel %vm527, %v4277, %v4240
        %v4282 = vsel %vm527, %v4278, %v4241
        %v4283 = vsel %vm527, %v4279, %v4242
        %v4284 = vsel %vm527, %v4280, %v4243
        %v4285 = vsel %vm507, %v4281, %v4251
        %v4286 = vsel %vm507, %v4282, %v4252
        %v4287 = vsel %vm507, %v4283, %v4253
        %v4288 = vsel %vm507, %v4284, %v4254
        %v4289 = vpack.c.bf16 %v4285, %v4285
        %v4290 = vpack.c.bf16 %v4286, %v4286
        %v4291 = vpack.c.bf16 %v4287, %v4287
        %v4292 = vpack.c.bf16 %v4288, %v4288
        %v4293 = vld [vmem:[%s6] sm:$0xf]
        %v4294 = vld [vmem:[%s6 + $0x4] sm:$0xf]
        %v4295 = vld [vmem:[%s6 + $0x8] sm:$0xf]
        %v4296 = vld [vmem:[%s6 + $0xc] sm:$0xf]
        %v4297 = vld [vmem:[%s6 + $0x10] sm:$0xf]
        %v4298 = vld [vmem:[%s6 + $0x14] sm:$0xf]
        %v4299 = vld [vmem:[%s6 + $0x18] sm:$0xf]
        %v4300 = vld [vmem:[%s6 + $0x1c] sm:$0xf]
        %v4301 = vld [vmem:[%s6 + $0x20] sm:$0xf]
        %v4302 = vld [vmem:[%s6 + $0x24] sm:$0xf]
        %v4303 = vld [vmem:[%s6 + $0x28] sm:$0xf]
        %v4304 = vld [vmem:[%s6 + $0x2c] sm:$0xf]
        %v4305 = vld [vmem:[%s6 + $0x30] sm:$0xf]
        %v4306 = vld [vmem:[%s6 + $0x34] sm:$0xf]
        %v4307 = vld [vmem:[%s6 + $0x38] sm:$0xf]
        %v4308 = vld [vmem:[%s6 + $0x3c] sm:$0xf]
        %v4309 = vld [vmem:[%s6 + $0x40] sm:$0xf]
        %v4310 = vld [vmem:[%s6 + $0x44] sm:$0xf]
        %v4311 = vld [vmem:[%s6 + $0x48] sm:$0xf]
        %v4312 = vld [vmem:[%s6 + $0x4c] sm:$0xf]
        %v4313 = vld [vmem:[%s6 + $0x50] sm:$0xf]
        %v4314 = vld [vmem:[%s6 + $0x54] sm:$0xf]
        %v4315 = vld [vmem:[%s6 + $0x58] sm:$0xf]
        %v4316 = vld [vmem:[%s6 + $0x5c] sm:$0xf]
        %v4317 = vld [vmem:[%s6 + $0x60] sm:$0xf]
        %v4318 = vld [vmem:[%s6 + $0x64] sm:$0xf]
        %v4319 = vld [vmem:[%s6 + $0x68] sm:$0xf]
        %v4320 = vld [vmem:[%s6 + $0x6c] sm:$0xf]
        %v4321 = vld [vmem:[%s6 + $0x70] sm:$0xf]
        %v4322 = vld [vmem:[%s6 + $0x74] sm:$0xf]
        %v4323 = vld [vmem:[%s6 + $0x78] sm:$0xf]
        %v4324 = vld [vmem:[%s6 + $0x7c] sm:$0xf]
        %v4325 = vld [vmem:[%s6 + $0x80] sm:$0xf]
        %v4326 = vld [vmem:[%s6 + $0x84] sm:$0xf]
        %v4327 = vld [vmem:[%s6 + $0x88] sm:$0xf]
        %v4328 = vld [vmem:[%s6 + $0x8c] sm:$0xf]
        %v4329 = vld [vmem:[%s6 + $0x90] sm:$0xf]
        %v4330 = vld [vmem:[%s6 + $0x94] sm:$0xf]
        %v4331 = vld [vmem:[%s6 + $0x98] sm:$0xf]
        %v4332 = vld [vmem:[%s6 + $0x9c] sm:$0xf]
        %v4333 = vld [vmem:[%s6 + $0xa0] sm:$0xf]
        %v4334 = vld [vmem:[%s6 + $0xa4] sm:$0xf]
        %v4335 = vld [vmem:[%s6 + $0xa8] sm:$0xf]
        %v4336 = vld [vmem:[%s6 + $0xac] sm:$0xf]
        %v4337 = vld [vmem:[%s6 + $0xb0] sm:$0xf]
        %v4338 = vld [vmem:[%s6 + $0xb4] sm:$0xf]
        %v4339 = vld [vmem:[%s6 + $0xb8] sm:$0xf]
        %v4340 = vld [vmem:[%s6 + $0xbc] sm:$0xf]
        %v4341 = vld [vmem:[%s6 + $0xc0] sm:$0xf]
        %v4342 = vld [vmem:[%s6 + $0xc4] sm:$0xf]
        %v4343 = vld [vmem:[%s7] sm:$0x1]
        %v4345 = vlaneseq
        %v4346 = vshrl.u32 %v4345, 7
        %v4347 = vsub.s32 0, %v4346
        %v4348 = vrot.slane %v4343, %v4347
        %v4400 = vunpack.c.l.b16 %v4293
        %v4401 = vunpack.c.l.b16 %v4294
        %v4402 = vunpack.c.l.b16 %v4295
        %v4403 = vunpack.c.l.b16 %v4296
        %v4404 = vunpack.c.l.b16 %v4297
        %v4405 = vunpack.c.l.b16 %v4298
        %v4406 = vunpack.c.l.b16 %v4299
        %v4407 = vunpack.c.l.b16 %v4300
        %v4408 = vunpack.c.l.b16 %v4301
        %v4409 = vunpack.c.l.b16 %v4302
        %v4410 = vunpack.c.l.b16 %v4303
        %v4411 = vunpack.c.l.b16 %v4304
        %v4412 = vunpack.c.l.b16 %v4305
        %v4413 = vunpack.c.l.b16 %v4306
        %v4414 = vunpack.c.l.b16 %v4307
        %v4415 = vunpack.c.l.b16 %v4308
        %v4416 = vunpack.c.l.b16 %v4309
        %v4417 = vunpack.c.l.b16 %v4310
        %v4418 = vunpack.c.l.b16 %v4311
        %v4419 = vunpack.c.l.b16 %v4312
        %v4420 = vunpack.c.l.b16 %v4313
        %v4421 = vunpack.c.l.b16 %v4314
        %v4422 = vunpack.c.l.b16 %v4315
        %v4423 = vunpack.c.l.b16 %v4316
        %v4424 = vunpack.c.l.b16 %v4317
        %v4425 = vunpack.c.l.b16 %v4318
        %v4426 = vunpack.c.l.b16 %v4319
        %v4427 = vunpack.c.l.b16 %v4320
        %v4428 = vunpack.c.l.b16 %v4321
        %v4429 = vunpack.c.l.b16 %v4322
        %v4430 = vunpack.c.l.b16 %v4323
        %v4431 = vunpack.c.l.b16 %v4324
        %v4432 = vunpack.c.l.b16 %v4325
        %v4433 = vunpack.c.l.b16 %v4326
        %v4434 = vunpack.c.l.b16 %v4327
        %v4435 = vunpack.c.l.b16 %v4328
        %v4436 = vunpack.c.l.b16 %v4329
        %v4437 = vunpack.c.l.b16 %v4330
        %v4438 = vunpack.c.l.b16 %v4331
        %v4439 = vunpack.c.l.b16 %v4332
        %v4440 = vunpack.c.l.b16 %v4333
        %v4441 = vunpack.c.l.b16 %v4334
        %v4442 = vunpack.c.l.b16 %v4335
        %v4443 = vunpack.c.l.b16 %v4336
        %v4444 = vunpack.c.l.b16 %v4337
        %v4445 = vunpack.c.l.b16 %v4338
        %v4446 = vunpack.c.l.b16 %v4339
        %v4447 = vunpack.c.l.b16 %v4340
        %v4448 = vunpack.c.l.b16 %v4341
        %v4449 = vunpack.c.l.b16 %v4342
        %v4450 = vpack.c.b16 %v4401, %v4400
        %v4451 = vpack.c.b16 %v4403, %v4402
        %v4452 = vpack.c.b16 %v4405, %v4404
        %v4453 = vpack.c.b16 %v4407, %v4406
        %v4454 = vpack.c.b16 %v4409, %v4408
        %v4455 = vpack.c.b16 %v4411, %v4410
        %v4456 = vpack.c.b16 %v4413, %v4412
        %v4457 = vpack.c.b16 %v4415, %v4414
        %v4458 = vpack.c.b16 %v4417, %v4416
        %v4459 = vpack.c.b16 %v4419, %v4418
        %v4460 = vpack.c.b16 %v4421, %v4420
        %v4461 = vpack.c.b16 %v4423, %v4422
        %v4462 = vpack.c.b16 %v4425, %v4424
        %v4463 = vpack.c.b16 %v4427, %v4426
        %v4464 = vpack.c.b16 %v4429, %v4428
        %v4465 = vpack.c.b16 %v4431, %v4430
        %v4466 = vpack.c.b16 %v4433, %v4432
        %v4467 = vpack.c.b16 %v4435, %v4434
        %v4468 = vpack.c.b16 %v4437, %v4436
        %v4469 = vpack.c.b16 %v4439, %v4438
        %v4470 = vpack.c.b16 %v4441, %v4440
        %v4471 = vpack.c.b16 %v4443, %v4442
        %v4472 = vpack.c.b16 %v4445, %v4444
        %v4473 = vpack.c.b16 %v4447, %v4446
        %v4474 = vpack.c.b16 %v4449, %v4448
        %vm4500 = vcmask 130048
        %v4502 = vsel %vm4500, %v4292, 0
        %4504 = vmatprep.subr.bf16.mxu0 0
        %4505 = vmatpush1.bf16.msra.mxu0 %v4450
        %4506 = vmatprep.subr.bf16.mxu0 0
        %4507 = vmatpush1.bf16.msra.mxu0 %v4451
        %4508 = vmatprep.subr.bf16.mxu0 0
        %4509 = vmatpush1.bf16.msra.mxu0 %v4452
        %4510 = vmatprep.subr.bf16.mxu0 0
        %4511 = vmatpush1.bf16.msra.mxu0 %v4453
        %4512 = vmatprep.subr.bf16.mxu0 0
        %4513 = vmatpush1.bf16.msra.mxu0 %v4454
        %4514 = vmatprep.subr.bf16.mxu0 0
        %4515 = vmatpush1.bf16.msra.mxu0 %v4455
        %4516 = vmatprep.subr.bf16.mxu0 0
        %4517 = vmatpush1.bf16.msra.mxu0 %v4456
        %4518 = vmatprep.subr.bf16.mxu0 0
        %4519 = vmatpush1.bf16.msra.mxu0 %v4457
        %4520 = vmatprep.subr.bf16.mxu0 0
        %4521 = vmatpush1.bf16.msra.mxu0 %v4458
        %4522 = vmatprep.subr.bf16.mxu0 0
        %4523 = vmatpush1.bf16.msra.mxu0 %v4459
        %4524 = vmatprep.subr.bf16.mxu0 0
        %4525 = vmatpush1.bf16.msra.mxu0 %v4460
        %4526 = vmatprep.subr.bf16.mxu0 0
        %4527 = vmatpush1.bf16.msra.mxu0 %v4461
        %4528 = vmatprep.subr.bf16.mxu0 0
        %4529 = vmatpush1.bf16.msra.mxu0 %v4462
        %4530 = vmatprep.subr.bf16.mxu0 0
        %4531 = vmatpush1.bf16.msra.mxu0 %v4463
        %4532 = vmatprep.subr.bf16.mxu0 0
        %4533 = vmatpush1.bf16.msra.mxu0 %v4464
        %4534 = vmatprep.subr.bf16.mxu0 0
        %4535 = vmatpush1.bf16.msra.mxu0 %v4465
        %4536 = vmatprep.mubr.bf16.mxu0 %v4290
        %4537 = vmatmul.mubr.bf16.gmra.mrb[0].mxu0 %v4289
        %v4538 = vpop.f32.mrb[0].mxu0
        %v4539 = vadd.f32 %v4348, %v4538
        %v4540 = vpop.f32.mrb[0].mxu0
        %v4541 = vpop.f32.mrb[0].mxu0
        %v4542 = vpop.f32.mrb[0].mxu0
        %4543 = vdwg.mxu0
        %4544 = vmatprep.subr.bf16.mxu0 0
        %4545 = vmatpush1.bf16.msra.mxu0 %v4466
        %4546 = vmatprep.subr.bf16.mxu0 0
        %4547 = vmatpush1.bf16.msra.mxu0 %v4467
        %4548 = vmatprep.subr.bf16.mxu0 0
        %4549 = vmatpush1.bf16.msra.mxu0 %v4468
        %4550 = vmatprep.subr.bf16.mxu0 0
        %4551 = vmatpush1.bf16.msra.mxu0 %v4469
        %4552 = vmatprep.subr.bf16.mxu0 0
        %4553 = vmatpush1.bf16.msra.mxu0 %v4470
        %4554 = vmatprep.subr.bf16.mxu0 0
        %4555 = vmatpush1.bf16.msra.mxu0 %v4471
        %4556 = vmatprep.subr.bf16.mxu0 0
        %4557 = vmatpush1.bf16.msra.mxu0 %v4472
        %4558 = vmatprep.subr.bf16.mxu0 0
        %4559 = vmatpush1.bf16.msra.mxu0 %v4473
        %4560 = vmatprep.subr.bf16.mxu0 0
        %4561 = vmatpush1.bf16.msra.mxu0 %v4474
        %4562 = vmatprep.subr.bf16.mxu0 0
        %4563 = vmatpush1.bf16.msra.mxu0 0
        %4564 = vmatprep.subr.bf16.mxu0 0
        %4565 = vmatpush1.bf16.msra.mxu0 0
        %4566 = vmatprep.subr.bf16.mxu0 0
        %4567 = vmatpush1.bf16.msra.mxu0 0
        %4568 = vmatprep.subr.bf16.mxu0 0
        %4569 = vmatpush1.bf16.msra.mxu0 0
        %4570 = vmatprep.subr.bf16.mxu0 0
        %4571 = vmatpush1.bf16.msra.mxu0 0
        %4572 = vmatprep.subr.bf16.mxu0 0
        %4573 = vmatpush1.bf16.msra.mxu0 0
        %4574 = vmatprep.subr.bf16.mxu0 0
        %4575 = vmatpush1.bf16.msra.mxu0 0
        %4576 = vmatprep.mubr.bf16.mxu0 %v4502
        %4577 = vmatmul.mubr.bf16.gmra.mrb[0].mxu0 %v4291
        %v4578 = vpop.f32.mrb[0].mxu0
        %v4579 = vadd.f32 %v4539, %v4578
        %v4580 = vpop.f32.mrb[0].mxu0
        %v4581 = vpop.f32.mrb[0].mxu0
        %v4582 = vpop.f32.mrb[0].mxu0
        %4583 = vdwg.mxu0
        %v4584 = vmax.f32 %v4579, 0.0
        %v4585 = vpack.c.bf16 %v4584, %v4584
        %v4586 = vld [vmem:[%s8] sm:$0xf]
        %v4587 = vld [vmem:[%s8 + $0x4] sm:$0xf]
        %v4588 = vld [vmem:[%s8 + $0x8] sm:$0xf]
        %v4589 = vld [vmem:[%s8 + $0xc] sm:$0xf]
        %v4590 = vld [vmem:[%s8 + $0x10] sm:$0xf]
        %v4591 = vld [vmem:[%s8 + $0x14] sm:$0xf]
        %v4592 = vld [vmem:[%s8 + $0x18] sm:$0xf]
        %v4593 = vld [vmem:[%s8 + $0x1c] sm:$0xf]
        %v4594 = vld [vmem:[%s8 + $0x20] sm:$0xf]
        %v4595 = vld [vmem:[%s8 + $0x24] sm:$0xf]
        %v4596 = vld [vmem:[%s8 + $0x28] sm:$0xf]
        %v4597 = vld [vmem:[%s8 + $0x2c] sm:$0xf]
        %v4598 = vld [vmem:[%s8 + $0x30] sm:$0xf]
        %v4599 = vld [vmem:[%s8 + $0x34] sm:$0xf]
        %v4600 = vld [vmem:[%s8 + $0x38] sm:$0xf]
        %v4601 = vld [vmem:[%s9] sm:$0x1]
        %v4603 = vlaneseq
        %v4604 = vshrl.u32 %v4603, 7
        %v4605 = vsub.s32 0, %v4604
        %v4606 = vrot.slane %v4601, %v4605
        %v4623 = vunpack.c.l.b16 %v4586
        %v4624 = vunpack.c.l.b16 %v4587
        %v4625 = vunpack.c.l.b16 %v4588
        %v4626 = vunpack.c.l.b16 %v4589
        %v4627 = vunpack.c.l.b16 %v4590
        %v4628 = vunpack.c.l.b16 %v4591
        %v4629 = vunpack.c.l.b16 %v4592
        %v4630 = vunpack.c.l.b16 %v4593
        %v4631 = vunpack.c.l.b16 %v4594
        %v4632 = vunpack.c.l.b16 %v4595
        %v4633 = vunpack.c.l.b16 %v4596
        %v4634 = vunpack.c.l.b16 %v4597
        %v4635 = vunpack.c.l.b16 %v4598
        %v4636 = vunpack.c.l.b16 %v4599
        %v4637 = vunpack.c.l.b16 %v4600
        %v4638 = vpack.c.b16 %v4624, %v4623
        %v4639 = vpack.c.b16 %v4626, %v4625
        %v4640 = vpack.c.b16 %v4628, %v4627
        %v4641 = vpack.c.b16 %v4630, %v4629
        %v4642 = vpack.c.b16 %v4632, %v4631
        %v4643 = vpack.c.b16 %v4634, %v4633
        %v4644 = vpack.c.b16 %v4636, %v4635
        %v4645 = vpack.c.b16 %v4637, %v4637
        %vm4653 = vcmask 982016
        %v4655 = vsel %vm4653, %v4585, 0
        %v4658 = vsel %vm567, %v4645, 0
        %4660 = vmatprep.subr.bf16.mxu0 0
        %4661 = vmatpush1.bf16.msra.mxu0 %v4638
        %4662 = vmatprep.subr.bf16.mxu0 0
        %4663 = vmatpush1.bf16.msra.mxu0 %v4639
        %4664 = vmatprep.subr.bf16.mxu0 0
        %4665 = vmatpush1.bf16.msra.mxu0 %v4640
        %4666 = vmatprep.subr.bf16.mxu0 0
        %4667 = vmatpush1.bf16.msra.mxu0 %v4641
        %4668 = vmatprep.subr.bf16.mxu0 0
        %4669 = vmatpush1.bf16.msra.mxu0 %v4642
        %4670 = vmatprep.subr.bf16.mxu0 0
        %4671 = vmatpush1.bf16.msra.mxu0 %v4643
        %4672 = vmatprep.subr.bf16.mxu0 0
        %4673 = vmatpush1.bf16.msra.mxu0 %v4644
        %4674 = vmatprep.subr.bf16.mxu0 0
        %4675 = vmatpush1.bf16.msra.mxu0 %v4658
        %4676 = vmatprep.subr.bf16.mxu0 0
        %4677 = vmatpush1.bf16.msra.mxu0 0
        %4678 = vmatprep.subr.bf16.mxu0 0
        %4679 = vmatpush1.bf16.msra.mxu0 0
        %4680 = vmatprep.subr.bf16.mxu0 0
        %4681 = vmatpush1.bf16.msra.mxu0 0
        %4682 = vmatprep.subr.bf16.mxu0 0
        %4683 = vmatpush1.bf16.msra.mxu0 0
        %4684 = vmatprep.subr.bf16.mxu0 0
        %4685 = vmatpush1.bf16.msra.mxu0 0
        %4686 = vmatprep.subr.bf16.mxu0 0
        %4687 = vmatpush1.bf16.msra.mxu0 0
        %4688 = vmatprep.subr.bf16.mxu0 0
        %4689 = vmatpush1.bf16.msra.mxu0 0
        %4690 = vmatprep.subr.bf16.mxu0 0
        %4691 = vmatpush1.bf16.msra.mxu0 0
        %4692 = vmatprep.mubr.bf16.mxu0 0
        %4693 = vmatmul.mubr.bf16.gmra.mrb[0].mxu0 %v4655
        %v4694 = vpop.f32.mrb[0].mxu0
        %v4695 = vadd.f32 %v4606, %v4694
        %v4696 = vpop.f32.mrb[0].mxu0
        %v4697 = vpop.f32.mrb[0].mxu0
        %v4698 = vpop.f32.mrb[0].mxu0
        %4699 = vdwg.mxu0
        %v4700 = vmax.f32 %v4695, 0.0
        %v4701 = vpack.c.bf16 %v4700, %v4700
        %v4702 = vld [vmem:[%s10] sm:$0xf]
        %v4703 = vld [vmem:[%s10 + $0x4] sm:$0xf]
        %v4704 = vld [vmem:[%s10 + $0x8] sm:$0xf]
        %v4705 = vld [vmem:[%s10 + $0xc] sm:$0xf]
        %v4706 = vld [vmem:[%s10 + $0x10] sm:$0xf]
        %v4707 = vld [vmem:[%s10 + $0x14] sm:$0xf]
        %v4708 = vld [vmem:[%s10 + $0x18] sm:$0xf]
        %v4709 = vld [vmem:[%s10 + $0x1c] sm:$0xf]
        %v4710 = vld [vmem:[%s10 + $0x20] sm:$0xf]
        %v4711 = vld [vmem:[%s10 + $0x24] sm:$0xf]
        %v4712 = vld [vmem:[%s10 + $0x28] sm:$0x3]
        %v4713 = vld [vmem:[%s11] sm:$0x1]
        %v4715 = vlaneseq
        %v4716 = vshrl.u32 %v4715, 7
        %v4717 = vsub.s32 0, %v4716
        %v4718 = vrot.slane %v4713, %v4717
        %v4731 = vunpack.c.l.b16 %v4702
        %v4732 = vunpack.c.l.b16 %v4703
        %v4733 = vunpack.c.l.b16 %v4704
        %v4734 = vunpack.c.l.b16 %v4705
        %v4735 = vunpack.c.l.b16 %v4706
        %v4736 = vunpack.c.l.b16 %v4707
        %v4737 = vunpack.c.l.b16 %v4708
        %v4738 = vunpack.c.l.b16 %v4709
        %v4739 = vunpack.c.l.b16 %v4710
        %v4740 = vunpack.c.l.b16 %v4711
        %v4741 = vunpack.c.l.b16 %v4712
        %v4742 = vpack.c.b16 %v4732, %v4731
        %v4743 = vpack.c.b16 %v4734, %v4733
        %v4744 = vpack.c.b16 %v4736, %v4735
        %v4745 = vpack.c.b16 %v4738, %v4737
        %v4746 = vpack.c.b16 %v4740, %v4739
        %v4747 = vpack.c.b16 %v4741, %v4741
        %v4754 = vsel %vm889, %v4701, 0
        %v4757 = vsel %vm1174, %v4747, 0
        %4759 = vmatprep.subr.bf16.mxu0 0
        %4760 = vmatpush1.bf16.msra.mxu0 %v4742
        %4761 = vmatprep.subr.bf16.mxu0 0
        %4762 = vmatpush1.bf16.msra.mxu0 %v4743
        %4763 = vmatprep.subr.bf16.mxu0 0
        %4764 = vmatpush1.bf16.msra.mxu0 %v4744
        %4765 = vmatprep.subr.bf16.mxu0 0
        %4766 = vmatpush1.bf16.msra.mxu0 %v4745
        %4767 = vmatprep.subr.bf16.mxu0 0
        %4768 = vmatpush1.bf16.msra.mxu0 %v4746
        %4769 = vmatprep.subr.bf16.mxu0 0
        %4770 = vmatpush1.bf16.msra.mxu0 %v4757
        %4771 = vmatprep.subr.bf16.mxu0 0
        %4772 = vmatpush1.bf16.msra.mxu0 0
        %4773 = vmatprep.subr.bf16.mxu0 0
        %4774 = vmatpush1.bf16.msra.mxu0 0
        %4775 = vmatprep.subr.bf16.mxu0 0
        %4776 = vmatpush1.bf16.msra.mxu0 0
        %4777 = vmatprep.subr.bf16.mxu0 0
        %4778 = vmatpush1.bf16.msra.mxu0 0
        %4779 = vmatprep.subr.bf16.mxu0 0
        %4780 = vmatpush1.bf16.msra.mxu0 0
        %4781 = vmatprep.subr.bf16.mxu0 0
        %4782 = vmatpush1.bf16.msra.mxu0 0
        %4783 = vmatprep.subr.bf16.mxu0 0
        %4784 = vmatpush1.bf16.msra.mxu0 0
        %4785 = vmatprep.subr.bf16.mxu0 0
        %4786 = vmatpush1.bf16.msra.mxu0 0
        %4787 = vmatprep.subr.bf16.mxu0 0
        %4788 = vmatpush1.bf16.msra.mxu0 0
        %4789 = vmatprep.subr.bf16.mxu0 0
        %4790 = vmatpush1.bf16.msra.mxu0 0
        %4791 = vmatprep.mubr.bf16.mxu0 0
        %4792 = vmatmul.mubr.bf16.gmra.mrb[0].mxu0 %v4754
        %v4793 = vpop.f32.mrb[0].mxu0
        %v4794 = vadd.f32 %v4718, %v4793
        %v4795 = vpop.f32.mrb[0].mxu0
        %v4796 = vpop.f32.mrb[0].mxu0
        %v4797 = vpop.f32.mrb[0].mxu0
        %4798 = vdwg.mxu0
        %4799 = vst [vmem:[%s409] sm:$0xff] %v4794
        %s4800 = sand.u32 %s291, 1
        %s4801 = scalar_lea.sflag [#allocation3], %s4800
        %s4802 = sand.u32 %s291, 1
        %s4803 = smul.addr %s4802, 8
        %s4804 = scalar_lea.vmem [#allocation2], %s4803
        // Predicated region
        $region69: #{simple_conv_forward.1} parent=67 // pred_check
          %p4805 = pneg %p301
        $region70: #{simple_conv_forward.1} parent=67 // pred_check_branch
          %4807 = sbr.rel (%p4805) target = $region72
        $region71: #{simple_conv_forward.1} parent=67 // pred_region
          %s4809 = ssub.s32 128, 128
          %4810 = vsyncadd %s4801, %s4809
          %s4811 = smul.addr %s26, 128
          %s4812 = scalar_lea.hbm %s12, %s4811
          %s4814 = sshll.u32 %s4804, 4
          %s4815 = int_to_ptr.vmem [resolvable:$true] %s4814
          %4817 = dma.vmem_to_hbm [thread:$0]  %s4815, 128, %s4812, %s4801
        $region72: #{simple_conv_forward.1} parent=67 // pred_fallthru
          _
      $region68: #{simple_conv_forward.1} parent=5 // pred_fallthru
        _
      %p4818 = scmp.le.s32.totalorder 2, %s21
      // Predicated region
      $region73: #{simple_conv_forward.1} parent=5 // pred_check
        %p4819 = pneg %p4818
      $region74: #{simple_conv_forward.1} parent=5 // pred_check_branch
        %4821 = sbr.rel (%p4819) target = $region76
      $region75: #{simple_conv_forward.1} parent=5 // pred_region
        %s4822 = ssub.s32 %s21, 2
        // Predicated region
        $region77: #{simple_conv_forward.1} parent=75 // pred_check
          %p4823 = pneg %p307
        $region78: #{simple_conv_forward.1} parent=75 // pred_check_branch
          %4825 = sbr.rel (%p4823) target = $region80
        $region79: #{simple_conv_forward.1} parent=75 // pred_region
          %s4826 = sand.u32 %s292, 1
          %s4827 = scalar_lea.sflag [#allocation3], %s4826
          %s4828 = sand.u32 %s292, 1
          %s4829 = smul.addr %s4828, 8
          %s4830 = scalar_lea.vmem [#allocation2], %s4829
          %4831 = dma.done %s4827, 128
        $region80: #{simple_conv_forward.1} parent=75 // pred_fallthru
          _
      $region76: #{simple_conv_forward.1} parent=5 // pred_fallthru
        _
    $region6: #{simple_conv_forward.1} parent=1 // loop_footer
      %s25 = sadd.s32 1, %s21
    $region7: #{simple_conv_forward.1} parent=1 // loop_footer_branch
      %20 = sbr.rel target = $region3
    $region8: #{simple_conv_forward.1} parent=1 // loop_exit
      _
    %4832 = vsyncpa [#allocation3], 1
    %s4833 = scalar_lea.sflag [#allocation3], 1
    %4834 = vsyncpa %s4833, 1

</llo_original>
